<compile_context>
chip_gen: v5e
topology: v5e:2x2
jax: 0.10.0
libtpu: 0.0.40
codegen_flags: <defaults>
</compile_context>

<pallas_src>
import jax
import jax.numpy as jnp
from jax.experimental import pallas as pl
from jax.experimental.pallas import tpu as pltpu

_EPS = 1e-5


def _fold_bn(p):
    """Fold Conv bias + BatchNorm (inference) into (scaled weight, shift).

    Weight is returned as (K*C_in, C_out), laid out k-slow / c_in-fast so it
    matches the in-kernel patch construction (no activation-side transpose);
    the BN scale is folded into its columns so the kernel epilogue is add+ReLU.
    """
    c_out, c_in, k = p["w"].shape
    scale = p["gamma"] / jnp.sqrt(p["var"] + _EPS)                    # (C_out,)
    shift = scale * p["b"] + p["beta"] - scale * p["mean"]            # (C_out,)
    w = jnp.transpose(p["w"], (2, 1, 0)).reshape(k * c_in, c_out)     # (K*C_in, C_out)
    return (w * scale[None, :]).astype(jnp.float32), shift.reshape(1, c_out).astype(jnp.float32)


def cnn_1d_forward(x_ncl, params, n_outputs=3, samples_per_block=1):
    """Forward pass of cnn_1d with one fused Pallas kernel over the whole net."""
    # TODO(synk): BatchNorm / Dropout implemented in inference mode (running
    # stats, dropout = identity); training-mode batch statistics not reproduced.
    n, c_in, length = x_ncl.shape
    assert c_in == 1, "cnn_1d expects a single input channel"

    # ---- static layer geometry (Conv1d / MaxPool1d arithmetic) -------------
    k1, s1 = 50, 5
    k2, s2 = 45, 5
    k3 = k4 = 3
    l1 = (length - k1) // s1 + 1          # conv1 output length (220 for L=1145)
    p1 = l1 // 2                          # after MaxPool1d(2)          (110)
    l2 = (p1 - k2) // s2 + 1              # conv2 output length          (14)
    p2 = l2 // 2                          # after MaxPool1d(2)            (7)
    l3 = p2 - k3 + 1                      # conv3 output length           (5)
    l4 = l3 - k4 + 1                      # conv4 output length           (3)
    c1, c2, c3, c4 = 16, 64, 128, 256

    nb = samples_per_block                # samples folded into matmul M per grid step
    assert n % nb == 0
    if nb > 1:
        # per-sample row segments must stay even-aligned under the fused pools
        assert l1 % 2 == 0 and l2 % 2 == 0

    # ---- cheap host-side prep ----------------------------------------------
    # conv1 has C_in=1: view the used prefix of x as (N, l1+9, 5) so im2col
    # patches are built in-kernel from unit-stride row slices (no gathers).
    rows1 = l1 + (k1 // s1) - 1
    x_r = x_ncl[:, 0, : rows1 * s1].reshape(n, rows1, s1)

    w1, b1 = _fold_bn(params["conv1"])    # (50, 16),   (1, 16)
    w2, b2 = _fold_bn(params["conv2"])    # (720, 64),  (1, 64)
    w3, b3 = _fold_bn(params["conv3"])    # (192, 128), (1, 128)
    w4, b4 = _fold_bn(params["conv4"])    # (384, 256), (1, 256)

    def kernel(x_ref, w1_ref, b1_ref, w2_ref, b2_ref, w3_ref, b3_ref,
               w4_ref, b4_ref, o_ref, y1_s, h1_s, y2_s, h2_s, h3_s):
        f32 = jnp.float32

        # ---- conv1 (K=50, stride=5, C_in=1) + BN + ReLU --------------------
        # patches[l, k] = x[5l + k]: 10 shifted unit-stride slices of the
        # (rows1, 5) view concatenated along lanes (k-fast, matches w1 rows).
        p1v = jnp.concatenate(
            [jnp.concatenate([x_ref[b, pl.ds(j, l1), :] for j in range(k1 // s1)],
                             axis=1) for b in range(nb)], axis=0)        # (nb*l1, 50)
        y1 = jnp.dot(p1v, w1_ref[...], preferred_element_type=f32) + b1_ref[...]
        y1_s[...] = jnp.maximum(y1, 0.0)                                 # (nb*l1, 16)

        # ---- MaxPool1d(2) fused (strided row loads, stays in VMEM) ---------
        h1_s[...] = jnp.maximum(y1_s[pl.ds(0, nb * p1, stride=2), :],
                                y1_s[pl.ds(1, nb * p1, stride=2), :])    # (nb*p1, 16)

        # ---- conv2 (K=45, stride=5, C_in=16) + BN + ReLU -------------------
        # patch columns ordered k-slow / c-fast to match w2 layout.
        p2v = jnp.concatenate(
            [jnp.concatenate([h1_s[pl.ds(b * p1 + k, l2, stride=s2), :]
                              for k in range(k2)], axis=1)
             for b in range(nb)], axis=0)                                # (nb*l2, 720)
        y2 = jnp.dot(p2v, w2_ref[...], preferred_element_type=f32) + b2_ref[...]
        y2_s[...] = jnp.maximum(y2, 0.0)                                 # (nb*l2, 64)

        h2_s[...] = jnp.maximum(y2_s[pl.ds(0, nb * p2, stride=2), :],
                                y2_s[pl.ds(1, nb * p2, stride=2), :])    # (nb*p2, 64)

        # ---- conv3 (K=3, stride=1) + BN + ReLU -----------------------------
        p3v = jnp.concatenate(
            [jnp.concatenate([h2_s[pl.ds(b * p2 + j, l3), :] for j in range(k3)],
                             axis=1) for b in range(nb)], axis=0)        # (nb*l3, 192)
        h3_s[...] = jnp.maximum(
            jnp.dot(p3v, w3_ref[...], preferred_element_type=f32) + b3_ref[...], 0.0)

        # ---- conv4 (K=3, stride=1) + BN + ReLU -----------------------------
        p4v = jnp.concatenate(
            [jnp.concatenate([h3_s[pl.ds(b * l3 + j, l4), :] for j in range(k4)],
                             axis=1) for b in range(nb)], axis=0)        # (nb*l4, 384)
        y4 = jnp.maximum(
            jnp.dot(p4v, w4_ref[...], preferred_element_type=f32) + b4_ref[...], 0.0)

        for b in range(nb):                       # lane-dense (256-wide) HBM store
            o_ref[b] = y4[b * l4:(b + 1) * l4, :]

    const2d = lambda i: (0, 0)
    out_nlc = pl.pallas_call(
        kernel,
        grid=(n // nb,),
        in_specs=[
            pl.BlockSpec((nb, rows1, s1), lambda i: (i, 0, 0)),
            pl.BlockSpec(w1.shape, const2d), pl.BlockSpec(b1.shape, const2d),
            pl.BlockSpec(w2.shape, const2d), pl.BlockSpec(b2.shape, const2d),
            pl.BlockSpec(w3.shape, const2d), pl.BlockSpec(b3.shape, const2d),
            pl.BlockSpec(w4.shape, const2d), pl.BlockSpec(b4.shape, const2d),
        ],
        out_specs=pl.BlockSpec((nb, l4, c4), lambda i: (i, 0, 0)),
        out_shape=jax.ShapeDtypeStruct((n, l4, c4), jnp.float32),
        scratch_shapes=[
            pltpu.VMEM((nb * l1, c1), jnp.float32),   # conv1 pre-pool
            pltpu.VMEM((nb * p1, c1), jnp.float32),   # conv1 pooled
            pltpu.VMEM((nb * l2, c2), jnp.float32),   # conv2 pre-pool
            pltpu.VMEM((nb * p2, c2), jnp.float32),   # conv2 pooled
            pltpu.VMEM((nb * l3, c3), jnp.float32),   # conv3 out
        ],
        compiler_params=pltpu.CompilerParams(
            dimension_semantics=("parallel",),        # v7x: shard batch over 2 TCs
            vmem_limit_bytes=32 * 1024 * 1024,        # plenty of headroom (<3 MiB used)
        ),
    )(x_r, w1, b1, w2, b2, w3, b3, w4, b4)

    out_ncl = jnp.transpose(out_nlc, (0, 2, 1))       # (N, 256, l4) — PyTorch NCL
    return out_ncl.reshape(-1, 1, n_outputs)          # == x.view(-1, 1, 3)


def make_layer_params(key, c_in, c_out, k):
    kw, kb, kg, kbe = jax.random.split(key, 4)
    return dict(
        w=0.05 * jax.random.normal(kw, (c_out, c_in, k), jnp.float32),
        b=0.05 * jax.random.normal(kb, (c_out,), jnp.float32),
        gamma=1.0 + 0.1 * jax.random.normal(kg, (c_out,), jnp.float32),
        beta=0.1 * jax.random.normal(kbe, (c_out,), jnp.float32),
        mean=jnp.zeros((c_out,), jnp.float32),
        var=jnp.ones((c_out,), jnp.float32),
    )


def init_params(key):
    kk1, kk2, kk3, kk4 = jax.random.split(key, 4)
    return dict(
        conv1=make_layer_params(kk1, 1, 16, 50),
        conv2=make_layer_params(kk2, 16, 64, 45),
        conv3=make_layer_params(kk3, 64, 128, 3),
        conv4=make_layer_params(kk4, 128, 256, 3),
    )


if __name__ == "__main__":
    key = jax.random.PRNGKey(0)
    kx, kp = jax.random.split(key)
    N, L = 2, 1145   # length chosen so conv4 output length == n_outputs == 3
    x = jax.random.normal(kx, (N, 1, L), jnp.float32)
    params = init_params(kp)

    out = jax.jit(cnn_1d_forward)(x, params)
    out = jax.block_until_ready(out)
    assert out.shape == (N * 256, 1, 3), out.shape
    assert bool(jnp.all(jnp.isfinite(out)))
    print("KERNEL_OK")
</pallas_src>

<mosaic_0001>
module attributes {stable_mosaic.version = 11 : i64} {
  func.func @kernel(%arg0: i32, %arg1: memref<1x229x5xf32, #tpu.memory_space<vmem>>, %arg2: memref<50x16xf32, #tpu.memory_space<vmem>>, %arg3: memref<1x16xf32, #tpu.memory_space<vmem>>, %arg4: memref<720x64xf32, #tpu.memory_space<vmem>>, %arg5: memref<1x64xf32, #tpu.memory_space<vmem>>, %arg6: memref<192x128xf32, #tpu.memory_space<vmem>>, %arg7: memref<1x128xf32, #tpu.memory_space<vmem>>, %arg8: memref<384x256xf32, #tpu.memory_space<vmem>>, %arg9: memref<1x256xf32, #tpu.memory_space<vmem>>, %arg10: memref<1x3x256xf32, #tpu.memory_space<vmem>>, %arg11: memref<220x16xf32, #tpu.memory_space<vmem>>, %arg12: memref<110x16xf32, #tpu.memory_space<vmem>>, %arg13: memref<14x64xf32, #tpu.memory_space<vmem>>, %arg14: memref<7x64xf32, #tpu.memory_space<vmem>>, %arg15: memref<5x128xf32, #tpu.memory_space<vmem>>) attributes {dimension_semantics = [#tpu.dimension_semantics<parallel>], iteration_bounds = array<i64: 2>, scalar_prefetch = 0 : i64, scratch_operands = 5 : i64, tpu.core_type = #tpu.core_type<tc>, window_params = [{transform_indices = @transform_0, window_bounds = array<i64: 1, 229, 5>}, {pipeline_mode = #tpu.pipeline_mode<synchronous>, transform_indices = @transform_1, window_bounds = array<i64: 50, 16>}, {pipeline_mode = #tpu.pipeline_mode<synchronous>, transform_indices = @transform_2, window_bounds = array<i64: 1, 16>}, {pipeline_mode = #tpu.pipeline_mode<synchronous>, transform_indices = @transform_3, window_bounds = array<i64: 720, 64>}, {pipeline_mode = #tpu.pipeline_mode<synchronous>, transform_indices = @transform_4, window_bounds = array<i64: 1, 64>}, {pipeline_mode = #tpu.pipeline_mode<synchronous>, transform_indices = @transform_5, window_bounds = array<i64: 192, 128>}, {pipeline_mode = #tpu.pipeline_mode<synchronous>, transform_indices = @transform_6, window_bounds = array<i64: 1, 128>}, {pipeline_mode = #tpu.pipeline_mode<synchronous>, transform_indices = @transform_7, window_bounds = array<i64: 384, 256>}, {pipeline_mode = #tpu.pipeline_mode<synchronous>, transform_indices = @transform_8, window_bounds = array<i64: 1, 256>}, {transform_indices = @transform_9, window_bounds = array<i64: 1, 3, 256>}]} {
    %c0 = arith.constant 0 : index
    %c0_0 = arith.constant 0 : index
    %c0_1 = arith.constant 0 : index
    %0 = vector.load %arg1[%c0, %c0_0, %c0_1] : memref<1x229x5xf32, #tpu.memory_space<vmem>>, vector<1x220x5xf32>
    %1 = vector.shape_cast %0 : vector<1x220x5xf32> to vector<220x5xf32>
    %c0_2 = arith.constant 0 : index
    %c1 = arith.constant 1 : index
    %c0_3 = arith.constant 0 : index
    %2 = vector.load %arg1[%c0_2, %c1, %c0_3] : memref<1x229x5xf32, #tpu.memory_space<vmem>>, vector<1x220x5xf32>
    %3 = vector.shape_cast %2 : vector<1x220x5xf32> to vector<220x5xf32>
    %c0_4 = arith.constant 0 : index
    %c2 = arith.constant 2 : index
    %c0_5 = arith.constant 0 : index
    %4 = vector.load %arg1[%c0_4, %c2, %c0_5] : memref<1x229x5xf32, #tpu.memory_space<vmem>>, vector<1x220x5xf32>
    %5 = vector.shape_cast %4 : vector<1x220x5xf32> to vector<220x5xf32>
    %c0_6 = arith.constant 0 : index
    %c3 = arith.constant 3 : index
    %c0_7 = arith.constant 0 : index
    %6 = vector.load %arg1[%c0_6, %c3, %c0_7] : memref<1x229x5xf32, #tpu.memory_space<vmem>>, vector<1x220x5xf32>
    %7 = vector.shape_cast %6 : vector<1x220x5xf32> to vector<220x5xf32>
    %c0_8 = arith.constant 0 : index
    %c4 = arith.constant 4 : index
    %c0_9 = arith.constant 0 : index
    %8 = vector.load %arg1[%c0_8, %c4, %c0_9] : memref<1x229x5xf32, #tpu.memory_space<vmem>>, vector<1x220x5xf32>
    %9 = vector.shape_cast %8 : vector<1x220x5xf32> to vector<220x5xf32>
    %c0_10 = arith.constant 0 : index
    %c5 = arith.constant 5 : index
    %c0_11 = arith.constant 0 : index
    %10 = vector.load %arg1[%c0_10, %c5, %c0_11] : memref<1x229x5xf32, #tpu.memory_space<vmem>>, vector<1x220x5xf32>
    %11 = vector.shape_cast %10 : vector<1x220x5xf32> to vector<220x5xf32>
    %c0_12 = arith.constant 0 : index
    %c6 = arith.constant 6 : index
    %c0_13 = arith.constant 0 : index
    %12 = vector.load %arg1[%c0_12, %c6, %c0_13] : memref<1x229x5xf32, #tpu.memory_space<vmem>>, vector<1x220x5xf32>
    %13 = vector.shape_cast %12 : vector<1x220x5xf32> to vector<220x5xf32>
    %c0_14 = arith.constant 0 : index
    %c7 = arith.constant 7 : index
    %c0_15 = arith.constant 0 : index
    %14 = vector.load %arg1[%c0_14, %c7, %c0_15] : memref<1x229x5xf32, #tpu.memory_space<vmem>>, vector<1x220x5xf32>
    %15 = vector.shape_cast %14 : vector<1x220x5xf32> to vector<220x5xf32>
    %c0_16 = arith.constant 0 : index
    %c8 = arith.constant 8 : index
    %c0_17 = arith.constant 0 : index
    %16 = vector.load %arg1[%c0_16, %c8, %c0_17] : memref<1x229x5xf32, #tpu.memory_space<vmem>>, vector<1x220x5xf32>
    %17 = vector.shape_cast %16 : vector<1x220x5xf32> to vector<220x5xf32>
    %c0_18 = arith.constant 0 : index
    %c9 = arith.constant 9 : index
    %c0_19 = arith.constant 0 : index
    %18 = vector.load %arg1[%c0_18, %c9, %c0_19] : memref<1x229x5xf32, #tpu.memory_space<vmem>>, vector<1x220x5xf32>
    %19 = vector.shape_cast %18 : vector<1x220x5xf32> to vector<220x5xf32>
    %20 = tpu.concatenate %1, %3, %5, %7, %9, %11, %13, %15, %17, %19 in 1 : vector<220x5xf32>, vector<220x5xf32>, vector<220x5xf32>, vector<220x5xf32>, vector<220x5xf32>, vector<220x5xf32>, vector<220x5xf32>, vector<220x5xf32>, vector<220x5xf32>, vector<220x5xf32> -> vector<220x50xf32>
    %c0_20 = arith.constant 0 : index
    %c0_21 = arith.constant 0 : index
    %21 = vector.load %arg2[%c0_20, %c0_21] : memref<50x16xf32, #tpu.memory_space<vmem>>, vector<50x16xf32>
    %cst = arith.constant dense<0.000000e+00> : vector<220x16xf32>
    %22 = tpu.matmul %20, %21, %cst {dimension_numbers = #tpu.dot_dimension_numbers<[1], [0], [0], [1], [0, 0, 1, 1], [], []>} : vector<220x50xf32>, vector<50x16xf32>, vector<220x16xf32> -> vector<220x16xf32>
    %c0_22 = arith.constant 0 : index
    %c0_23 = arith.constant 0 : index
    %23 = vector.load %arg3[%c0_22, %c0_23] : memref<1x16xf32, #tpu.memory_space<vmem>>, vector<1x16xf32>
    %24 = vector.broadcast %23 : vector<1x16xf32> to vector<220x16xf32>
    %25 = arith.addf %22, %24 : vector<220x16xf32>
    %cst_24 = arith.constant 0.000000e+00 : f32
    %26 = vector.broadcast %cst_24 : f32 to vector<220x16xf32>
    %27 = arith.maximumf %25, %26 : vector<220x16xf32>
    %c0_25 = arith.constant 0 : index
    %c0_26 = arith.constant 0 : index
    %28 = vector.load %arg11[%c0_25, %c0_26] : memref<220x16xf32, #tpu.memory_space<vmem>>, vector<220x16xf32>
    tpu.vector_store %arg11[%c0_25, %c0_26], %27 {strides = array<i32>} : memref<220x16xf32, #tpu.memory_space<vmem>>, vector<220x16xf32>,
    %c0_27 = arith.constant 0 : index
    %c0_28 = arith.constant 0 : index
    %29 = tpu.strided_load %arg11[%c0_27, %c0_28] {strides = array<i32: 2, 1>} : memref<220x16xf32, #tpu.memory_space<vmem>>, vector<110x16xf32>
    %c1_29 = arith.constant 1 : index
    %c0_30 = arith.constant 0 : index
    %30 = tpu.strided_load %arg11[%c1_29, %c0_30] {strides = array<i32: 2, 1>} : memref<220x16xf32, #tpu.memory_space<vmem>>, vector<110x16xf32>
    %31 = arith.maximumf %29, %30 : vector<110x16xf32>
    %c0_31 = arith.constant 0 : index
    %c0_32 = arith.constant 0 : index
    %32 = vector.load %arg12[%c0_31, %c0_32] : memref<110x16xf32, #tpu.memory_space<vmem>>, vector<110x16xf32>
    tpu.vector_store %arg12[%c0_31, %c0_32], %31 {strides = array<i32>} : memref<110x16xf32, #tpu.memory_space<vmem>>, vector<110x16xf32>,
    %c0_33 = arith.constant 0 : index
    %c0_34 = arith.constant 0 : index
    %33 = tpu.strided_load %arg12[%c0_33, %c0_34] {strides = array<i32: 5, 1>} : memref<110x16xf32, #tpu.memory_space<vmem>>, vector<14x16xf32>
    %c1_35 = arith.constant 1 : index
    %c0_36 = arith.constant 0 : index
    %34 = tpu.strided_load %arg12[%c1_35, %c0_36] {strides = array<i32: 5, 1>} : memref<110x16xf32, #tpu.memory_space<vmem>>, vector<14x16xf32>
    %c2_37 = arith.constant 2 : index
    %c0_38 = arith.constant 0 : index
    %35 = tpu.strided_load %arg12[%c2_37, %c0_38] {strides = array<i32: 5, 1>} : memref<110x16xf32, #tpu.memory_space<vmem>>, vector<14x16xf32>
    %c3_39 = arith.constant 3 : index
    %c0_40 = arith.constant 0 : index
    %36 = tpu.strided_load %arg12[%c3_39, %c0_40] {strides = array<i32: 5, 1>} : memref<110x16xf32, #tpu.memory_space<vmem>>, vector<14x16xf32>
    %c4_41 = arith.constant 4 : index
    %c0_42 = arith.constant 0 : index
    %37 = tpu.strided_load %arg12[%c4_41, %c0_42] {strides = array<i32: 5, 1>} : memref<110x16xf32, #tpu.memory_space<vmem>>, vector<14x16xf32>
    %c5_43 = arith.constant 5 : index
    %c0_44 = arith.constant 0 : index
    %38 = tpu.strided_load %arg12[%c5_43, %c0_44] {strides = array<i32: 5, 1>} : memref<110x16xf32, #tpu.memory_space<vmem>>, vector<14x16xf32>
    %c6_45 = arith.constant 6 : index
    %c0_46 = arith.constant 0 : index
    %39 = tpu.strided_load %arg12[%c6_45, %c0_46] {strides = array<i32: 5, 1>} : memref<110x16xf32, #tpu.memory_space<vmem>>, vector<14x16xf32>
    %c7_47 = arith.constant 7 : index
    %c0_48 = arith.constant 0 : index
    %40 = tpu.strided_load %arg12[%c7_47, %c0_48] {strides = array<i32: 5, 1>} : memref<110x16xf32, #tpu.memory_space<vmem>>, vector<14x16xf32>
    %c8_49 = arith.constant 8 : index
    %c0_50 = arith.constant 0 : index
    %41 = tpu.strided_load %arg12[%c8_49, %c0_50] {strides = array<i32: 5, 1>} : memref<110x16xf32, #tpu.memory_space<vmem>>, vector<14x16xf32>
    %c9_51 = arith.constant 9 : index
    %c0_52 = arith.constant 0 : index
    %42 = tpu.strided_load %arg12[%c9_51, %c0_52] {strides = array<i32: 5, 1>} : memref<110x16xf32, #tpu.memory_space<vmem>>, vector<14x16xf32>
    %c10 = arith.constant 10 : index
    %c0_53 = arith.constant 0 : index
    %43 = tpu.strided_load %arg12[%c10, %c0_53] {strides = array<i32: 5, 1>} : memref<110x16xf32, #tpu.memory_space<vmem>>, vector<14x16xf32>
    %c11 = arith.constant 11 : index
    %c0_54 = arith.constant 0 : index
    %44 = tpu.strided_load %arg12[%c11, %c0_54] {strides = array<i32: 5, 1>} : memref<110x16xf32, #tpu.memory_space<vmem>>, vector<14x16xf32>
    %c12 = arith.constant 12 : index
    %c0_55 = arith.constant 0 : index
    %45 = tpu.strided_load %arg12[%c12, %c0_55] {strides = array<i32: 5, 1>} : memref<110x16xf32, #tpu.memory_space<vmem>>, vector<14x16xf32>
    %c13 = arith.constant 13 : index
    %c0_56 = arith.constant 0 : index
    %46 = tpu.strided_load %arg12[%c13, %c0_56] {strides = array<i32: 5, 1>} : memref<110x16xf32, #tpu.memory_space<vmem>>, vector<14x16xf32>
    %c14 = arith.constant 14 : index
    %c0_57 = arith.constant 0 : index
    %47 = tpu.strided_load %arg12[%c14, %c0_57] {strides = array<i32: 5, 1>} : memref<110x16xf32, #tpu.memory_space<vmem>>, vector<14x16xf32>
    %c15 = arith.constant 15 : index
    %c0_58 = arith.constant 0 : index
    %48 = tpu.strided_load %arg12[%c15, %c0_58] {strides = array<i32: 5, 1>} : memref<110x16xf32, #tpu.memory_space<vmem>>, vector<14x16xf32>
    %c16 = arith.constant 16 : index
    %c0_59 = arith.constant 0 : index
    %49 = tpu.strided_load %arg12[%c16, %c0_59] {strides = array<i32: 5, 1>} : memref<110x16xf32, #tpu.memory_space<vmem>>, vector<14x16xf32>
    %c17 = arith.constant 17 : index
    %c0_60 = arith.constant 0 : index
    %50 = tpu.strided_load %arg12[%c17, %c0_60] {strides = array<i32: 5, 1>} : memref<110x16xf32, #tpu.memory_space<vmem>>, vector<14x16xf32>
    %c18 = arith.constant 18 : index
    %c0_61 = arith.constant 0 : index
    %51 = tpu.strided_load %arg12[%c18, %c0_61] {strides = array<i32: 5, 1>} : memref<110x16xf32, #tpu.memory_space<vmem>>, vector<14x16xf32>
    %c19 = arith.constant 19 : index
    %c0_62 = arith.constant 0 : index
    %52 = tpu.strided_load %arg12[%c19, %c0_62] {strides = array<i32: 5, 1>} : memref<110x16xf32, #tpu.memory_space<vmem>>, vector<14x16xf32>
    %c20 = arith.constant 20 : index
    %c0_63 = arith.constant 0 : index
    %53 = tpu.strided_load %arg12[%c20, %c0_63] {strides = array<i32: 5, 1>} : memref<110x16xf32, #tpu.memory_space<vmem>>, vector<14x16xf32>
    %c21 = arith.constant 21 : index
    %c0_64 = arith.constant 0 : index
    %54 = tpu.strided_load %arg12[%c21, %c0_64] {strides = array<i32: 5, 1>} : memref<110x16xf32, #tpu.memory_space<vmem>>, vector<14x16xf32>
    %c22 = arith.constant 22 : index
    %c0_65 = arith.constant 0 : index
    %55 = tpu.strided_load %arg12[%c22, %c0_65] {strides = array<i32: 5, 1>} : memref<110x16xf32, #tpu.memory_space<vmem>>, vector<14x16xf32>
    %c23 = arith.constant 23 : index
    %c0_66 = arith.constant 0 : index
    %56 = tpu.strided_load %arg12[%c23, %c0_66] {strides = array<i32: 5, 1>} : memref<110x16xf32, #tpu.memory_space<vmem>>, vector<14x16xf32>
    %c24 = arith.constant 24 : index
    %c0_67 = arith.constant 0 : index
    %57 = tpu.strided_load %arg12[%c24, %c0_67] {strides = array<i32: 5, 1>} : memref<110x16xf32, #tpu.memory_space<vmem>>, vector<14x16xf32>
    %c25 = arith.constant 25 : index
    %c0_68 = arith.constant 0 : index
    %58 = tpu.strided_load %arg12[%c25, %c0_68] {strides = array<i32: 5, 1>} : memref<110x16xf32, #tpu.memory_space<vmem>>, vector<14x16xf32>
    %c26 = arith.constant 26 : index
    %c0_69 = arith.constant 0 : index
    %59 = tpu.strided_load %arg12[%c26, %c0_69] {strides = array<i32: 5, 1>} : memref<110x16xf32, #tpu.memory_space<vmem>>, vector<14x16xf32>
    %c27 = arith.constant 27 : index
    %c0_70 = arith.constant 0 : index
    %60 = tpu.strided_load %arg12[%c27, %c0_70] {strides = array<i32: 5, 1>} : memref<110x16xf32, #tpu.memory_space<vmem>>, vector<14x16xf32>
    %c28 = arith.constant 28 : index
    %c0_71 = arith.constant 0 : index
    %61 = tpu.strided_load %arg12[%c28, %c0_71] {strides = array<i32: 5, 1>} : memref<110x16xf32, #tpu.memory_space<vmem>>, vector<14x16xf32>
    %c29 = arith.constant 29 : index
    %c0_72 = arith.constant 0 : index
    %62 = tpu.strided_load %arg12[%c29, %c0_72] {strides = array<i32: 5, 1>} : memref<110x16xf32, #tpu.memory_space<vmem>>, vector<14x16xf32>
    %c30 = arith.constant 30 : index
    %c0_73 = arith.constant 0 : index
    %63 = tpu.strided_load %arg12[%c30, %c0_73] {strides = array<i32: 5, 1>} : memref<110x16xf32, #tpu.memory_space<vmem>>, vector<14x16xf32>
    %c31 = arith.constant 31 : index
    %c0_74 = arith.constant 0 : index
    %64 = tpu.strided_load %arg12[%c31, %c0_74] {strides = array<i32: 5, 1>} : memref<110x16xf32, #tpu.memory_space<vmem>>, vector<14x16xf32>
    %c32 = arith.constant 32 : index
    %c0_75 = arith.constant 0 : index
    %65 = tpu.strided_load %arg12[%c32, %c0_75] {strides = array<i32: 5, 1>} : memref<110x16xf32, #tpu.memory_space<vmem>>, vector<14x16xf32>
    %c33 = arith.constant 33 : index
    %c0_76 = arith.constant 0 : index
    %66 = tpu.strided_load %arg12[%c33, %c0_76] {strides = array<i32: 5, 1>} : memref<110x16xf32, #tpu.memory_space<vmem>>, vector<14x16xf32>
    %c34 = arith.constant 34 : index
    %c0_77 = arith.constant 0 : index
    %67 = tpu.strided_load %arg12[%c34, %c0_77] {strides = array<i32: 5, 1>} : memref<110x16xf32, #tpu.memory_space<vmem>>, vector<14x16xf32>
    %c35 = arith.constant 35 : index
    %c0_78 = arith.constant 0 : index
    %68 = tpu.strided_load %arg12[%c35, %c0_78] {strides = array<i32: 5, 1>} : memref<110x16xf32, #tpu.memory_space<vmem>>, vector<14x16xf32>
    %c36 = arith.constant 36 : index
    %c0_79 = arith.constant 0 : index
    %69 = tpu.strided_load %arg12[%c36, %c0_79] {strides = array<i32: 5, 1>} : memref<110x16xf32, #tpu.memory_space<vmem>>, vector<14x16xf32>
    %c37 = arith.constant 37 : index
    %c0_80 = arith.constant 0 : index
    %70 = tpu.strided_load %arg12[%c37, %c0_80] {strides = array<i32: 5, 1>} : memref<110x16xf32, #tpu.memory_space<vmem>>, vector<14x16xf32>
    %c38 = arith.constant 38 : index
    %c0_81 = arith.constant 0 : index
    %71 = tpu.strided_load %arg12[%c38, %c0_81] {strides = array<i32: 5, 1>} : memref<110x16xf32, #tpu.memory_space<vmem>>, vector<14x16xf32>
    %c39 = arith.constant 39 : index
    %c0_82 = arith.constant 0 : index
    %72 = tpu.strided_load %arg12[%c39, %c0_82] {strides = array<i32: 5, 1>} : memref<110x16xf32, #tpu.memory_space<vmem>>, vector<14x16xf32>
    %c40 = arith.constant 40 : index
    %c0_83 = arith.constant 0 : index
    %73 = tpu.strided_load %arg12[%c40, %c0_83] {strides = array<i32: 5, 1>} : memref<110x16xf32, #tpu.memory_space<vmem>>, vector<14x16xf32>
    %c41 = arith.constant 41 : index
    %c0_84 = arith.constant 0 : index
    %74 = tpu.strided_load %arg12[%c41, %c0_84] {strides = array<i32: 5, 1>} : memref<110x16xf32, #tpu.memory_space<vmem>>, vector<14x16xf32>
    %c42 = arith.constant 42 : index
    %c0_85 = arith.constant 0 : index
    %75 = tpu.strided_load %arg12[%c42, %c0_85] {strides = array<i32: 5, 1>} : memref<110x16xf32, #tpu.memory_space<vmem>>, vector<14x16xf32>
    %c43 = arith.constant 43 : index
    %c0_86 = arith.constant 0 : index
    %76 = tpu.strided_load %arg12[%c43, %c0_86] {strides = array<i32: 5, 1>} : memref<110x16xf32, #tpu.memory_space<vmem>>, vector<14x16xf32>
    %c44 = arith.constant 44 : index
    %c0_87 = arith.constant 0 : index
    %77 = tpu.strided_load %arg12[%c44, %c0_87] {strides = array<i32: 5, 1>} : memref<110x16xf32, #tpu.memory_space<vmem>>, vector<14x16xf32>
    %78 = tpu.concatenate %33, %34, %35, %36, %37, %38, %39, %40, %41, %42, %43, %44, %45, %46, %47, %48 in 1 : vector<14x16xf32>, vector<14x16xf32>, vector<14x16xf32>, vector<14x16xf32>, vector<14x16xf32>, vector<14x16xf32>, vector<14x16xf32>, vector<14x16xf32>, vector<14x16xf32>, vector<14x16xf32>, vector<14x16xf32>, vector<14x16xf32>, vector<14x16xf32>, vector<14x16xf32>, vector<14x16xf32>, vector<14x16xf32> -> vector<14x256xf32>
    %79 = tpu.concatenate %49, %50, %51, %52, %53, %54, %55, %56, %57, %58, %59, %60, %61, %62, %63, %64 in 1 : vector<14x16xf32>, vector<14x16xf32>, vector<14x16xf32>, vector<14x16xf32>, vector<14x16xf32>, vector<14x16xf32>, vector<14x16xf32>, vector<14x16xf32>, vector<14x16xf32>, vector<14x16xf32>, vector<14x16xf32>, vector<14x16xf32>, vector<14x16xf32>, vector<14x16xf32>, vector<14x16xf32>, vector<14x16xf32> -> vector<14x256xf32>
    %80 = tpu.concatenate %65, %66, %67, %68, %69, %70, %71, %72, %73, %74, %75, %76, %77 in 1 : vector<14x16xf32>, vector<14x16xf32>, vector<14x16xf32>, vector<14x16xf32>, vector<14x16xf32>, vector<14x16xf32>, vector<14x16xf32>, vector<14x16xf32>, vector<14x16xf32>, vector<14x16xf32>, vector<14x16xf32>, vector<14x16xf32>, vector<14x16xf32> -> vector<14x208xf32>
    %81 = tpu.concatenate %78, %79, %80 in 1 : vector<14x256xf32>, vector<14x256xf32>, vector<14x208xf32> -> vector<14x720xf32>
    %c0_88 = arith.constant 0 : index
    %c0_89 = arith.constant 0 : index
    %82 = vector.load %arg4[%c0_88, %c0_89] : memref<720x64xf32, #tpu.memory_space<vmem>>, vector<720x64xf32>
    %cst_90 = arith.constant dense<0.000000e+00> : vector<14x64xf32>
    %83 = tpu.matmul %81, %82, %cst_90 {dimension_numbers = #tpu.dot_dimension_numbers<[1], [0], [0], [1], [0, 0, 1, 1], [], []>} : vector<14x720xf32>, vector<720x64xf32>, vector<14x64xf32> -> vector<14x64xf32>
    %c0_91 = arith.constant 0 : index
    %c0_92 = arith.constant 0 : index
    %84 = vector.load %arg5[%c0_91, %c0_92] : memref<1x64xf32, #tpu.memory_space<vmem>>, vector<1x64xf32>
    %85 = vector.broadcast %84 : vector<1x64xf32> to vector<14x64xf32>
    %86 = arith.addf %83, %85 : vector<14x64xf32>
    %cst_93 = arith.constant 0.000000e+00 : f32
    %87 = vector.broadcast %cst_93 : f32 to vector<14x64xf32>
    %88 = arith.maximumf %86, %87 : vector<14x64xf32>
    %c0_94 = arith.constant 0 : index
    %c0_95 = arith.constant 0 : index
    %89 = vector.load %arg13[%c0_94, %c0_95] : memref<14x64xf32, #tpu.memory_space<vmem>>, vector<14x64xf32>
    tpu.vector_store %arg13[%c0_94, %c0_95], %88 {strides = array<i32>} : memref<14x64xf32, #tpu.memory_space<vmem>>, vector<14x64xf32>,
    %c0_96 = arith.constant 0 : index
    %c0_97 = arith.constant 0 : index
    %90 = tpu.strided_load %arg13[%c0_96, %c0_97] {strides = array<i32: 2, 1>} : memref<14x64xf32, #tpu.memory_space<vmem>>, vector<7x64xf32>
    %c1_98 = arith.constant 1 : index
    %c0_99 = arith.constant 0 : index
    %91 = tpu.strided_load %arg13[%c1_98, %c0_99] {strides = array<i32: 2, 1>} : memref<14x64xf32, #tpu.memory_space<vmem>>, vector<7x64xf32>
    %92 = arith.maximumf %90, %91 : vector<7x64xf32>
    %c0_100 = arith.constant 0 : index
    %c0_101 = arith.constant 0 : index
    %93 = vector.load %arg14[%c0_100, %c0_101] : memref<7x64xf32, #tpu.memory_space<vmem>>, vector<7x64xf32>
    tpu.vector_store %arg14[%c0_100, %c0_101], %92 {strides = array<i32>} : memref<7x64xf32, #tpu.memory_space<vmem>>, vector<7x64xf32>,
    %c0_102 = arith.constant 0 : index
    %c0_103 = arith.constant 0 : index
    %94 = vector.load %arg14[%c0_102, %c0_103] : memref<7x64xf32, #tpu.memory_space<vmem>>, vector<5x64xf32>
    %c1_104 = arith.constant 1 : index
    %c0_105 = arith.constant 0 : index
    %95 = vector.load %arg14[%c1_104, %c0_105] : memref<7x64xf32, #tpu.memory_space<vmem>>, vector<5x64xf32>
    %c2_106 = arith.constant 2 : index
    %c0_107 = arith.constant 0 : index
    %96 = vector.load %arg14[%c2_106, %c0_107] : memref<7x64xf32, #tpu.memory_space<vmem>>, vector<5x64xf32>
    %97 = tpu.concatenate %94, %95, %96 in 1 : vector<5x64xf32>, vector<5x64xf32>, vector<5x64xf32> -> vector<5x192xf32>
    %c0_108 = arith.constant 0 : index
    %c0_109 = arith.constant 0 : index
    %98 = vector.load %arg6[%c0_108, %c0_109] : memref<192x128xf32, #tpu.memory_space<vmem>>, vector<192x128xf32>
    %cst_110 = arith.constant dense<0.000000e+00> : vector<5x128xf32>
    %99 = tpu.matmul %97, %98, %cst_110 {dimension_numbers = #tpu.dot_dimension_numbers<[1], [0], [0], [1], [0, 0, 1, 1], [], []>} : vector<5x192xf32>, vector<192x128xf32>, vector<5x128xf32> -> vector<5x128xf32>
    %c0_111 = arith.constant 0 : index
    %c0_112 = arith.constant 0 : index
    %100 = vector.load %arg7[%c0_111, %c0_112] : memref<1x128xf32, #tpu.memory_space<vmem>>, vector<1x128xf32>
    %101 = vector.broadcast %100 : vector<1x128xf32> to vector<5x128xf32>
    %102 = arith.addf %99, %101 : vector<5x128xf32>
    %cst_113 = arith.constant 0.000000e+00 : f32
    %103 = vector.broadcast %cst_113 : f32 to vector<5x128xf32>
    %104 = arith.maximumf %102, %103 : vector<5x128xf32>
    %c0_114 = arith.constant 0 : index
    %c0_115 = arith.constant 0 : index
    %105 = vector.load %arg15[%c0_114, %c0_115] : memref<5x128xf32, #tpu.memory_space<vmem>>, vector<5x128xf32>
    tpu.vector_store %arg15[%c0_114, %c0_115], %104 {strides = array<i32>} : memref<5x128xf32, #tpu.memory_space<vmem>>, vector<5x128xf32>,
    %c0_116 = arith.constant 0 : index
    %c0_117 = arith.constant 0 : index
    %106 = vector.load %arg15[%c0_116, %c0_117] : memref<5x128xf32, #tpu.memory_space<vmem>>, vector<3x128xf32>
    %c1_118 = arith.constant 1 : index
    %c0_119 = arith.constant 0 : index
    %107 = vector.load %arg15[%c1_118, %c0_119] : memref<5x128xf32, #tpu.memory_space<vmem>>, vector<3x128xf32>
    %c2_120 = arith.constant 2 : index
    %c0_121 = arith.constant 0 : index
    %108 = vector.load %arg15[%c2_120, %c0_121] : memref<5x128xf32, #tpu.memory_space<vmem>>, vector<3x128xf32>
    %109 = tpu.concatenate %106, %107, %108 in 1 : vector<3x128xf32>, vector<3x128xf32>, vector<3x128xf32> -> vector<3x384xf32>
    %c0_122 = arith.constant 0 : index
    %c0_123 = arith.constant 0 : index
    %110 = vector.load %arg8[%c0_122, %c0_123] : memref<384x256xf32, #tpu.memory_space<vmem>>, vector<384x256xf32>
    %cst_124 = arith.constant dense<0.000000e+00> : vector<3x256xf32>
    %111 = tpu.matmul %109, %110, %cst_124 {dimension_numbers = #tpu.dot_dimension_numbers<[1], [0], [0], [1], [0, 0, 1, 1], [], []>} : vector<3x384xf32>, vector<384x256xf32>, vector<3x256xf32> -> vector<3x256xf32>
    %c0_125 = arith.constant 0 : index
    %c0_126 = arith.constant 0 : index
    %112 = vector.load %arg9[%c0_125, %c0_126] : memref<1x256xf32, #tpu.memory_space<vmem>>, vector<1x256xf32>
    %113 = vector.broadcast %112 : vector<1x256xf32> to vector<3x256xf32>
    %114 = arith.addf %111, %113 : vector<3x256xf32>
    %cst_127 = arith.constant 0.000000e+00 : f32
    %115 = vector.broadcast %cst_127 : f32 to vector<3x256xf32>
    %116 = arith.maximumf %114, %115 : vector<3x256xf32>
    %c0_128 = arith.constant 0 : index
    %c0_129 = arith.constant 0 : index
    %c0_130 = arith.constant 0 : index
    %117 = vector.load %arg10[%c0_128, %c0_129, %c0_130] : memref<1x3x256xf32, #tpu.memory_space<vmem>>, vector<1x3x256xf32>
    %118 = vector.shape_cast %117 : vector<1x3x256xf32> to vector<3x256xf32>
    %119 = vector.shape_cast %116 : vector<3x256xf32> to vector<1x3x256xf32>
    tpu.vector_store %arg10[%c0_128, %c0_129, %c0_130], %119 {strides = array<i32>} : memref<1x3x256xf32, #tpu.memory_space<vmem>>, vector<1x3x256xf32>,
    return
  }
  func.func @transform_0(%arg0: i32) -> (i32, i32, i32) {
    %c0_i32 = arith.constant 0 : i32
    %c0_i32_0 = arith.constant 0 : i32
    %c0_i32_1 = arith.constant 0 : i32
    return %arg0, %c0_i32, %c0_i32_0 : i32, i32, i32
  }
  func.func @transform_1(%arg0: i32) -> (i32, i32) {
    %c0_i32 = arith.constant 0 : i32
    %c0_i32_0 = arith.constant 0 : i32
    %c0_i32_1 = arith.constant 0 : i32
    return %c0_i32, %c0_i32_0 : i32, i32
  }
  func.func @transform_2(%arg0: i32) -> (i32, i32) {
    %c0_i32 = arith.constant 0 : i32
    %c0_i32_0 = arith.constant 0 : i32
    %c0_i32_1 = arith.constant 0 : i32
    return %c0_i32, %c0_i32_0 : i32, i32
  }
  func.func @transform_3(%arg0: i32) -> (i32, i32) {
    %c0_i32 = arith.constant 0 : i32
    %c0_i32_0 = arith.constant 0 : i32
    %c0_i32_1 = arith.constant 0 : i32
    return %c0_i32, %c0_i32_0 : i32, i32
  }
  func.func @transform_4(%arg0: i32) -> (i32, i32) {
    %c0_i32 = arith.constant 0 : i32
    %c0_i32_0 = arith.constant 0 : i32
    %c0_i32_1 = arith.constant 0 : i32
    return %c0_i32, %c0_i32_0 : i32, i32
  }
  func.func @transform_5(%arg0: i32) -> (i32, i32) {
    %c0_i32 = arith.constant 0 : i32
    %c0_i32_0 = arith.constant 0 : i32
    %c0_i32_1 = arith.constant 0 : i32
    return %c0_i32, %c0_i32_0 : i32, i32
  }
  func.func @transform_6(%arg0: i32) -> (i32, i32) {
    %c0_i32 = arith.constant 0 : i32
    %c0_i32_0 = arith.constant 0 : i32
    %c0_i32_1 = arith.constant 0 : i32
    return %c0_i32, %c0_i32_0 : i32, i32
  }
  func.func @transform_7(%arg0: i32) -> (i32, i32) {
    %c0_i32 = arith.constant 0 : i32
    %c0_i32_0 = arith.constant 0 : i32
    %c0_i32_1 = arith.constant 0 : i32
    return %c0_i32, %c0_i32_0 : i32, i32
  }
  func.func @transform_8(%arg0: i32) -> (i32, i32) {
    %c0_i32 = arith.constant 0 : i32
    %c0_i32_0 = arith.constant 0 : i32
    %c0_i32_1 = arith.constant 0 : i32
    return %c0_i32, %c0_i32_0 : i32, i32
  }
  func.func @transform_9(%arg0: i32) -> (i32, i32, i32) {
    %c0_i32 = arith.constant 0 : i32
    %c0_i32_0 = arith.constant 0 : i32
    %c0_i32_1 = arith.constant 0 : i32
    return %arg0, %c0_i32, %c0_i32_0 : i32, i32, i32
  }
}

</mosaic_0001>

<llo_original>
// kernel: squeeze.1
$region0: #{squeeze.1}
  %s0 = inlined_call_operand.vmem [shape: f32[2,1145], index: 0, kind: input, shape index: {}]
  %s1 = inlined_call_operand.vmem [shape: f32[2,229,5], index: 1, kind: output, shape index: {}]
  $region1: #{squeeze.1} parent=0
    #allocation0 [shape = 'u8[36864]{0}', space=vmem, size = 0x9000, scoped, tag = 'scoped mem for input reshape']
    %s3 = ssub.s32 4, 1
    %s4 = scalar_lea.vmem %s0, 16
    %v5 = vld [vmem:[%s4] sm:%s3]
    %s6 = scalar_lea.vmem [#allocation0], 64
    %7 = vst [vmem:[%s6] sm:%s3] %v5
    %s8 = scalar_lea.vmem %s0, 14
    %v9 = vld [vmem:[%s8] sm:%s3]
    %s10 = scalar_lea.vmem [#allocation0], 56
    %11 = vst [vmem:[%s10] sm:%s3] %v9
    %s12 = scalar_lea.vmem %s0, 12
    %v13 = vld [vmem:[%s12] sm:%s3]
    %s14 = scalar_lea.vmem [#allocation0], 48
    %15 = vst [vmem:[%s14] sm:%s3] %v13
    %s16 = scalar_lea.vmem %s0, 10
    %v17 = vld [vmem:[%s16] sm:%s3]
    %s18 = scalar_lea.vmem [#allocation0], 40
    %19 = vst [vmem:[%s18] sm:%s3] %v17
    %s20 = scalar_lea.vmem %s0, 8
    %v21 = vld [vmem:[%s20] sm:%s3]
    %s22 = scalar_lea.vmem [#allocation0], 32
    %23 = vst [vmem:[%s22] sm:%s3] %v21
    %s24 = scalar_lea.vmem %s0, 6
    %v25 = vld [vmem:[%s24] sm:%s3]
    %s26 = scalar_lea.vmem [#allocation0], 24
    %27 = vst [vmem:[%s26] sm:%s3] %v25
    %s28 = scalar_lea.vmem %s0, 4
    %v29 = vld [vmem:[%s28] sm:%s3]
    %s30 = scalar_lea.vmem [#allocation0], 16
    %31 = vst [vmem:[%s30] sm:%s3] %v29
    %s32 = scalar_lea.vmem %s0, 2
    %v33 = vld [vmem:[%s32] sm:%s3]
    %s34 = scalar_lea.vmem [#allocation0], 8
    %35 = vst [vmem:[%s34] sm:%s3] %v33
    %v36 = vld [vmem:[%s0] sm:%s3]
    %37 = vst [vmem:[#allocation0] sm:%s3] %v36
    %v38 = vld [vmem:[#allocation0] sm:$0x3]
    %vm39 = vcmask 39936
    %40 = vst.msk [vmem:[%s1] ss:$232 sm:$0x3] %vm39, %v38
    %s41 = scalar_lea.vmem [#allocation0], 40
    %v42 = vld [vmem:[%s41] sm:$0x3]
    %vm43 = vcmask 39936
    %s44 = scalar_lea.vmem %s1, 128
    %45 = vst.msk [vmem:[%s44] ss:$232 sm:$0x3] %vm43, %v42
    %s46 = scalar_lea.vmem [#allocation0], 24
    %v47 = vld [vmem:[%s46] sm:$0x3]
    %s48 = scalar_lea.vmem [#allocation0], 62
    %v49 = vld [vmem:[%s48] sm:$0xc]
    %vm50 = vcmask 1043458
    %v51 = vsel %vm50, %v49, %v47
    %52 = vrot.lane.b32.xlu0 %v51, 127
    %v53 = vpop.permute.xlu0 %52
    %vm54 = vcmask 39936
    %s55 = scalar_lea.vmem %s1, 77
    %56 = vst.msk [vmem:[%s55] ss:$232 sm:$0x3] %vm54, %v53
    %s57 = scalar_lea.vmem %s1, 4294967037
    %58 = vst.msk [vmem:[%s57] ss:$232 sm:$0xc] %vm54, %v53
    %s59 = scalar_lea.vmem [#allocation0], 9
    %s60 = smov 3
    %v61 = vld [vmem:[%s59] ss:$-1 sm:%s60]
    %s62 = scalar_lea.vmem [#allocation0], 51
    %s63 = smov 12
    %v64 = vld [vmem:[%s62] ss:$-1 sm:%s63]
    %vm65 = vcmask 1043458
    %v66 = vsel %vm65, %v64, %v61
    %67 = vrot.lane.b32.xlu0 %v66, 126
    %v68 = vpop.permute.xlu0 %67
    %vm69 = vcmask 39936
    %s70 = scalar_lea.vmem %s1, 258
    %71 = vst.msk [vmem:[%s70] ss:$-232 sm:$0x3] %vm69, %v68
    %s72 = scalar_lea.vmem %s1, 850
    %73 = vst.msk [vmem:[%s72] ss:$-232 sm:$0xc] %vm69, %v68
    %s74 = scalar_lea.vmem [#allocation0], 32
    %v75 = vld [vmem:[%s74] sm:$0x3]
    %76 = vrot.lane.b32.xlu0 %v75, 125
    %v77 = vpop.permute.xlu0 %76
    %vm78 = vcmask 39936
    %s79 = scalar_lea.vmem %s1, 103
    %80 = vst.msk [vmem:[%s79] ss:$232 sm:$0x3] %vm78, %v77
    %s81 = scalar_lea.vmem [#allocation0], 16
    %v82 = vld [vmem:[%s81] sm:$0x3]
    %s83 = scalar_lea.vmem [#allocation0], 54
    %v84 = vld [vmem:[%s83] sm:$0xc]
    %vm85 = vcmask 1043458
    %v86 = vsel %vm85, %v84, %v82
    %87 = vrot.lane.b32.xlu0 %v86, 124
    %v88 = vpop.permute.xlu0 %87
    %vm89 = vcmask 39936
    %s90 = scalar_lea.vmem %s1, 52
    %91 = vst.msk [vmem:[%s90] ss:$232 sm:$0x3] %vm89, %v88
    %s92 = scalar_lea.vmem %s1, 4294967012
    %93 = vst.msk [vmem:[%s92] ss:$232 sm:$0xc] %vm89, %v88
    %v94 = vld [vmem:[#allocation0] sm:$0x3]
    %s95 = scalar_lea.vmem [#allocation0], 38
    %v96 = vld [vmem:[%s95] sm:$0xc]
    %vm97 = vcmask 1043458
    %v98 = vsel %vm97, %v96, %v94
    %99 = vrot.lane.b32.xlu0 %v98, 123
    %v100 = vpop.permute.xlu0 %99
    %vm101 = vcmask 39936
    %s102 = scalar_lea.vmem %s1, 1
    %103 = vst.msk [vmem:[%s102] ss:$232 sm:$0x3] %vm101, %v100
    %s104 = scalar_lea.vmem %s1, 4294966961
    %105 = vst.msk [vmem:[%s104] ss:$232 sm:$0xc] %vm101, %v100
    %s106 = scalar_lea.vmem [#allocation0], 24
    %v107 = vld [vmem:[%s106] sm:$0x3]
    %s108 = scalar_lea.vmem [#allocation0], 62
    %v109 = vld [vmem:[%s108] sm:$0xc]
    %vm110 = vcmask 1043458
    %v111 = vsel %vm110, %v109, %v107
    %112 = vrot.lane.b32.xlu0 %v111, 122
    %v113 = vpop.permute.xlu0 %112
    %vm114 = vcmask 39936
    %s115 = scalar_lea.vmem %s1, 78
    %116 = vst.msk [vmem:[%s115] ss:$232 sm:$0x3] %vm114, %v113
    %s117 = scalar_lea.vmem %s1, 4294967038
    %118 = vst.msk [vmem:[%s117] ss:$232 sm:$0xc] %vm114, %v113
    %s119 = scalar_lea.vmem [#allocation0], 9
    %s120 = smov 3
    %v121 = vld [vmem:[%s119] ss:$-1 sm:%s120]
    %s122 = scalar_lea.vmem [#allocation0], 51
    %s123 = smov 12
    %v124 = vld [vmem:[%s122] ss:$-1 sm:%s123]
    %vm125 = vcmask 1043458
    %v126 = vsel %vm125, %v124, %v121
    %127 = vrot.lane.b32.xlu0 %v126, 121
    %v128 = vpop.permute.xlu0 %127
    %vm129 = vcmask 39936
    %s130 = scalar_lea.vmem %s1, 259
    %131 = vst.msk [vmem:[%s130] ss:$-232 sm:$0x3] %vm129, %v128
    %s132 = scalar_lea.vmem %s1, 851
    %133 = vst.msk [vmem:[%s132] ss:$-232 sm:$0xc] %vm129, %v128
    %s134 = scalar_lea.vmem [#allocation0], 32
    %v135 = vld [vmem:[%s134] sm:$0x3]
    %136 = vrot.lane.b32.xlu0 %v135, 120
    %v137 = vpop.permute.xlu0 %136
    %vm138 = vcmask 39936
    %s139 = scalar_lea.vmem %s1, 104
    %140 = vst.msk [vmem:[%s139] ss:$232 sm:$0x3] %vm138, %v137
    %s141 = scalar_lea.vmem [#allocation0], 16
    %v142 = vld [vmem:[%s141] sm:$0x3]
    %s143 = scalar_lea.vmem [#allocation0], 54
    %v144 = vld [vmem:[%s143] sm:$0xc]
    %vm145 = vcmask 1043458
    %v146 = vsel %vm145, %v144, %v142
    %147 = vrot.lane.b32.xlu0 %v146, 119
    %v148 = vpop.permute.xlu0 %147
    %vm149 = vcmask 39936
    %s150 = scalar_lea.vmem %s1, 53
    %151 = vst.msk [vmem:[%s150] ss:$232 sm:$0x3] %vm149, %v148
    %s152 = scalar_lea.vmem %s1, 4294967013
    %153 = vst.msk [vmem:[%s152] ss:$232 sm:$0xc] %vm149, %v148
    %v154 = vld [vmem:[#allocation0] sm:$0x3]
    %s155 = scalar_lea.vmem [#allocation0], 38
    %v156 = vld [vmem:[%s155] sm:$0xc]
    %vm157 = vcmask 1043458
    %v158 = vsel %vm157, %v156, %v154
    %159 = vrot.lane.b32.xlu0 %v158, 118
    %v160 = vpop.permute.xlu0 %159
    %vm161 = vcmask 39936
    %s162 = scalar_lea.vmem %s1, 2
    %163 = vst.msk [vmem:[%s162] ss:$232 sm:$0x3] %vm161, %v160
    %s164 = scalar_lea.vmem %s1, 4294966962
    %165 = vst.msk [vmem:[%s164] ss:$232 sm:$0xc] %vm161, %v160
    %s166 = scalar_lea.vmem [#allocation0], 24
    %v167 = vld [vmem:[%s166] sm:$0x3]
    %s168 = scalar_lea.vmem [#allocation0], 62
    %v169 = vld [vmem:[%s168] sm:$0xc]
    %vm170 = vcmask 1043458
    %v171 = vsel %vm170, %v169, %v167
    %172 = vrot.lane.b32.xlu0 %v171, 117
    %v173 = vpop.permute.xlu0 %172
    %vm174 = vcmask 39936
    %s175 = scalar_lea.vmem %s1, 79
    %176 = vst.msk [vmem:[%s175] ss:$232 sm:$0x3] %vm174, %v173
    %s177 = scalar_lea.vmem %s1, 4294967039
    %178 = vst.msk [vmem:[%s177] ss:$232 sm:$0xc] %vm174, %v173
    %s179 = scalar_lea.vmem [#allocation0], 9
    %s180 = smov 3
    %v181 = vld [vmem:[%s179] ss:$-1 sm:%s180]
    %s182 = scalar_lea.vmem [#allocation0], 51
    %s183 = smov 12
    %v184 = vld [vmem:[%s182] ss:$-1 sm:%s183]
    %vm185 = vcmask 1043458
    %v186 = vsel %vm185, %v184, %v181
    %187 = vrot.lane.b32.xlu0 %v186, 116
    %v188 = vpop.permute.xlu0 %187
    %vm189 = vcmask 39936
    %s190 = scalar_lea.vmem %s1, 260
    %191 = vst.msk [vmem:[%s190] ss:$-232 sm:$0x3] %vm189, %v188
    %s192 = scalar_lea.vmem %s1, 852
    %193 = vst.msk [vmem:[%s192] ss:$-232 sm:$0xc] %vm189, %v188
    %s194 = scalar_lea.vmem [#allocation0], 32
    %v195 = vld [vmem:[%s194] sm:$0x3]
    %196 = vrot.lane.b32.xlu0 %v195, 115
    %v197 = vpop.permute.xlu0 %196
    %vm198 = vcmask 39936
    %s199 = scalar_lea.vmem %s1, 105
    %200 = vst.msk [vmem:[%s199] ss:$232 sm:$0x3] %vm198, %v197
    %s201 = scalar_lea.vmem [#allocation0], 16
    %v202 = vld [vmem:[%s201] sm:$0x3]
    %s203 = scalar_lea.vmem [#allocation0], 54
    %v204 = vld [vmem:[%s203] sm:$0xc]
    %vm205 = vcmask 1043458
    %v206 = vsel %vm205, %v204, %v202
    %207 = vrot.lane.b32.xlu0 %v206, 114
    %v208 = vpop.permute.xlu0 %207
    %vm209 = vcmask 39936
    %s210 = scalar_lea.vmem %s1, 54
    %211 = vst.msk [vmem:[%s210] ss:$232 sm:$0x3] %vm209, %v208
    %s212 = scalar_lea.vmem %s1, 4294967014
    %213 = vst.msk [vmem:[%s212] ss:$232 sm:$0xc] %vm209, %v208
    %v214 = vld [vmem:[#allocation0] sm:$0x3]
    %s215 = scalar_lea.vmem [#allocation0], 38
    %v216 = vld [vmem:[%s215] sm:$0xc]
    %vm217 = vcmask 1043458
    %v218 = vsel %vm217, %v216, %v214
    %219 = vrot.lane.b32.xlu0 %v218, 113
    %v220 = vpop.permute.xlu0 %219
    %vm221 = vcmask 39936
    %s222 = scalar_lea.vmem %s1, 3
    %223 = vst.msk [vmem:[%s222] ss:$232 sm:$0x3] %vm221, %v220
    %s224 = scalar_lea.vmem %s1, 4294966963
    %225 = vst.msk [vmem:[%s224] ss:$232 sm:$0xc] %vm221, %v220
    %s226 = scalar_lea.vmem [#allocation0], 24
    %v227 = vld [vmem:[%s226] sm:$0x3]
    %s228 = scalar_lea.vmem [#allocation0], 62
    %v229 = vld [vmem:[%s228] sm:$0xc]
    %vm230 = vcmask 1043458
    %v231 = vsel %vm230, %v229, %v227
    %232 = vrot.lane.b32.xlu0 %v231, 112
    %v233 = vpop.permute.xlu0 %232
    %vm234 = vcmask 39936
    %s235 = scalar_lea.vmem %s1, 80
    %236 = vst.msk [vmem:[%s235] ss:$232 sm:$0x3] %vm234, %v233
    %s237 = scalar_lea.vmem %s1, 4294967040
    %238 = vst.msk [vmem:[%s237] ss:$232 sm:$0xc] %vm234, %v233
    %s239 = scalar_lea.vmem [#allocation0], 9
    %s240 = smov 3
    %v241 = vld [vmem:[%s239] ss:$-1 sm:%s240]
    %s242 = scalar_lea.vmem [#allocation0], 51
    %s243 = smov 12
    %v244 = vld [vmem:[%s242] ss:$-1 sm:%s243]
    %vm245 = vcmask 1043458
    %v246 = vsel %vm245, %v244, %v241
    %247 = vrot.lane.b32.xlu0 %v246, 111
    %v248 = vpop.permute.xlu0 %247
    %vm249 = vcmask 39936
    %s250 = scalar_lea.vmem %s1, 261
    %251 = vst.msk [vmem:[%s250] ss:$-232 sm:$0x3] %vm249, %v248
    %s252 = scalar_lea.vmem %s1, 853
    %253 = vst.msk [vmem:[%s252] ss:$-232 sm:$0xc] %vm249, %v248
    %s254 = scalar_lea.vmem [#allocation0], 32
    %v255 = vld [vmem:[%s254] sm:$0x3]
    %256 = vrot.lane.b32.xlu0 %v255, 110
    %v257 = vpop.permute.xlu0 %256
    %vm258 = vcmask 39936
    %s259 = scalar_lea.vmem %s1, 106
    %260 = vst.msk [vmem:[%s259] ss:$232 sm:$0x3] %vm258, %v257
    %s261 = scalar_lea.vmem [#allocation0], 16
    %v262 = vld [vmem:[%s261] sm:$0x3]
    %s263 = scalar_lea.vmem [#allocation0], 54
    %v264 = vld [vmem:[%s263] sm:$0xc]
    %vm265 = vcmask 1043458
    %v266 = vsel %vm265, %v264, %v262
    %267 = vrot.lane.b32.xlu0 %v266, 109
    %v268 = vpop.permute.xlu0 %267
    %vm269 = vcmask 39936
    %s270 = scalar_lea.vmem %s1, 55
    %271 = vst.msk [vmem:[%s270] ss:$232 sm:$0x3] %vm269, %v268
    %s272 = scalar_lea.vmem %s1, 4294967015
    %273 = vst.msk [vmem:[%s272] ss:$232 sm:$0xc] %vm269, %v268
    %v274 = vld [vmem:[#allocation0] sm:$0x3]
    %s275 = scalar_lea.vmem [#allocation0], 38
    %v276 = vld [vmem:[%s275] sm:$0xc]
    %vm277 = vcmask 1043458
    %v278 = vsel %vm277, %v276, %v274
    %279 = vrot.lane.b32.xlu0 %v278, 108
    %v280 = vpop.permute.xlu0 %279
    %vm281 = vcmask 39936
    %s282 = scalar_lea.vmem %s1, 4
    %283 = vst.msk [vmem:[%s282] ss:$232 sm:$0x3] %vm281, %v280
    %s284 = scalar_lea.vmem %s1, 4294966964
    %285 = vst.msk [vmem:[%s284] ss:$232 sm:$0xc] %vm281, %v280
    %s286 = scalar_lea.vmem [#allocation0], 24
    %v287 = vld [vmem:[%s286] sm:$0x3]
    %s288 = scalar_lea.vmem [#allocation0], 62
    %v289 = vld [vmem:[%s288] sm:$0xc]
    %vm290 = vcmask 1043458
    %v291 = vsel %vm290, %v289, %v287
    %292 = vrot.lane.b32.xlu0 %v291, 107
    %v293 = vpop.permute.xlu0 %292
    %vm294 = vcmask 39936
    %s295 = scalar_lea.vmem %s1, 81
    %296 = vst.msk [vmem:[%s295] ss:$232 sm:$0x3] %vm294, %v293
    %s297 = scalar_lea.vmem %s1, 4294967041
    %298 = vst.msk [vmem:[%s297] ss:$232 sm:$0xc] %vm294, %v293
    %s299 = scalar_lea.vmem [#allocation0], 9
    %s300 = smov 3
    %v301 = vld [vmem:[%s299] ss:$-1 sm:%s300]
    %s302 = scalar_lea.vmem [#allocation0], 51
    %s303 = smov 12
    %v304 = vld [vmem:[%s302] ss:$-1 sm:%s303]
    %vm305 = vcmask 1043458
    %v306 = vsel %vm305, %v304, %v301
    %307 = vrot.lane.b32.xlu0 %v306, 106
    %v308 = vpop.permute.xlu0 %307
    %vm309 = vcmask 39936
    %s310 = scalar_lea.vmem %s1, 262
    %311 = vst.msk [vmem:[%s310] ss:$-232 sm:$0x3] %vm309, %v308
    %s312 = scalar_lea.vmem %s1, 854
    %313 = vst.msk [vmem:[%s312] ss:$-232 sm:$0xc] %vm309, %v308
    %s314 = scalar_lea.vmem [#allocation0], 32
    %v315 = vld [vmem:[%s314] sm:$0x3]
    %316 = vrot.lane.b32.xlu0 %v315, 105
    %v317 = vpop.permute.xlu0 %316
    %vm318 = vcmask 39936
    %s319 = scalar_lea.vmem %s1, 107
    %320 = vst.msk [vmem:[%s319] ss:$232 sm:$0x3] %vm318, %v317
    %s321 = scalar_lea.vmem [#allocation0], 17
    %s322 = smov 3
    %v323 = vld [vmem:[%s321] ss:$-1 sm:%s322]
    %s324 = scalar_lea.vmem [#allocation0], 59
    %s325 = smov 12
    %v326 = vld [vmem:[%s324] ss:$-1 sm:%s325]
    %vm327 = vcmask 1043458
    %v328 = vsel %vm327, %v326, %v323
    %329 = vrot.lane.b32.xlu0 %v328, 104
    %v330 = vpop.permute.xlu0 %329
    %vm331 = vcmask 39936
    %s332 = scalar_lea.vmem %s1, 288
    %333 = vst.msk [vmem:[%s332] ss:$-232 sm:$0x3] %vm331, %v330
    %s334 = scalar_lea.vmem %s1, 880
    %335 = vst.msk [vmem:[%s334] ss:$-232 sm:$0xc] %vm331, %v330
    %v336 = vld [vmem:[#allocation0] sm:$0x3]
    %s337 = scalar_lea.vmem [#allocation0], 38
    %v338 = vld [vmem:[%s337] sm:$0xc]
    %vm339 = vcmask 1043458
    %v340 = vsel %vm339, %v338, %v336
    %341 = vrot.lane.b32.xlu0 %v340, 103
    %v342 = vpop.permute.xlu0 %341
    %vm343 = vcmask 39936
    %s344 = scalar_lea.vmem %s1, 5
    %345 = vst.msk [vmem:[%s344] ss:$232 sm:$0x3] %vm343, %v342
    %s346 = scalar_lea.vmem %s1, 4294966965
    %347 = vst.msk [vmem:[%s346] ss:$232 sm:$0xc] %vm343, %v342
    %s348 = scalar_lea.vmem [#allocation0], 24
    %v349 = vld [vmem:[%s348] sm:$0x3]
    %s350 = scalar_lea.vmem [#allocation0], 62
    %v351 = vld [vmem:[%s350] sm:$0xc]
    %vm352 = vcmask 1043458
    %v353 = vsel %vm352, %v351, %v349
    %354 = vrot.lane.b32.xlu0 %v353, 102
    %v355 = vpop.permute.xlu0 %354
    %vm356 = vcmask 39936
    %s357 = scalar_lea.vmem %s1, 82
    %358 = vst.msk [vmem:[%s357] ss:$232 sm:$0x3] %vm356, %v355
    %s359 = scalar_lea.vmem %s1, 4294967042
    %360 = vst.msk [vmem:[%s359] ss:$232 sm:$0xc] %vm356, %v355
    %s361 = scalar_lea.vmem [#allocation0], 9
    %s362 = smov 3
    %v363 = vld [vmem:[%s361] ss:$-1 sm:%s362]
    %s364 = scalar_lea.vmem [#allocation0], 51
    %s365 = smov 12
    %v366 = vld [vmem:[%s364] ss:$-1 sm:%s365]
    %vm367 = vcmask 1043458
    %v368 = vsel %vm367, %v366, %v363
    %369 = vrot.lane.b32.xlu0 %v368, 101
    %v370 = vpop.permute.xlu0 %369
    %vm371 = vcmask 39936
    %s372 = scalar_lea.vmem %s1, 263
    %373 = vst.msk [vmem:[%s372] ss:$-232 sm:$0x3] %vm371, %v370
    %s374 = scalar_lea.vmem %s1, 855
    %375 = vst.msk [vmem:[%s374] ss:$-232 sm:$0xc] %vm371, %v370
    %s376 = scalar_lea.vmem [#allocation0], 32
    %v377 = vld [vmem:[%s376] sm:$0x3]
    %378 = vrot.lane.b32.xlu0 %v377, 100
    %v379 = vpop.permute.xlu0 %378
    %vm380 = vcmask 39936
    %s381 = scalar_lea.vmem %s1, 108
    %382 = vst.msk [vmem:[%s381] ss:$232 sm:$0x3] %vm380, %v379
    %s383 = scalar_lea.vmem [#allocation0], 17
    %s384 = smov 3
    %v385 = vld [vmem:[%s383] ss:$-1 sm:%s384]
    %s386 = scalar_lea.vmem [#allocation0], 59
    %s387 = smov 12
    %v388 = vld [vmem:[%s386] ss:$-1 sm:%s387]
    %vm389 = vcmask 1043458
    %v390 = vsel %vm389, %v388, %v385
    %391 = vrot.lane.b32.xlu0 %v390, 99
    %v392 = vpop.permute.xlu0 %391
    %vm393 = vcmask 39936
    %s394 = scalar_lea.vmem %s1, 289
    %395 = vst.msk [vmem:[%s394] ss:$-232 sm:$0x3] %vm393, %v392
    %s396 = scalar_lea.vmem %s1, 881
    %397 = vst.msk [vmem:[%s396] ss:$-232 sm:$0xc] %vm393, %v392
    %v398 = vld [vmem:[#allocation0] sm:$0x3]
    %s399 = scalar_lea.vmem [#allocation0], 38
    %v400 = vld [vmem:[%s399] sm:$0xc]
    %vm401 = vcmask 1043458
    %v402 = vsel %vm401, %v400, %v398
    %403 = vrot.lane.b32.xlu0 %v402, 98
    %v404 = vpop.permute.xlu0 %403
    %vm405 = vcmask 39936
    %s406 = scalar_lea.vmem %s1, 6
    %407 = vst.msk [vmem:[%s406] ss:$232 sm:$0x3] %vm405, %v404
    %s408 = scalar_lea.vmem %s1, 4294966966
    %409 = vst.msk [vmem:[%s408] ss:$232 sm:$0xc] %vm405, %v404
    %s410 = scalar_lea.vmem [#allocation0], 24
    %v411 = vld [vmem:[%s410] sm:$0x3]
    %s412 = scalar_lea.vmem [#allocation0], 62
    %v413 = vld [vmem:[%s412] sm:$0xc]
    %vm414 = vcmask 1043458
    %v415 = vsel %vm414, %v413, %v411
    %416 = vrot.lane.b32.xlu0 %v415, 97
    %v417 = vpop.permute.xlu0 %416
    %vm418 = vcmask 39936
    %s419 = scalar_lea.vmem %s1, 83
    %420 = vst.msk [vmem:[%s419] ss:$232 sm:$0x3] %vm418, %v417
    %s421 = scalar_lea.vmem %s1, 4294967043
    %422 = vst.msk [vmem:[%s421] ss:$232 sm:$0xc] %vm418, %v417
    %s423 = scalar_lea.vmem [#allocation0], 8
    %v424 = vld [vmem:[%s423] sm:$0x3]
    %s425 = scalar_lea.vmem [#allocation0], 46
    %v426 = vld [vmem:[%s425] sm:$0xc]
    %vm427 = vcmask 1043458
    %v428 = vsel %vm427, %v426, %v424
    %429 = vrot.lane.b32.xlu0 %v428, 96
    %v430 = vpop.permute.xlu0 %429
    %vm431 = vcmask 39936
    %s432 = scalar_lea.vmem %s1, 32
    %433 = vst.msk [vmem:[%s432] ss:$232 sm:$0x3] %vm431, %v430
    %s434 = scalar_lea.vmem %s1, 4294966992
    %435 = vst.msk [vmem:[%s434] ss:$232 sm:$0xc] %vm431, %v430
    %s436 = scalar_lea.vmem [#allocation0], 32
    %v437 = vld [vmem:[%s436] sm:$0x3]
    %438 = vrot.lane.b32.xlu0 %v437, 95
    %v439 = vpop.permute.xlu0 %438
    %vm440 = vcmask 39936
    %s441 = scalar_lea.vmem %s1, 109
    %442 = vst.msk [vmem:[%s441] ss:$232 sm:$0x3] %vm440, %v439
    %s443 = scalar_lea.vmem [#allocation0], 17
    %s444 = smov 3
    %v445 = vld [vmem:[%s443] ss:$-1 sm:%s444]
    %s446 = scalar_lea.vmem [#allocation0], 59
    %s447 = smov 12
    %v448 = vld [vmem:[%s446] ss:$-1 sm:%s447]
    %vm449 = vcmask 1043458
    %v450 = vsel %vm449, %v448, %v445
    %451 = vrot.lane.b32.xlu0 %v450, 94
    %v452 = vpop.permute.xlu0 %451
    %vm453 = vcmask 39936
    %s454 = scalar_lea.vmem %s1, 290
    %455 = vst.msk [vmem:[%s454] ss:$-232 sm:$0x3] %vm453, %v452
    %s456 = scalar_lea.vmem %s1, 882
    %457 = vst.msk [vmem:[%s456] ss:$-232 sm:$0xc] %vm453, %v452
    %v458 = vld [vmem:[#allocation0] sm:$0x3]
    %s459 = scalar_lea.vmem [#allocation0], 38
    %v460 = vld [vmem:[%s459] sm:$0xc]
    %vm461 = vcmask 1043458
    %v462 = vsel %vm461, %v460, %v458
    %463 = vrot.lane.b32.xlu0 %v462, 93
    %v464 = vpop.permute.xlu0 %463
    %vm465 = vcmask 39936
    %s466 = scalar_lea.vmem %s1, 7
    %467 = vst.msk [vmem:[%s466] ss:$232 sm:$0x3] %vm465, %v464
    %s468 = scalar_lea.vmem %s1, 4294966967
    %469 = vst.msk [vmem:[%s468] ss:$232 sm:$0xc] %vm465, %v464
    %s470 = scalar_lea.vmem [#allocation0], 24
    %v471 = vld [vmem:[%s470] sm:$0x3]
    %s472 = scalar_lea.vmem [#allocation0], 62
    %v473 = vld [vmem:[%s472] sm:$0xc]
    %vm474 = vcmask 1043458
    %v475 = vsel %vm474, %v473, %v471
    %476 = vrot.lane.b32.xlu0 %v475, 92
    %v477 = vpop.permute.xlu0 %476
    %vm478 = vcmask 39936
    %s479 = scalar_lea.vmem %s1, 84
    %480 = vst.msk [vmem:[%s479] ss:$232 sm:$0x3] %vm478, %v477
    %s481 = scalar_lea.vmem %s1, 4294967044
    %482 = vst.msk [vmem:[%s481] ss:$232 sm:$0xc] %vm478, %v477
    %s483 = scalar_lea.vmem [#allocation0], 8
    %v484 = vld [vmem:[%s483] sm:$0x3]
    %s485 = scalar_lea.vmem [#allocation0], 46
    %v486 = vld [vmem:[%s485] sm:$0xc]
    %vm487 = vcmask 1043458
    %v488 = vsel %vm487, %v486, %v484
    %489 = vrot.lane.b32.xlu0 %v488, 91
    %v490 = vpop.permute.xlu0 %489
    %vm491 = vcmask 39936
    %s492 = scalar_lea.vmem %s1, 33
    %493 = vst.msk [vmem:[%s492] ss:$232 sm:$0x3] %vm491, %v490
    %s494 = scalar_lea.vmem %s1, 4294966993
    %495 = vst.msk [vmem:[%s494] ss:$232 sm:$0xc] %vm491, %v490
    %s496 = scalar_lea.vmem [#allocation0], 32
    %v497 = vld [vmem:[%s496] sm:$0x3]
    %498 = vrot.lane.b32.xlu0 %v497, 90
    %v499 = vpop.permute.xlu0 %498
    %vm500 = vcmask 39936
    %s501 = scalar_lea.vmem %s1, 110
    %502 = vst.msk [vmem:[%s501] ss:$232 sm:$0x3] %vm500, %v499
    %s503 = scalar_lea.vmem [#allocation0], 17
    %s504 = smov 3
    %v505 = vld [vmem:[%s503] ss:$-1 sm:%s504]
    %s506 = scalar_lea.vmem [#allocation0], 59
    %s507 = smov 12
    %v508 = vld [vmem:[%s506] ss:$-1 sm:%s507]
    %vm509 = vcmask 1043458
    %v510 = vsel %vm509, %v508, %v505
    %511 = vrot.lane.b32.xlu0 %v510, 89
    %v512 = vpop.permute.xlu0 %511
    %vm513 = vcmask 39936
    %s514 = scalar_lea.vmem %s1, 291
    %515 = vst.msk [vmem:[%s514] ss:$-232 sm:$0x3] %vm513, %v512
    %s516 = scalar_lea.vmem %s1, 883
    %517 = vst.msk [vmem:[%s516] ss:$-232 sm:$0xc] %vm513, %v512
    %v518 = vld [vmem:[#allocation0] sm:$0x3]
    %s519 = scalar_lea.vmem [#allocation0], 38
    %v520 = vld [vmem:[%s519] sm:$0xc]
    %vm521 = vcmask 1043458
    %v522 = vsel %vm521, %v520, %v518
    %523 = vrot.lane.b32.xlu0 %v522, 88
    %v524 = vpop.permute.xlu0 %523
    %vm525 = vcmask 39936
    %s526 = scalar_lea.vmem %s1, 8
    %527 = vst.msk [vmem:[%s526] ss:$232 sm:$0x3] %vm525, %v524
    %s528 = scalar_lea.vmem %s1, 4294966968
    %529 = vst.msk [vmem:[%s528] ss:$232 sm:$0xc] %vm525, %v524
    %s530 = scalar_lea.vmem [#allocation0], 24
    %v531 = vld [vmem:[%s530] sm:$0x3]
    %s532 = scalar_lea.vmem [#allocation0], 62
    %v533 = vld [vmem:[%s532] sm:$0xc]
    %vm534 = vcmask 1043458
    %v535 = vsel %vm534, %v533, %v531
    %536 = vrot.lane.b32.xlu0 %v535, 87
    %v537 = vpop.permute.xlu0 %536
    %vm538 = vcmask 39936
    %s539 = scalar_lea.vmem %s1, 85
    %540 = vst.msk [vmem:[%s539] ss:$232 sm:$0x3] %vm538, %v537
    %s541 = scalar_lea.vmem %s1, 4294967045
    %542 = vst.msk [vmem:[%s541] ss:$232 sm:$0xc] %vm538, %v537
    %s543 = scalar_lea.vmem [#allocation0], 8
    %v544 = vld [vmem:[%s543] sm:$0x3]
    %s545 = scalar_lea.vmem [#allocation0], 46
    %v546 = vld [vmem:[%s545] sm:$0xc]
    %vm547 = vcmask 1043458
    %v548 = vsel %vm547, %v546, %v544
    %549 = vrot.lane.b32.xlu0 %v548, 86
    %v550 = vpop.permute.xlu0 %549
    %vm551 = vcmask 39936
    %s552 = scalar_lea.vmem %s1, 34
    %553 = vst.msk [vmem:[%s552] ss:$232 sm:$0x3] %vm551, %v550
    %s554 = scalar_lea.vmem %s1, 4294966994
    %555 = vst.msk [vmem:[%s554] ss:$232 sm:$0xc] %vm551, %v550
    %s556 = scalar_lea.vmem [#allocation0], 32
    %v557 = vld [vmem:[%s556] sm:$0x3]
    %558 = vrot.lane.b32.xlu0 %v557, 85
    %v559 = vpop.permute.xlu0 %558
    %vm560 = vcmask 39936
    %s561 = scalar_lea.vmem %s1, 111
    %562 = vst.msk [vmem:[%s561] ss:$232 sm:$0x3] %vm560, %v559
    %s563 = scalar_lea.vmem [#allocation0], 17
    %s564 = smov 3
    %v565 = vld [vmem:[%s563] ss:$-1 sm:%s564]
    %s566 = scalar_lea.vmem [#allocation0], 59
    %s567 = smov 12
    %v568 = vld [vmem:[%s566] ss:$-1 sm:%s567]
    %vm569 = vcmask 1043458
    %v570 = vsel %vm569, %v568, %v565
    %571 = vrot.lane.b32.xlu0 %v570, 84
    %v572 = vpop.permute.xlu0 %571
    %vm573 = vcmask 39936
    %s574 = scalar_lea.vmem %s1, 292
    %575 = vst.msk [vmem:[%s574] ss:$-232 sm:$0x3] %vm573, %v572
    %s576 = scalar_lea.vmem %s1, 884
    %577 = vst.msk [vmem:[%s576] ss:$-232 sm:$0xc] %vm573, %v572
    %v578 = vld [vmem:[#allocation0] sm:$0x3]
    %s579 = scalar_lea.vmem [#allocation0], 38
    %v580 = vld [vmem:[%s579] sm:$0xc]
    %vm581 = vcmask 1043458
    %v582 = vsel %vm581, %v580, %v578
    %583 = vrot.lane.b32.xlu0 %v582, 83
    %v584 = vpop.permute.xlu0 %583
    %vm585 = vcmask 39936
    %s586 = scalar_lea.vmem %s1, 9
    %587 = vst.msk [vmem:[%s586] ss:$232 sm:$0x3] %vm585, %v584
    %s588 = scalar_lea.vmem %s1, 4294966969
    %589 = vst.msk [vmem:[%s588] ss:$232 sm:$0xc] %vm585, %v584
    %s590 = scalar_lea.vmem [#allocation0], 24
    %v591 = vld [vmem:[%s590] sm:$0x3]
    %s592 = scalar_lea.vmem [#allocation0], 62
    %v593 = vld [vmem:[%s592] sm:$0xc]
    %vm594 = vcmask 1043458
    %v595 = vsel %vm594, %v593, %v591
    %596 = vrot.lane.b32.xlu0 %v595, 82
    %v597 = vpop.permute.xlu0 %596
    %vm598 = vcmask 39936
    %s599 = scalar_lea.vmem %s1, 86
    %600 = vst.msk [vmem:[%s599] ss:$232 sm:$0x3] %vm598, %v597
    %s601 = scalar_lea.vmem %s1, 4294967046
    %602 = vst.msk [vmem:[%s601] ss:$232 sm:$0xc] %vm598, %v597
    %s603 = scalar_lea.vmem [#allocation0], 8
    %v604 = vld [vmem:[%s603] sm:$0x3]
    %s605 = scalar_lea.vmem [#allocation0], 46
    %v606 = vld [vmem:[%s605] sm:$0xc]
    %vm607 = vcmask 1043458
    %v608 = vsel %vm607, %v606, %v604
    %609 = vrot.lane.b32.xlu0 %v608, 81
    %v610 = vpop.permute.xlu0 %609
    %vm611 = vcmask 39936
    %s612 = scalar_lea.vmem %s1, 35
    %613 = vst.msk [vmem:[%s612] ss:$232 sm:$0x3] %vm611, %v610
    %s614 = scalar_lea.vmem %s1, 4294966995
    %615 = vst.msk [vmem:[%s614] ss:$232 sm:$0xc] %vm611, %v610
    %s616 = scalar_lea.vmem [#allocation0], 32
    %v617 = vld [vmem:[%s616] sm:$0x3]
    %618 = vrot.lane.b32.xlu0 %v617, 80
    %v619 = vpop.permute.xlu0 %618
    %vm620 = vcmask 39936
    %s621 = scalar_lea.vmem %s1, 112
    %622 = vst.msk [vmem:[%s621] ss:$232 sm:$0x3] %vm620, %v619
    %s623 = scalar_lea.vmem [#allocation0], 17
    %s624 = smov 3
    %v625 = vld [vmem:[%s623] ss:$-1 sm:%s624]
    %s626 = scalar_lea.vmem [#allocation0], 59
    %s627 = smov 12
    %v628 = vld [vmem:[%s626] ss:$-1 sm:%s627]
    %vm629 = vcmask 1043458
    %v630 = vsel %vm629, %v628, %v625
    %631 = vrot.lane.b32.xlu0 %v630, 79
    %v632 = vpop.permute.xlu0 %631
    %vm633 = vcmask 39936
    %s634 = scalar_lea.vmem %s1, 293
    %635 = vst.msk [vmem:[%s634] ss:$-232 sm:$0x3] %vm633, %v632
    %s636 = scalar_lea.vmem %s1, 885
    %637 = vst.msk [vmem:[%s636] ss:$-232 sm:$0xc] %vm633, %v632
    %v638 = vld [vmem:[#allocation0] sm:$0x3]
    %s639 = scalar_lea.vmem [#allocation0], 38
    %v640 = vld [vmem:[%s639] sm:$0xc]
    %vm641 = vcmask 1043458
    %v642 = vsel %vm641, %v640, %v638
    %643 = vrot.lane.b32.xlu0 %v642, 78
    %v644 = vpop.permute.xlu0 %643
    %vm645 = vcmask 39936
    %s646 = scalar_lea.vmem %s1, 10
    %647 = vst.msk [vmem:[%s646] ss:$232 sm:$0x3] %vm645, %v644
    %s648 = scalar_lea.vmem %s1, 4294966970
    %649 = vst.msk [vmem:[%s648] ss:$232 sm:$0xc] %vm645, %v644
    %s650 = scalar_lea.vmem [#allocation0], 24
    %v651 = vld [vmem:[%s650] sm:$0x3]
    %s652 = scalar_lea.vmem [#allocation0], 62
    %v653 = vld [vmem:[%s652] sm:$0xc]
    %vm654 = vcmask 1043458
    %v655 = vsel %vm654, %v653, %v651
    %656 = vrot.lane.b32.xlu0 %v655, 77
    %v657 = vpop.permute.xlu0 %656
    %vm658 = vcmask 39936
    %s659 = scalar_lea.vmem %s1, 87
    %660 = vst.msk [vmem:[%s659] ss:$232 sm:$0x3] %vm658, %v657
    %s661 = scalar_lea.vmem %s1, 4294967047
    %662 = vst.msk [vmem:[%s661] ss:$232 sm:$0xc] %vm658, %v657
    %s663 = scalar_lea.vmem [#allocation0], 8
    %v664 = vld [vmem:[%s663] sm:$0x3]
    %s665 = scalar_lea.vmem [#allocation0], 46
    %v666 = vld [vmem:[%s665] sm:$0xc]
    %vm667 = vcmask 1043458
    %v668 = vsel %vm667, %v666, %v664
    %669 = vrot.lane.b32.xlu0 %v668, 76
    %v670 = vpop.permute.xlu0 %669
    %vm671 = vcmask 39936
    %s672 = scalar_lea.vmem %s1, 36
    %673 = vst.msk [vmem:[%s672] ss:$232 sm:$0x3] %vm671, %v670
    %s674 = scalar_lea.vmem %s1, 4294966996
    %675 = vst.msk [vmem:[%s674] ss:$232 sm:$0xc] %vm671, %v670
    %s676 = scalar_lea.vmem [#allocation0], 32
    %v677 = vld [vmem:[%s676] sm:$0x3]
    %678 = vrot.lane.b32.xlu0 %v677, 75
    %v679 = vpop.permute.xlu0 %678
    %vm680 = vcmask 39936
    %s681 = scalar_lea.vmem %s1, 113
    %682 = vst.msk [vmem:[%s681] ss:$232 sm:$0x3] %vm680, %v679
    %s683 = scalar_lea.vmem [#allocation0], 17
    %s684 = smov 3
    %v685 = vld [vmem:[%s683] ss:$-1 sm:%s684]
    %s686 = scalar_lea.vmem [#allocation0], 59
    %s687 = smov 12
    %v688 = vld [vmem:[%s686] ss:$-1 sm:%s687]
    %vm689 = vcmask 1043458
    %v690 = vsel %vm689, %v688, %v685
    %691 = vrot.lane.b32.xlu0 %v690, 74
    %v692 = vpop.permute.xlu0 %691
    %vm693 = vcmask 39936
    %s694 = scalar_lea.vmem %s1, 294
    %695 = vst.msk [vmem:[%s694] ss:$-232 sm:$0x3] %vm693, %v692
    %s696 = scalar_lea.vmem %s1, 886
    %697 = vst.msk [vmem:[%s696] ss:$-232 sm:$0xc] %vm693, %v692
    %v698 = vld [vmem:[#allocation0] sm:$0x3]
    %s699 = scalar_lea.vmem [#allocation0], 38
    %v700 = vld [vmem:[%s699] sm:$0xc]
    %vm701 = vcmask 1043458
    %v702 = vsel %vm701, %v700, %v698
    %703 = vrot.lane.b32.xlu0 %v702, 73
    %v704 = vpop.permute.xlu0 %703
    %vm705 = vcmask 39936
    %s706 = scalar_lea.vmem %s1, 11
    %707 = vst.msk [vmem:[%s706] ss:$232 sm:$0x3] %vm705, %v704
    %s708 = scalar_lea.vmem %s1, 4294966971
    %709 = vst.msk [vmem:[%s708] ss:$232 sm:$0xc] %vm705, %v704
    %s710 = scalar_lea.vmem [#allocation0], 25
    %s711 = smov 3
    %v712 = vld [vmem:[%s710] ss:$-1 sm:%s711]
    %s713 = scalar_lea.vmem [#allocation0], 67
    %s714 = smov 12
    %v715 = vld [vmem:[%s713] ss:$-1 sm:%s714]
    %vm716 = vcmask 1043458
    %v717 = vsel %vm716, %v715, %v712
    %718 = vrot.lane.b32.xlu0 %v717, 72
    %v719 = vpop.permute.xlu0 %718
    %vm720 = vcmask 39936
    %s721 = scalar_lea.vmem %s1, 320
    %722 = vst.msk [vmem:[%s721] ss:$-232 sm:$0x3] %vm720, %v719
    %s723 = scalar_lea.vmem %s1, 912
    %724 = vst.msk [vmem:[%s723] ss:$-232 sm:$0xc] %vm720, %v719
    %s725 = scalar_lea.vmem [#allocation0], 8
    %v726 = vld [vmem:[%s725] sm:$0x3]
    %s727 = scalar_lea.vmem [#allocation0], 46
    %v728 = vld [vmem:[%s727] sm:$0xc]
    %vm729 = vcmask 1043458
    %v730 = vsel %vm729, %v728, %v726
    %731 = vrot.lane.b32.xlu0 %v730, 71
    %v732 = vpop.permute.xlu0 %731
    %vm733 = vcmask 39936
    %s734 = scalar_lea.vmem %s1, 37
    %735 = vst.msk [vmem:[%s734] ss:$232 sm:$0x3] %vm733, %v732
    %s736 = scalar_lea.vmem %s1, 4294966997
    %737 = vst.msk [vmem:[%s736] ss:$232 sm:$0xc] %vm733, %v732
    %s738 = scalar_lea.vmem [#allocation0], 32
    %v739 = vld [vmem:[%s738] sm:$0x3]
    %740 = vrot.lane.b32.xlu0 %v739, 70
    %v741 = vpop.permute.xlu0 %740
    %vm742 = vcmask 39936
    %s743 = scalar_lea.vmem %s1, 114
    %744 = vst.msk [vmem:[%s743] ss:$232 sm:$0x3] %vm742, %v741
    %s745 = scalar_lea.vmem [#allocation0], 17
    %s746 = smov 3
    %v747 = vld [vmem:[%s745] ss:$-1 sm:%s746]
    %s748 = scalar_lea.vmem [#allocation0], 59
    %s749 = smov 12
    %v750 = vld [vmem:[%s748] ss:$-1 sm:%s749]
    %vm751 = vcmask 1043458
    %v752 = vsel %vm751, %v750, %v747
    %753 = vrot.lane.b32.xlu0 %v752, 69
    %v754 = vpop.permute.xlu0 %753
    %vm755 = vcmask 39936
    %s756 = scalar_lea.vmem %s1, 295
    %757 = vst.msk [vmem:[%s756] ss:$-232 sm:$0x3] %vm755, %v754
    %s758 = scalar_lea.vmem %s1, 887
    %759 = vst.msk [vmem:[%s758] ss:$-232 sm:$0xc] %vm755, %v754
    %v760 = vld [vmem:[#allocation0] sm:$0x3]
    %s761 = scalar_lea.vmem [#allocation0], 38
    %v762 = vld [vmem:[%s761] sm:$0xc]
    %vm763 = vcmask 1043458
    %v764 = vsel %vm763, %v762, %v760
    %765 = vrot.lane.b32.xlu0 %v764, 68
    %v766 = vpop.permute.xlu0 %765
    %vm767 = vcmask 39936
    %s768 = scalar_lea.vmem %s1, 12
    %769 = vst.msk [vmem:[%s768] ss:$232 sm:$0x3] %vm767, %v766
    %s770 = scalar_lea.vmem %s1, 4294966972
    %771 = vst.msk [vmem:[%s770] ss:$232 sm:$0xc] %vm767, %v766
    %s772 = scalar_lea.vmem [#allocation0], 25
    %s773 = smov 3
    %v774 = vld [vmem:[%s772] ss:$-1 sm:%s773]
    %s775 = scalar_lea.vmem [#allocation0], 67
    %s776 = smov 12
    %v777 = vld [vmem:[%s775] ss:$-1 sm:%s776]
    %vm778 = vcmask 1043458
    %v779 = vsel %vm778, %v777, %v774
    %780 = vrot.lane.b32.xlu0 %v779, 67
    %v781 = vpop.permute.xlu0 %780
    %vm782 = vcmask 39936
    %s783 = scalar_lea.vmem %s1, 321
    %784 = vst.msk [vmem:[%s783] ss:$-232 sm:$0x3] %vm782, %v781
    %s785 = scalar_lea.vmem %s1, 913
    %786 = vst.msk [vmem:[%s785] ss:$-232 sm:$0xc] %vm782, %v781
    %s787 = scalar_lea.vmem [#allocation0], 8
    %v788 = vld [vmem:[%s787] sm:$0x3]
    %s789 = scalar_lea.vmem [#allocation0], 46
    %v790 = vld [vmem:[%s789] sm:$0xc]
    %vm791 = vcmask 1043458
    %v792 = vsel %vm791, %v790, %v788
    %793 = vrot.lane.b32.xlu0 %v792, 66
    %v794 = vpop.permute.xlu0 %793
    %vm795 = vcmask 39936
    %s796 = scalar_lea.vmem %s1, 38
    %797 = vst.msk [vmem:[%s796] ss:$232 sm:$0x3] %vm795, %v794
    %s798 = scalar_lea.vmem %s1, 4294966998
    %799 = vst.msk [vmem:[%s798] ss:$232 sm:$0xc] %vm795, %v794
    %s800 = scalar_lea.vmem [#allocation0], 32
    %v801 = vld [vmem:[%s800] sm:$0x3]
    %802 = vrot.lane.b32.xlu0 %v801, 65
    %v803 = vpop.permute.xlu0 %802
    %vm804 = vcmask 39936
    %s805 = scalar_lea.vmem %s1, 115
    %806 = vst.msk [vmem:[%s805] ss:$232 sm:$0x3] %vm804, %v803
    %s807 = scalar_lea.vmem [#allocation0], 16
    %v808 = vld [vmem:[%s807] sm:$0x3]
    %s809 = scalar_lea.vmem [#allocation0], 54
    %v810 = vld [vmem:[%s809] sm:$0xc]
    %vm811 = vcmask 1043458
    %v812 = vsel %vm811, %v810, %v808
    %813 = vrot.lane.b32.xlu0 %v812, 64
    %v814 = vpop.permute.xlu0 %813
    %vm815 = vcmask 39936
    %s816 = scalar_lea.vmem %s1, 64
    %817 = vst.msk [vmem:[%s816] ss:$232 sm:$0x3] %vm815, %v814
    %s818 = scalar_lea.vmem %s1, 4294967024
    %819 = vst.msk [vmem:[%s818] ss:$232 sm:$0xc] %vm815, %v814
    %v820 = vld [vmem:[#allocation0] sm:$0x3]
    %s821 = scalar_lea.vmem [#allocation0], 38
    %v822 = vld [vmem:[%s821] sm:$0xc]
    %vm823 = vcmask 1043458
    %v824 = vsel %vm823, %v822, %v820
    %825 = vrot.lane.b32.xlu0 %v824, 63
    %v826 = vpop.permute.xlu0 %825
    %vm827 = vcmask 39936
    %s828 = scalar_lea.vmem %s1, 13
    %829 = vst.msk [vmem:[%s828] ss:$232 sm:$0x3] %vm827, %v826
    %s830 = scalar_lea.vmem %s1, 4294966973
    %831 = vst.msk [vmem:[%s830] ss:$232 sm:$0xc] %vm827, %v826
    %s832 = scalar_lea.vmem [#allocation0], 25
    %s833 = smov 3
    %v834 = vld [vmem:[%s832] ss:$-1 sm:%s833]
    %s835 = scalar_lea.vmem [#allocation0], 67
    %s836 = smov 12
    %v837 = vld [vmem:[%s835] ss:$-1 sm:%s836]
    %vm838 = vcmask 1043458
    %v839 = vsel %vm838, %v837, %v834
    %840 = vrot.lane.b32.xlu0 %v839, 62
    %v841 = vpop.permute.xlu0 %840
    %vm842 = vcmask 39936
    %s843 = scalar_lea.vmem %s1, 322
    %844 = vst.msk [vmem:[%s843] ss:$-232 sm:$0x3] %vm842, %v841
    %s845 = scalar_lea.vmem %s1, 914
    %846 = vst.msk [vmem:[%s845] ss:$-232 sm:$0xc] %vm842, %v841
    %s847 = scalar_lea.vmem [#allocation0], 8
    %v848 = vld [vmem:[%s847] sm:$0x3]
    %s849 = scalar_lea.vmem [#allocation0], 46
    %v850 = vld [vmem:[%s849] sm:$0xc]
    %vm851 = vcmask 1043458
    %v852 = vsel %vm851, %v850, %v848
    %853 = vrot.lane.b32.xlu0 %v852, 61
    %v854 = vpop.permute.xlu0 %853
    %vm855 = vcmask 39936
    %s856 = scalar_lea.vmem %s1, 39
    %857 = vst.msk [vmem:[%s856] ss:$232 sm:$0x3] %vm855, %v854
    %s858 = scalar_lea.vmem %s1, 4294966999
    %859 = vst.msk [vmem:[%s858] ss:$232 sm:$0xc] %vm855, %v854
    %s860 = scalar_lea.vmem [#allocation0], 32
    %v861 = vld [vmem:[%s860] sm:$0x3]
    %862 = vrot.lane.b32.xlu0 %v861, 60
    %v863 = vpop.permute.xlu0 %862
    %vm864 = vcmask 39936
    %s865 = scalar_lea.vmem %s1, 116
    %866 = vst.msk [vmem:[%s865] ss:$232 sm:$0x3] %vm864, %v863
    %s867 = scalar_lea.vmem [#allocation0], 16
    %v868 = vld [vmem:[%s867] sm:$0x3]
    %s869 = scalar_lea.vmem [#allocation0], 54
    %v870 = vld [vmem:[%s869] sm:$0xc]
    %vm871 = vcmask 1043458
    %v872 = vsel %vm871, %v870, %v868
    %873 = vrot.lane.b32.xlu0 %v872, 59
    %v874 = vpop.permute.xlu0 %873
    %vm875 = vcmask 39936
    %s876 = scalar_lea.vmem %s1, 65
    %877 = vst.msk [vmem:[%s876] ss:$232 sm:$0x3] %vm875, %v874
    %s878 = scalar_lea.vmem %s1, 4294967025
    %879 = vst.msk [vmem:[%s878] ss:$232 sm:$0xc] %vm875, %v874
    %v880 = vld [vmem:[#allocation0] sm:$0x3]
    %s881 = scalar_lea.vmem [#allocation0], 38
    %v882 = vld [vmem:[%s881] sm:$0xc]
    %vm883 = vcmask 1043458
    %v884 = vsel %vm883, %v882, %v880
    %885 = vrot.lane.b32.xlu0 %v884, 58
    %v886 = vpop.permute.xlu0 %885
    %vm887 = vcmask 39936
    %s888 = scalar_lea.vmem %s1, 14
    %889 = vst.msk [vmem:[%s888] ss:$232 sm:$0x3] %vm887, %v886
    %s890 = scalar_lea.vmem %s1, 4294966974
    %891 = vst.msk [vmem:[%s890] ss:$232 sm:$0xc] %vm887, %v886
    %s892 = scalar_lea.vmem [#allocation0], 25
    %s893 = smov 3
    %v894 = vld [vmem:[%s892] ss:$-1 sm:%s893]
    %s895 = scalar_lea.vmem [#allocation0], 67
    %s896 = smov 12
    %v897 = vld [vmem:[%s895] ss:$-1 sm:%s896]
    %vm898 = vcmask 1043458
    %v899 = vsel %vm898, %v897, %v894
    %900 = vrot.lane.b32.xlu0 %v899, 57
    %v901 = vpop.permute.xlu0 %900
    %vm902 = vcmask 39936
    %s903 = scalar_lea.vmem %s1, 323
    %904 = vst.msk [vmem:[%s903] ss:$-232 sm:$0x3] %vm902, %v901
    %s905 = scalar_lea.vmem %s1, 915
    %906 = vst.msk [vmem:[%s905] ss:$-232 sm:$0xc] %vm902, %v901
    %s907 = scalar_lea.vmem [#allocation0], 8
    %v908 = vld [vmem:[%s907] sm:$0x3]
    %s909 = scalar_lea.vmem [#allocation0], 46
    %v910 = vld [vmem:[%s909] sm:$0xc]
    %vm911 = vcmask 1043458
    %v912 = vsel %vm911, %v910, %v908
    %913 = vrot.lane.b32.xlu0 %v912, 56
    %v914 = vpop.permute.xlu0 %913
    %vm915 = vcmask 39936
    %s916 = scalar_lea.vmem %s1, 40
    %917 = vst.msk [vmem:[%s916] ss:$232 sm:$0x3] %vm915, %v914
    %s918 = scalar_lea.vmem %s1, 4294967000
    %919 = vst.msk [vmem:[%s918] ss:$232 sm:$0xc] %vm915, %v914
    %s920 = scalar_lea.vmem [#allocation0], 32
    %v921 = vld [vmem:[%s920] sm:$0x3]
    %922 = vrot.lane.b32.xlu0 %v921, 55
    %v923 = vpop.permute.xlu0 %922
    %vm924 = vcmask 39936
    %s925 = scalar_lea.vmem %s1, 117
    %926 = vst.msk [vmem:[%s925] ss:$232 sm:$0x3] %vm924, %v923
    %s927 = scalar_lea.vmem [#allocation0], 16
    %v928 = vld [vmem:[%s927] sm:$0x3]
    %s929 = scalar_lea.vmem [#allocation0], 54
    %v930 = vld [vmem:[%s929] sm:$0xc]
    %vm931 = vcmask 1043458
    %v932 = vsel %vm931, %v930, %v928
    %933 = vrot.lane.b32.xlu0 %v932, 54
    %v934 = vpop.permute.xlu0 %933
    %vm935 = vcmask 39936
    %s936 = scalar_lea.vmem %s1, 66
    %937 = vst.msk [vmem:[%s936] ss:$232 sm:$0x3] %vm935, %v934
    %s938 = scalar_lea.vmem %s1, 4294967026
    %939 = vst.msk [vmem:[%s938] ss:$232 sm:$0xc] %vm935, %v934
    %v940 = vld [vmem:[#allocation0] sm:$0x3]
    %s941 = scalar_lea.vmem [#allocation0], 38
    %v942 = vld [vmem:[%s941] sm:$0xc]
    %vm943 = vcmask 1043458
    %v944 = vsel %vm943, %v942, %v940
    %945 = vrot.lane.b32.xlu0 %v944, 53
    %v946 = vpop.permute.xlu0 %945
    %vm947 = vcmask 39936
    %s948 = scalar_lea.vmem %s1, 15
    %949 = vst.msk [vmem:[%s948] ss:$232 sm:$0x3] %vm947, %v946
    %s950 = scalar_lea.vmem %s1, 4294966975
    %951 = vst.msk [vmem:[%s950] ss:$232 sm:$0xc] %vm947, %v946
    %s952 = scalar_lea.vmem [#allocation0], 25
    %s953 = smov 3
    %v954 = vld [vmem:[%s952] ss:$-1 sm:%s953]
    %s955 = scalar_lea.vmem [#allocation0], 67
    %s956 = smov 12
    %v957 = vld [vmem:[%s955] ss:$-1 sm:%s956]
    %vm958 = vcmask 1043458
    %v959 = vsel %vm958, %v957, %v954
    %960 = vrot.lane.b32.xlu0 %v959, 52
    %v961 = vpop.permute.xlu0 %960
    %vm962 = vcmask 39936
    %s963 = scalar_lea.vmem %s1, 324
    %964 = vst.msk [vmem:[%s963] ss:$-232 sm:$0x3] %vm962, %v961
    %s965 = scalar_lea.vmem %s1, 916
    %966 = vst.msk [vmem:[%s965] ss:$-232 sm:$0xc] %vm962, %v961
    %s967 = scalar_lea.vmem [#allocation0], 8
    %v968 = vld [vmem:[%s967] sm:$0x3]
    %s969 = scalar_lea.vmem [#allocation0], 46
    %v970 = vld [vmem:[%s969] sm:$0xc]
    %vm971 = vcmask 1043458
    %v972 = vsel %vm971, %v970, %v968
    %973 = vrot.lane.b32.xlu0 %v972, 51
    %v974 = vpop.permute.xlu0 %973
    %vm975 = vcmask 39936
    %s976 = scalar_lea.vmem %s1, 41
    %977 = vst.msk [vmem:[%s976] ss:$232 sm:$0x3] %vm975, %v974
    %s978 = scalar_lea.vmem %s1, 4294967001
    %979 = vst.msk [vmem:[%s978] ss:$232 sm:$0xc] %vm975, %v974
    %s980 = scalar_lea.vmem [#allocation0], 32
    %v981 = vld [vmem:[%s980] sm:$0x3]
    %982 = vrot.lane.b32.xlu0 %v981, 50
    %v983 = vpop.permute.xlu0 %982
    %vm984 = vcmask 39936
    %s985 = scalar_lea.vmem %s1, 118
    %986 = vst.msk [vmem:[%s985] ss:$232 sm:$0x3] %vm984, %v983
    %s987 = scalar_lea.vmem [#allocation0], 16
    %v988 = vld [vmem:[%s987] sm:$0x3]
    %s989 = scalar_lea.vmem [#allocation0], 54
    %v990 = vld [vmem:[%s989] sm:$0xc]
    %vm991 = vcmask 1043458
    %v992 = vsel %vm991, %v990, %v988
    %993 = vrot.lane.b32.xlu0 %v992, 49
    %v994 = vpop.permute.xlu0 %993
    %vm995 = vcmask 39936
    %s996 = scalar_lea.vmem %s1, 67
    %997 = vst.msk [vmem:[%s996] ss:$232 sm:$0x3] %vm995, %v994
    %s998 = scalar_lea.vmem %s1, 4294967027
    %999 = vst.msk [vmem:[%s998] ss:$232 sm:$0xc] %vm995, %v994
    %v1000 = vld [vmem:[#allocation0] sm:$0x3]
    %s1001 = scalar_lea.vmem [#allocation0], 38
    %v1002 = vld [vmem:[%s1001] sm:$0xc]
    %vm1003 = vcmask 1043458
    %v1004 = vsel %vm1003, %v1002, %v1000
    %1005 = vrot.lane.b32.xlu0 %v1004, 48
    %v1006 = vpop.permute.xlu0 %1005
    %vm1007 = vcmask 39936
    %s1008 = scalar_lea.vmem %s1, 16
    %1009 = vst.msk [vmem:[%s1008] ss:$232 sm:$0x3] %vm1007, %v1006
    %s1010 = scalar_lea.vmem %s1, 4294966976
    %1011 = vst.msk [vmem:[%s1010] ss:$232 sm:$0xc] %vm1007, %v1006
    %s1012 = scalar_lea.vmem [#allocation0], 25
    %s1013 = smov 3
    %v1014 = vld [vmem:[%s1012] ss:$-1 sm:%s1013]
    %s1015 = scalar_lea.vmem [#allocation0], 67
    %s1016 = smov 12
    %v1017 = vld [vmem:[%s1015] ss:$-1 sm:%s1016]
    %vm1018 = vcmask 1043458
    %v1019 = vsel %vm1018, %v1017, %v1014
    %1020 = vrot.lane.b32.xlu0 %v1019, 47
    %v1021 = vpop.permute.xlu0 %1020
    %vm1022 = vcmask 39936
    %s1023 = scalar_lea.vmem %s1, 325
    %1024 = vst.msk [vmem:[%s1023] ss:$-232 sm:$0x3] %vm1022, %v1021
    %s1025 = scalar_lea.vmem %s1, 917
    %1026 = vst.msk [vmem:[%s1025] ss:$-232 sm:$0xc] %vm1022, %v1021
    %s1027 = scalar_lea.vmem [#allocation0], 8
    %v1028 = vld [vmem:[%s1027] sm:$0x3]
    %s1029 = scalar_lea.vmem [#allocation0], 46
    %v1030 = vld [vmem:[%s1029] sm:$0xc]
    %vm1031 = vcmask 1043458
    %v1032 = vsel %vm1031, %v1030, %v1028
    %1033 = vrot.lane.b32.xlu0 %v1032, 46
    %v1034 = vpop.permute.xlu0 %1033
    %vm1035 = vcmask 39936
    %s1036 = scalar_lea.vmem %s1, 42
    %1037 = vst.msk [vmem:[%s1036] ss:$232 sm:$0x3] %vm1035, %v1034
    %s1038 = scalar_lea.vmem %s1, 4294967002
    %1039 = vst.msk [vmem:[%s1038] ss:$232 sm:$0xc] %vm1035, %v1034
    %s1040 = scalar_lea.vmem [#allocation0], 32
    %v1041 = vld [vmem:[%s1040] sm:$0x3]
    %1042 = vrot.lane.b32.xlu0 %v1041, 45
    %v1043 = vpop.permute.xlu0 %1042
    %vm1044 = vcmask 39936
    %s1045 = scalar_lea.vmem %s1, 119
    %1046 = vst.msk [vmem:[%s1045] ss:$232 sm:$0x3] %vm1044, %v1043
    %s1047 = scalar_lea.vmem [#allocation0], 16
    %v1048 = vld [vmem:[%s1047] sm:$0x3]
    %s1049 = scalar_lea.vmem [#allocation0], 54
    %v1050 = vld [vmem:[%s1049] sm:$0xc]
    %vm1051 = vcmask 1043458
    %v1052 = vsel %vm1051, %v1050, %v1048
    %1053 = vrot.lane.b32.xlu0 %v1052, 44
    %v1054 = vpop.permute.xlu0 %1053
    %vm1055 = vcmask 39936
    %s1056 = scalar_lea.vmem %s1, 68
    %1057 = vst.msk [vmem:[%s1056] ss:$232 sm:$0x3] %vm1055, %v1054
    %s1058 = scalar_lea.vmem %s1, 4294967028
    %1059 = vst.msk [vmem:[%s1058] ss:$232 sm:$0xc] %vm1055, %v1054
    %v1060 = vld [vmem:[#allocation0] sm:$0x3]
    %s1061 = scalar_lea.vmem [#allocation0], 38
    %v1062 = vld [vmem:[%s1061] sm:$0xc]
    %vm1063 = vcmask 1043458
    %v1064 = vsel %vm1063, %v1062, %v1060
    %1065 = vrot.lane.b32.xlu0 %v1064, 43
    %v1066 = vpop.permute.xlu0 %1065
    %vm1067 = vcmask 39936
    %s1068 = scalar_lea.vmem %s1, 17
    %1069 = vst.msk [vmem:[%s1068] ss:$232 sm:$0x3] %vm1067, %v1066
    %s1070 = scalar_lea.vmem %s1, 4294966977
    %1071 = vst.msk [vmem:[%s1070] ss:$232 sm:$0xc] %vm1067, %v1066
    %s1072 = scalar_lea.vmem [#allocation0], 25
    %s1073 = smov 3
    %v1074 = vld [vmem:[%s1072] ss:$-1 sm:%s1073]
    %s1075 = scalar_lea.vmem [#allocation0], 67
    %s1076 = smov 12
    %v1077 = vld [vmem:[%s1075] ss:$-1 sm:%s1076]
    %vm1078 = vcmask 1043458
    %v1079 = vsel %vm1078, %v1077, %v1074
    %1080 = vrot.lane.b32.xlu0 %v1079, 42
    %v1081 = vpop.permute.xlu0 %1080
    %vm1082 = vcmask 39936
    %s1083 = scalar_lea.vmem %s1, 326
    %1084 = vst.msk [vmem:[%s1083] ss:$-232 sm:$0x3] %vm1082, %v1081
    %s1085 = scalar_lea.vmem %s1, 918
    %1086 = vst.msk [vmem:[%s1085] ss:$-232 sm:$0xc] %vm1082, %v1081
    %s1087 = scalar_lea.vmem [#allocation0], 8
    %v1088 = vld [vmem:[%s1087] sm:$0x3]
    %s1089 = scalar_lea.vmem [#allocation0], 46
    %v1090 = vld [vmem:[%s1089] sm:$0xc]
    %vm1091 = vcmask 1043458
    %v1092 = vsel %vm1091, %v1090, %v1088
    %1093 = vrot.lane.b32.xlu0 %v1092, 41
    %v1094 = vpop.permute.xlu0 %1093
    %vm1095 = vcmask 39936
    %s1096 = scalar_lea.vmem %s1, 43
    %1097 = vst.msk [vmem:[%s1096] ss:$232 sm:$0x3] %vm1095, %v1094
    %s1098 = scalar_lea.vmem %s1, 4294967003
    %1099 = vst.msk [vmem:[%s1098] ss:$232 sm:$0xc] %vm1095, %v1094
    %s1100 = scalar_lea.vmem [#allocation0], 33
    %s1101 = smov 3
    %v1102 = vld [vmem:[%s1100] ss:$-1 sm:%s1101]
    %1103 = vrot.lane.b32.xlu0 %v1102, 40
    %v1104 = vpop.permute.xlu0 %1103
    %vm1105 = vcmask 39936
    %s1106 = scalar_lea.vmem %s1, 352
    %1107 = vst.msk [vmem:[%s1106] ss:$-232 sm:$0x3] %vm1105, %v1104
    %s1108 = scalar_lea.vmem [#allocation0], 16
    %v1109 = vld [vmem:[%s1108] sm:$0x3]
    %s1110 = scalar_lea.vmem [#allocation0], 54
    %v1111 = vld [vmem:[%s1110] sm:$0xc]
    %vm1112 = vcmask 1043458
    %v1113 = vsel %vm1112, %v1111, %v1109
    %1114 = vrot.lane.b32.xlu0 %v1113, 39
    %v1115 = vpop.permute.xlu0 %1114
    %vm1116 = vcmask 39936
    %s1117 = scalar_lea.vmem %s1, 69
    %1118 = vst.msk [vmem:[%s1117] ss:$232 sm:$0x3] %vm1116, %v1115
    %s1119 = scalar_lea.vmem %s1, 4294967029
    %1120 = vst.msk [vmem:[%s1119] ss:$232 sm:$0xc] %vm1116, %v1115
    %v1121 = vld [vmem:[#allocation0] sm:$0x3]
    %s1122 = scalar_lea.vmem [#allocation0], 38
    %v1123 = vld [vmem:[%s1122] sm:$0xc]
    %vm1124 = vcmask 1043458
    %v1125 = vsel %vm1124, %v1123, %v1121
    %1126 = vrot.lane.b32.xlu0 %v1125, 38
    %v1127 = vpop.permute.xlu0 %1126
    %vm1128 = vcmask 39936
    %s1129 = scalar_lea.vmem %s1, 18
    %1130 = vst.msk [vmem:[%s1129] ss:$232 sm:$0x3] %vm1128, %v1127
    %s1131 = scalar_lea.vmem %s1, 4294966978
    %1132 = vst.msk [vmem:[%s1131] ss:$232 sm:$0xc] %vm1128, %v1127
    %s1133 = scalar_lea.vmem [#allocation0], 25
    %s1134 = smov 3
    %v1135 = vld [vmem:[%s1133] ss:$-1 sm:%s1134]
    %s1136 = scalar_lea.vmem [#allocation0], 67
    %s1137 = smov 12
    %v1138 = vld [vmem:[%s1136] ss:$-1 sm:%s1137]
    %vm1139 = vcmask 1043458
    %v1140 = vsel %vm1139, %v1138, %v1135
    %1141 = vrot.lane.b32.xlu0 %v1140, 37
    %v1142 = vpop.permute.xlu0 %1141
    %vm1143 = vcmask 39936
    %s1144 = scalar_lea.vmem %s1, 327
    %1145 = vst.msk [vmem:[%s1144] ss:$-232 sm:$0x3] %vm1143, %v1142
    %s1146 = scalar_lea.vmem %s1, 919
    %1147 = vst.msk [vmem:[%s1146] ss:$-232 sm:$0xc] %vm1143, %v1142
    %s1148 = scalar_lea.vmem [#allocation0], 8
    %v1149 = vld [vmem:[%s1148] sm:$0x3]
    %s1150 = scalar_lea.vmem [#allocation0], 46
    %v1151 = vld [vmem:[%s1150] sm:$0xc]
    %vm1152 = vcmask 1043458
    %v1153 = vsel %vm1152, %v1151, %v1149
    %1154 = vrot.lane.b32.xlu0 %v1153, 36
    %v1155 = vpop.permute.xlu0 %1154
    %vm1156 = vcmask 39936
    %s1157 = scalar_lea.vmem %s1, 44
    %1158 = vst.msk [vmem:[%s1157] ss:$232 sm:$0x3] %vm1156, %v1155
    %s1159 = scalar_lea.vmem %s1, 4294967004
    %1160 = vst.msk [vmem:[%s1159] ss:$232 sm:$0xc] %vm1156, %v1155
    %s1161 = scalar_lea.vmem [#allocation0], 33
    %s1162 = smov 3
    %v1163 = vld [vmem:[%s1161] ss:$-1 sm:%s1162]
    %1164 = vrot.lane.b32.xlu0 %v1163, 35
    %v1165 = vpop.permute.xlu0 %1164
    %vm1166 = vcmask 39936
    %s1167 = scalar_lea.vmem %s1, 353
    %1168 = vst.msk [vmem:[%s1167] ss:$-232 sm:$0x3] %vm1166, %v1165
    %s1169 = scalar_lea.vmem [#allocation0], 16
    %v1170 = vld [vmem:[%s1169] sm:$0x3]
    %s1171 = scalar_lea.vmem [#allocation0], 54
    %v1172 = vld [vmem:[%s1171] sm:$0xc]
    %vm1173 = vcmask 1043458
    %v1174 = vsel %vm1173, %v1172, %v1170
    %1175 = vrot.lane.b32.xlu0 %v1174, 34
    %v1176 = vpop.permute.xlu0 %1175
    %vm1177 = vcmask 39936
    %s1178 = scalar_lea.vmem %s1, 70
    %1179 = vst.msk [vmem:[%s1178] ss:$232 sm:$0x3] %vm1177, %v1176
    %s1180 = scalar_lea.vmem %s1, 4294967030
    %1181 = vst.msk [vmem:[%s1180] ss:$232 sm:$0xc] %vm1177, %v1176
    %v1182 = vld [vmem:[#allocation0] sm:$0x3]
    %s1183 = scalar_lea.vmem [#allocation0], 38
    %v1184 = vld [vmem:[%s1183] sm:$0xc]
    %vm1185 = vcmask 1043458
    %v1186 = vsel %vm1185, %v1184, %v1182
    %1187 = vrot.lane.b32.xlu0 %v1186, 33
    %v1188 = vpop.permute.xlu0 %1187
    %vm1189 = vcmask 39936
    %s1190 = scalar_lea.vmem %s1, 19
    %1191 = vst.msk [vmem:[%s1190] ss:$232 sm:$0x3] %vm1189, %v1188
    %s1192 = scalar_lea.vmem %s1, 4294966979
    %1193 = vst.msk [vmem:[%s1192] ss:$232 sm:$0xc] %vm1189, %v1188
    %s1194 = scalar_lea.vmem [#allocation0], 24
    %v1195 = vld [vmem:[%s1194] sm:$0x3]
    %s1196 = scalar_lea.vmem [#allocation0], 62
    %v1197 = vld [vmem:[%s1196] sm:$0xc]
    %vm1198 = vcmask 1043458
    %v1199 = vsel %vm1198, %v1197, %v1195
    %1200 = vrot.lane.b32.xlu0 %v1199, 32
    %v1201 = vpop.permute.xlu0 %1200
    %vm1202 = vcmask 39936
    %s1203 = scalar_lea.vmem %s1, 96
    %1204 = vst.msk [vmem:[%s1203] ss:$232 sm:$0x3] %vm1202, %v1201
    %s1205 = scalar_lea.vmem %s1, 4294967056
    %1206 = vst.msk [vmem:[%s1205] ss:$232 sm:$0xc] %vm1202, %v1201
    %s1207 = scalar_lea.vmem [#allocation0], 8
    %v1208 = vld [vmem:[%s1207] sm:$0x3]
    %s1209 = scalar_lea.vmem [#allocation0], 46
    %v1210 = vld [vmem:[%s1209] sm:$0xc]
    %vm1211 = vcmask 1043458
    %v1212 = vsel %vm1211, %v1210, %v1208
    %1213 = vrot.lane.b32.xlu0 %v1212, 31
    %v1214 = vpop.permute.xlu0 %1213
    %vm1215 = vcmask 39936
    %s1216 = scalar_lea.vmem %s1, 45
    %1217 = vst.msk [vmem:[%s1216] ss:$232 sm:$0x3] %vm1215, %v1214
    %s1218 = scalar_lea.vmem %s1, 4294967005
    %1219 = vst.msk [vmem:[%s1218] ss:$232 sm:$0xc] %vm1215, %v1214
    %s1220 = scalar_lea.vmem [#allocation0], 33
    %s1221 = smov 3
    %v1222 = vld [vmem:[%s1220] ss:$-1 sm:%s1221]
    %1223 = vrot.lane.b32.xlu0 %v1222, 30
    %v1224 = vpop.permute.xlu0 %1223
    %vm1225 = vcmask 39936
    %s1226 = scalar_lea.vmem %s1, 354
    %1227 = vst.msk [vmem:[%s1226] ss:$-232 sm:$0x3] %vm1225, %v1224
    %s1228 = scalar_lea.vmem [#allocation0], 16
    %v1229 = vld [vmem:[%s1228] sm:$0x3]
    %s1230 = scalar_lea.vmem [#allocation0], 54
    %v1231 = vld [vmem:[%s1230] sm:$0xc]
    %vm1232 = vcmask 1043458
    %v1233 = vsel %vm1232, %v1231, %v1229
    %1234 = vrot.lane.b32.xlu0 %v1233, 29
    %v1235 = vpop.permute.xlu0 %1234
    %vm1236 = vcmask 39936
    %s1237 = scalar_lea.vmem %s1, 71
    %1238 = vst.msk [vmem:[%s1237] ss:$232 sm:$0x3] %vm1236, %v1235
    %s1239 = scalar_lea.vmem %s1, 4294967031
    %1240 = vst.msk [vmem:[%s1239] ss:$232 sm:$0xc] %vm1236, %v1235
    %v1241 = vld [vmem:[#allocation0] sm:$0x3]
    %s1242 = scalar_lea.vmem [#allocation0], 38
    %v1243 = vld [vmem:[%s1242] sm:$0xc]
    %vm1244 = vcmask 1043458
    %v1245 = vsel %vm1244, %v1243, %v1241
    %1246 = vrot.lane.b32.xlu0 %v1245, 28
    %v1247 = vpop.permute.xlu0 %1246
    %vm1248 = vcmask 39936
    %s1249 = scalar_lea.vmem %s1, 20
    %1250 = vst.msk [vmem:[%s1249] ss:$232 sm:$0x3] %vm1248, %v1247
    %s1251 = scalar_lea.vmem %s1, 4294966980
    %1252 = vst.msk [vmem:[%s1251] ss:$232 sm:$0xc] %vm1248, %v1247
    %s1253 = scalar_lea.vmem [#allocation0], 24
    %v1254 = vld [vmem:[%s1253] sm:$0x3]
    %s1255 = scalar_lea.vmem [#allocation0], 62
    %v1256 = vld [vmem:[%s1255] sm:$0xc]
    %vm1257 = vcmask 1043458
    %v1258 = vsel %vm1257, %v1256, %v1254
    %1259 = vrot.lane.b32.xlu0 %v1258, 27
    %v1260 = vpop.permute.xlu0 %1259
    %vm1261 = vcmask 39936
    %s1262 = scalar_lea.vmem %s1, 97
    %1263 = vst.msk [vmem:[%s1262] ss:$232 sm:$0x3] %vm1261, %v1260
    %s1264 = scalar_lea.vmem %s1, 4294967057
    %1265 = vst.msk [vmem:[%s1264] ss:$232 sm:$0xc] %vm1261, %v1260
    %s1266 = scalar_lea.vmem [#allocation0], 8
    %v1267 = vld [vmem:[%s1266] sm:$0x3]
    %s1268 = scalar_lea.vmem [#allocation0], 46
    %v1269 = vld [vmem:[%s1268] sm:$0xc]
    %vm1270 = vcmask 1043458
    %v1271 = vsel %vm1270, %v1269, %v1267
    %1272 = vrot.lane.b32.xlu0 %v1271, 26
    %v1273 = vpop.permute.xlu0 %1272
    %vm1274 = vcmask 39936
    %s1275 = scalar_lea.vmem %s1, 46
    %1276 = vst.msk [vmem:[%s1275] ss:$232 sm:$0x3] %vm1274, %v1273
    %s1277 = scalar_lea.vmem %s1, 4294967006
    %1278 = vst.msk [vmem:[%s1277] ss:$232 sm:$0xc] %vm1274, %v1273
    %s1279 = scalar_lea.vmem [#allocation0], 33
    %s1280 = smov 3
    %v1281 = vld [vmem:[%s1279] ss:$-1 sm:%s1280]
    %1282 = vrot.lane.b32.xlu0 %v1281, 25
    %v1283 = vpop.permute.xlu0 %1282
    %vm1284 = vcmask 39936
    %s1285 = scalar_lea.vmem %s1, 355
    %1286 = vst.msk [vmem:[%s1285] ss:$-232 sm:$0x3] %vm1284, %v1283
    %s1287 = scalar_lea.vmem [#allocation0], 16
    %v1288 = vld [vmem:[%s1287] sm:$0x3]
    %s1289 = scalar_lea.vmem [#allocation0], 54
    %v1290 = vld [vmem:[%s1289] sm:$0xc]
    %vm1291 = vcmask 1043458
    %v1292 = vsel %vm1291, %v1290, %v1288
    %1293 = vrot.lane.b32.xlu0 %v1292, 24
    %v1294 = vpop.permute.xlu0 %1293
    %vm1295 = vcmask 39936
    %s1296 = scalar_lea.vmem %s1, 72
    %1297 = vst.msk [vmem:[%s1296] ss:$232 sm:$0x3] %vm1295, %v1294
    %s1298 = scalar_lea.vmem %s1, 4294967032
    %1299 = vst.msk [vmem:[%s1298] ss:$232 sm:$0xc] %vm1295, %v1294
    %v1300 = vld [vmem:[#allocation0] sm:$0x3]
    %s1301 = scalar_lea.vmem [#allocation0], 38
    %v1302 = vld [vmem:[%s1301] sm:$0xc]
    %vm1303 = vcmask 1043458
    %v1304 = vsel %vm1303, %v1302, %v1300
    %1305 = vrot.lane.b32.xlu0 %v1304, 23
    %v1306 = vpop.permute.xlu0 %1305
    %vm1307 = vcmask 39936
    %s1308 = scalar_lea.vmem %s1, 21
    %1309 = vst.msk [vmem:[%s1308] ss:$232 sm:$0x3] %vm1307, %v1306
    %s1310 = scalar_lea.vmem %s1, 4294966981
    %1311 = vst.msk [vmem:[%s1310] ss:$232 sm:$0xc] %vm1307, %v1306
    %s1312 = scalar_lea.vmem [#allocation0], 24
    %v1313 = vld [vmem:[%s1312] sm:$0x3]
    %s1314 = scalar_lea.vmem [#allocation0], 62
    %v1315 = vld [vmem:[%s1314] sm:$0xc]
    %vm1316 = vcmask 1043458
    %v1317 = vsel %vm1316, %v1315, %v1313
    %1318 = vrot.lane.b32.xlu0 %v1317, 22
    %v1319 = vpop.permute.xlu0 %1318
    %vm1320 = vcmask 39936
    %s1321 = scalar_lea.vmem %s1, 98
    %1322 = vst.msk [vmem:[%s1321] ss:$232 sm:$0x3] %vm1320, %v1319
    %s1323 = scalar_lea.vmem %s1, 4294967058
    %1324 = vst.msk [vmem:[%s1323] ss:$232 sm:$0xc] %vm1320, %v1319
    %s1325 = scalar_lea.vmem [#allocation0], 8
    %v1326 = vld [vmem:[%s1325] sm:$0x3]
    %s1327 = scalar_lea.vmem [#allocation0], 46
    %v1328 = vld [vmem:[%s1327] sm:$0xc]
    %vm1329 = vcmask 1043458
    %v1330 = vsel %vm1329, %v1328, %v1326
    %1331 = vrot.lane.b32.xlu0 %v1330, 21
    %v1332 = vpop.permute.xlu0 %1331
    %vm1333 = vcmask 39936
    %s1334 = scalar_lea.vmem %s1, 47
    %1335 = vst.msk [vmem:[%s1334] ss:$232 sm:$0x3] %vm1333, %v1332
    %s1336 = scalar_lea.vmem %s1, 4294967007
    %1337 = vst.msk [vmem:[%s1336] ss:$232 sm:$0xc] %vm1333, %v1332
    %s1338 = scalar_lea.vmem [#allocation0], 33
    %s1339 = smov 3
    %v1340 = vld [vmem:[%s1338] ss:$-1 sm:%s1339]
    %1341 = vrot.lane.b32.xlu0 %v1340, 20
    %v1342 = vpop.permute.xlu0 %1341
    %vm1343 = vcmask 39936
    %s1344 = scalar_lea.vmem %s1, 356
    %1345 = vst.msk [vmem:[%s1344] ss:$-232 sm:$0x3] %vm1343, %v1342
    %s1346 = scalar_lea.vmem [#allocation0], 16
    %v1347 = vld [vmem:[%s1346] sm:$0x3]
    %s1348 = scalar_lea.vmem [#allocation0], 54
    %v1349 = vld [vmem:[%s1348] sm:$0xc]
    %vm1350 = vcmask 1043458
    %v1351 = vsel %vm1350, %v1349, %v1347
    %1352 = vrot.lane.b32.xlu0 %v1351, 19
    %v1353 = vpop.permute.xlu0 %1352
    %vm1354 = vcmask 39936
    %s1355 = scalar_lea.vmem %s1, 73
    %1356 = vst.msk [vmem:[%s1355] ss:$232 sm:$0x3] %vm1354, %v1353
    %s1357 = scalar_lea.vmem %s1, 4294967033
    %1358 = vst.msk [vmem:[%s1357] ss:$232 sm:$0xc] %vm1354, %v1353
    %v1359 = vld [vmem:[#allocation0] sm:$0x3]
    %s1360 = scalar_lea.vmem [#allocation0], 38
    %v1361 = vld [vmem:[%s1360] sm:$0xc]
    %vm1362 = vcmask 1043458
    %v1363 = vsel %vm1362, %v1361, %v1359
    %1364 = vrot.lane.b32.xlu0 %v1363, 18
    %v1365 = vpop.permute.xlu0 %1364
    %vm1366 = vcmask 39936
    %s1367 = scalar_lea.vmem %s1, 22
    %1368 = vst.msk [vmem:[%s1367] ss:$232 sm:$0x3] %vm1366, %v1365
    %s1369 = scalar_lea.vmem %s1, 4294966982
    %1370 = vst.msk [vmem:[%s1369] ss:$232 sm:$0xc] %vm1366, %v1365
    %s1371 = scalar_lea.vmem [#allocation0], 24
    %v1372 = vld [vmem:[%s1371] sm:$0x3]
    %s1373 = scalar_lea.vmem [#allocation0], 62
    %v1374 = vld [vmem:[%s1373] sm:$0xc]
    %vm1375 = vcmask 1043458
    %v1376 = vsel %vm1375, %v1374, %v1372
    %1377 = vrot.lane.b32.xlu0 %v1376, 17
    %v1378 = vpop.permute.xlu0 %1377
    %vm1379 = vcmask 39936
    %s1380 = scalar_lea.vmem %s1, 99
    %1381 = vst.msk [vmem:[%s1380] ss:$232 sm:$0x3] %vm1379, %v1378
    %s1382 = scalar_lea.vmem %s1, 4294967059
    %1383 = vst.msk [vmem:[%s1382] ss:$232 sm:$0xc] %vm1379, %v1378
    %s1384 = scalar_lea.vmem [#allocation0], 8
    %v1385 = vld [vmem:[%s1384] sm:$0x3]
    %s1386 = scalar_lea.vmem [#allocation0], 46
    %v1387 = vld [vmem:[%s1386] sm:$0xc]
    %vm1388 = vcmask 1043458
    %v1389 = vsel %vm1388, %v1387, %v1385
    %1390 = vrot.lane.b32.xlu0 %v1389, 16
    %v1391 = vpop.permute.xlu0 %1390
    %vm1392 = vcmask 39936
    %s1393 = scalar_lea.vmem %s1, 48
    %1394 = vst.msk [vmem:[%s1393] ss:$232 sm:$0x3] %vm1392, %v1391
    %s1395 = scalar_lea.vmem %s1, 4294967008
    %1396 = vst.msk [vmem:[%s1395] ss:$232 sm:$0xc] %vm1392, %v1391
    %s1397 = scalar_lea.vmem [#allocation0], 33
    %s1398 = smov 3
    %v1399 = vld [vmem:[%s1397] ss:$-1 sm:%s1398]
    %1400 = vrot.lane.b32.xlu0 %v1399, 15
    %v1401 = vpop.permute.xlu0 %1400
    %vm1402 = vcmask 39936
    %s1403 = scalar_lea.vmem %s1, 357
    %1404 = vst.msk [vmem:[%s1403] ss:$-232 sm:$0x3] %vm1402, %v1401
    %s1405 = scalar_lea.vmem [#allocation0], 16
    %v1406 = vld [vmem:[%s1405] sm:$0x3]
    %s1407 = scalar_lea.vmem [#allocation0], 54
    %v1408 = vld [vmem:[%s1407] sm:$0xc]
    %vm1409 = vcmask 1043458
    %v1410 = vsel %vm1409, %v1408, %v1406
    %1411 = vrot.lane.b32.xlu0 %v1410, 14
    %v1412 = vpop.permute.xlu0 %1411
    %vm1413 = vcmask 39936
    %s1414 = scalar_lea.vmem %s1, 74
    %1415 = vst.msk [vmem:[%s1414] ss:$232 sm:$0x3] %vm1413, %v1412
    %s1416 = scalar_lea.vmem %s1, 4294967034
    %1417 = vst.msk [vmem:[%s1416] ss:$232 sm:$0xc] %vm1413, %v1412
    %v1418 = vld [vmem:[#allocation0] sm:$0x3]
    %s1419 = scalar_lea.vmem [#allocation0], 38
    %v1420 = vld [vmem:[%s1419] sm:$0xc]
    %vm1421 = vcmask 1043458
    %v1422 = vsel %vm1421, %v1420, %v1418
    %1423 = vrot.lane.b32.xlu0 %v1422, 13
    %v1424 = vpop.permute.xlu0 %1423
    %vm1425 = vcmask 39936
    %s1426 = scalar_lea.vmem %s1, 23
    %1427 = vst.msk [vmem:[%s1426] ss:$232 sm:$0x3] %vm1425, %v1424
    %s1428 = scalar_lea.vmem %s1, 4294966983
    %1429 = vst.msk [vmem:[%s1428] ss:$232 sm:$0xc] %vm1425, %v1424
    %s1430 = scalar_lea.vmem [#allocation0], 24
    %v1431 = vld [vmem:[%s1430] sm:$0x3]
    %s1432 = scalar_lea.vmem [#allocation0], 62
    %v1433 = vld [vmem:[%s1432] sm:$0xc]
    %vm1434 = vcmask 1043458
    %v1435 = vsel %vm1434, %v1433, %v1431
    %1436 = vrot.lane.b32.xlu0 %v1435, 12
    %v1437 = vpop.permute.xlu0 %1436
    %vm1438 = vcmask 39936
    %s1439 = scalar_lea.vmem %s1, 100
    %1440 = vst.msk [vmem:[%s1439] ss:$232 sm:$0x3] %vm1438, %v1437
    %s1441 = scalar_lea.vmem %s1, 4294967060
    %1442 = vst.msk [vmem:[%s1441] ss:$232 sm:$0xc] %vm1438, %v1437
    %s1443 = scalar_lea.vmem [#allocation0], 8
    %v1444 = vld [vmem:[%s1443] sm:$0x3]
    %s1445 = scalar_lea.vmem [#allocation0], 46
    %v1446 = vld [vmem:[%s1445] sm:$0xc]
    %vm1447 = vcmask 1043458
    %v1448 = vsel %vm1447, %v1446, %v1444
    %1449 = vrot.lane.b32.xlu0 %v1448, 11
    %v1450 = vpop.permute.xlu0 %1449
    %vm1451 = vcmask 39936
    %s1452 = scalar_lea.vmem %s1, 49
    %1453 = vst.msk [vmem:[%s1452] ss:$232 sm:$0x3] %vm1451, %v1450
    %s1454 = scalar_lea.vmem %s1, 4294967009
    %1455 = vst.msk [vmem:[%s1454] ss:$232 sm:$0xc] %vm1451, %v1450
    %s1456 = scalar_lea.vmem [#allocation0], 33
    %s1457 = smov 3
    %v1458 = vld [vmem:[%s1456] ss:$-1 sm:%s1457]
    %1459 = vrot.lane.b32.xlu0 %v1458, 10
    %v1460 = vpop.permute.xlu0 %1459
    %vm1461 = vcmask 39936
    %s1462 = scalar_lea.vmem %s1, 358
    %1463 = vst.msk [vmem:[%s1462] ss:$-232 sm:$0x3] %vm1461, %v1460
    %s1464 = scalar_lea.vmem [#allocation0], 16
    %v1465 = vld [vmem:[%s1464] sm:$0x3]
    %s1466 = scalar_lea.vmem [#allocation0], 54
    %v1467 = vld [vmem:[%s1466] sm:$0xc]
    %vm1468 = vcmask 1043458
    %v1469 = vsel %vm1468, %v1467, %v1465
    %1470 = vrot.lane.b32.xlu0 %v1469, 9
    %v1471 = vpop.permute.xlu0 %1470
    %vm1472 = vcmask 39936
    %s1473 = scalar_lea.vmem %s1, 75
    %1474 = vst.msk [vmem:[%s1473] ss:$232 sm:$0x3] %vm1472, %v1471
    %s1475 = scalar_lea.vmem %s1, 4294967035
    %1476 = vst.msk [vmem:[%s1475] ss:$232 sm:$0xc] %vm1472, %v1471
    %s1477 = scalar_lea.vmem [#allocation0], 1
    %s1478 = smov 3
    %v1479 = vld [vmem:[%s1477] ss:$-1 sm:%s1478]
    %s1480 = scalar_lea.vmem [#allocation0], 43
    %s1481 = smov 12
    %v1482 = vld [vmem:[%s1480] ss:$-1 sm:%s1481]
    %vm1483 = vcmask 1043458
    %v1484 = vsel %vm1483, %v1482, %v1479
    %1485 = vrot.lane.b32.xlu0 %v1484, 8
    %v1486 = vpop.permute.xlu0 %1485
    %vm1487 = vcmask 39936
    %s1488 = scalar_lea.vmem %s1, 256
    %1489 = vst.msk [vmem:[%s1488] ss:$-232 sm:$0x3] %vm1487, %v1486
    %s1490 = scalar_lea.vmem %s1, 848
    %1491 = vst.msk [vmem:[%s1490] ss:$-232 sm:$0xc] %vm1487, %v1486
    %s1492 = scalar_lea.vmem [#allocation0], 24
    %v1493 = vld [vmem:[%s1492] sm:$0x3]
    %1494 = vrot.lane.b32.xlu0 %v1493, 7
    %v1495 = vpop.permute.xlu0 %1494
    %vm1496 = vcmask 39936
    %s1497 = scalar_lea.vmem %s1, 101
    %1498 = vst.msk [vmem:[%s1497] ss:$232 sm:$0x3] %vm1496, %v1495
    %s1499 = scalar_lea.vmem [#allocation0], 8
    %v1500 = vld [vmem:[%s1499] sm:$0x3]
    %s1501 = scalar_lea.vmem [#allocation0], 46
    %v1502 = vld [vmem:[%s1501] sm:$0xc]
    %vm1503 = vcmask 1043458
    %v1504 = vsel %vm1503, %v1502, %v1500
    %1505 = vrot.lane.b32.xlu0 %v1504, 6
    %v1506 = vpop.permute.xlu0 %1505
    %vm1507 = vcmask 39936
    %s1508 = scalar_lea.vmem %s1, 50
    %1509 = vst.msk [vmem:[%s1508] ss:$232 sm:$0x3] %vm1507, %v1506
    %s1510 = scalar_lea.vmem %s1, 4294967010
    %1511 = vst.msk [vmem:[%s1510] ss:$232 sm:$0xc] %vm1507, %v1506
    %s1512 = scalar_lea.vmem [#allocation0], 33
    %s1513 = smov 3
    %v1514 = vld [vmem:[%s1512] ss:$-1 sm:%s1513]
    %1515 = vrot.lane.b32.xlu0 %v1514, 5
    %v1516 = vpop.permute.xlu0 %1515
    %vm1517 = vcmask 39936
    %s1518 = scalar_lea.vmem %s1, 359
    %1519 = vst.msk [vmem:[%s1518] ss:$-232 sm:$0x3] %vm1517, %v1516
    %s1520 = scalar_lea.vmem [#allocation0], 16
    %v1521 = vld [vmem:[%s1520] sm:$0x3]
    %s1522 = scalar_lea.vmem [#allocation0], 54
    %v1523 = vld [vmem:[%s1522] sm:$0xc]
    %vm1524 = vcmask 1043458
    %v1525 = vsel %vm1524, %v1523, %v1521
    %s1526 = scalar_lea.vmem [#allocation0], 24
    %v1527 = vld [vmem:[%s1526] sm:$0x3]
    %s1528 = scalar_lea.vmem [#allocation0], 62
    %v1529 = vld [vmem:[%s1528] sm:$0xc]
    %vm1530 = vcmask 1043458
    %v1531 = vsel %vm1530, %v1529, %v1527
    %vm1532 = vcmask 1014784
    %v1533 = vsel %vm1532, %v1531, %v1525
    %1534 = vrot.lane.b32.xlu0 %v1533, 4
    %v1535 = vpop.permute.xlu0 %1534
    %vm1536 = vcmask 31744
    %s1537 = scalar_lea.vmem %s1, 76
    %1538 = vst.msk [vmem:[%s1537] ss:$232 sm:$0x3] %vm1536, %v1535
    %s1539 = scalar_lea.vmem %s1, 4294967036
    %1540 = vst.msk [vmem:[%s1539] ss:$232 sm:$0xc] %vm1536, %v1535
    %vm1541 = vcmask 39968
    %s1542 = scalar_lea.vmem %s1, 76
    %1543 = vst.msk [vmem:[%s1542] ss:$232 sm:$0x3] %vm1541, %v1535
    %s1544 = scalar_lea.vmem %s1, 4294967036
    %1545 = vst.msk [vmem:[%s1544] ss:$232 sm:$0xc] %vm1541, %v1535
    %s1546 = scalar_lea.vmem [#allocation0], 1
    %s1547 = smov 3
    %v1548 = vld [vmem:[%s1546] ss:$-1 sm:%s1547]
    %s1549 = scalar_lea.vmem [#allocation0], 43
    %s1550 = smov 12
    %v1551 = vld [vmem:[%s1549] ss:$-1 sm:%s1550]
    %vm1552 = vcmask 1043458
    %v1553 = vsel %vm1552, %v1551, %v1548
    %s1554 = scalar_lea.vmem [#allocation0], 9
    %s1555 = smov 3
    %v1556 = vld [vmem:[%s1554] ss:$-1 sm:%s1555]
    %s1557 = scalar_lea.vmem [#allocation0], 51
    %s1558 = smov 12
    %v1559 = vld [vmem:[%s1557] ss:$-1 sm:%s1558]
    %vm1560 = vcmask 1043458
    %v1561 = vsel %vm1560, %v1559, %v1556
    %vm1562 = vcmask 1022976
    %v1563 = vsel %vm1562, %v1561, %v1553
    %1564 = vrot.lane.b32.xlu0 %v1563, 3
    %v1565 = vpop.permute.xlu0 %1564
    %vm1566 = vcmask 23552
    %s1567 = scalar_lea.vmem %s1, 257
    %1568 = vst.msk [vmem:[%s1567] ss:$-232 sm:$0x3] %vm1566, %v1565
    %s1569 = scalar_lea.vmem %s1, 849
    %1570 = vst.msk [vmem:[%s1569] ss:$-232 sm:$0xc] %vm1566, %v1565
    %vm1571 = vcmask 39960
    %s1572 = scalar_lea.vmem %s1, 257
    %1573 = vst.msk [vmem:[%s1572] ss:$-232 sm:$0x3] %vm1571, %v1565
    %s1574 = scalar_lea.vmem %s1, 849
    %1575 = vst.msk [vmem:[%s1574] ss:$-232 sm:$0xc] %vm1571, %v1565
    %s1576 = scalar_lea.vmem [#allocation0], 24
    %v1577 = vld [vmem:[%s1576] sm:$0x3]
    %s1578 = scalar_lea.vmem [#allocation0], 32
    %v1579 = vld [vmem:[%s1578] sm:$0x3]
    %vm1580 = vcmask 1031168
    %v1581 = vsel %vm1580, %v1579, %v1577
    %1582 = vrot.lane.b32.xlu0 %v1581, 2
    %v1583 = vpop.permute.xlu0 %1582
    %vm1584 = vcmask 15360
    %s1585 = scalar_lea.vmem %s1, 102
    %1586 = vst.msk [vmem:[%s1585] ss:$232 sm:$0x3] %vm1584, %v1583
    %vm1587 = vcmask 39952
    %s1588 = scalar_lea.vmem %s1, 102
    %1589 = vst.msk [vmem:[%s1588] ss:$232 sm:$0x3] %vm1587, %v1583
    %s1590 = scalar_lea.vmem [#allocation0], 8
    %v1591 = vld [vmem:[%s1590] sm:$0x3]
    %s1592 = scalar_lea.vmem [#allocation0], 46
    %v1593 = vld [vmem:[%s1592] sm:$0xc]
    %vm1594 = vcmask 1043458
    %v1595 = vsel %vm1594, %v1593, %v1591
    %s1596 = scalar_lea.vmem [#allocation0], 16
    %v1597 = vld [vmem:[%s1596] sm:$0x3]
    %s1598 = scalar_lea.vmem [#allocation0], 54
    %v1599 = vld [vmem:[%s1598] sm:$0xc]
    %vm1600 = vcmask 1043458
    %v1601 = vsel %vm1600, %v1599, %v1597
    %vm1602 = vcmask 1039360
    %v1603 = vsel %vm1602, %v1601, %v1595
    %1604 = vrot.lane.b32.xlu0 %v1603, 1
    %v1605 = vpop.permute.xlu0 %1604
    %vm1606 = vcmask 7168
    %s1607 = scalar_lea.vmem %s1, 51
    %1608 = vst.msk [vmem:[%s1607] ss:$232 sm:$0x3] %vm1606, %v1605
    %s1609 = scalar_lea.vmem %s1, 4294967011
    %1610 = vst.msk [vmem:[%s1609] ss:$232 sm:$0xc] %vm1606, %v1605
    %vm1611 = vcmask 39944
    %s1612 = scalar_lea.vmem %s1, 51
    %1613 = vst.msk [vmem:[%s1612] ss:$232 sm:$0x3] %vm1611, %v1605
    %s1614 = scalar_lea.vmem %s1, 4294967011
    %1615 = vst.msk [vmem:[%s1614] ss:$232 sm:$0xc] %vm1611, %v1605

// kernel: cnn_1d_forward.1
$region0: #{cnn_1d_forward.1}
  #allocation0 [shape = 'u32[]', space=smem, size = 0x4, offset = 0x4, fixed_abs, tag = 'smem constant byte address 0x4 - core index']
  #allocation1 [shape = 'u32[72,128]{1,0:T(1,128)}', space=vmem, size = 0x9000, scoped, tag = 'internal scratch']
  #allocation2 [shape = 'f32[220,16]{1,0:T(8,128)}', space=vmem, size = 0x1c000, scoped, tag = 'scratch operand']
  #allocation3 [shape = 'f32[110,16]{1,0:T(8,128)}', space=vmem, size = 0xe000, scoped, tag = 'scratch operand']
  #allocation4 [shape = 'f32[14,64]{1,0:T(8,128)}', space=vmem, size = 0x2000, scoped, tag = 'scratch operand']
  #allocation5 [shape = 'f32[7,64]{1,0:T(8,128)}', space=vmem, size = 0x1000, scoped, tag = 'scratch operand']
  #allocation6 [shape = 'f32[5,128]{1,0:T(8,128)}', space=vmem, size = 0x1000, scoped, tag = 'scratch operand']
  %s0 = inlined_call_operand.vmem [shape: f32[2,229,5], index: 0, kind: input, shape index: {}]
  %s1 = inlined_call_operand.vmem [shape: f32[50,16], index: 1, kind: input, shape index: {}]
  %s2 = inlined_call_operand.vmem [shape: f32[1,16], index: 2, kind: input, shape index: {}]
  %s3 = inlined_call_operand.vmem [shape: f32[720,64], index: 3, kind: input, shape index: {}]
  %s4 = inlined_call_operand.vmem [shape: f32[1,64], index: 4, kind: input, shape index: {}]
  %s5 = inlined_call_operand.vmem [shape: f32[192,128], index: 5, kind: input, shape index: {}]
  %s6 = inlined_call_operand.vmem [shape: f32[1,128], index: 6, kind: input, shape index: {}]
  %s7 = inlined_call_operand.vmem [shape: f32[384,256], index: 7, kind: input, shape index: {}]
  %s8 = inlined_call_operand.vmem [shape: f32[1,256], index: 8, kind: input, shape index: {}]
  %s9 = inlined_call_operand.vmem [shape: f32[2,3,256], index: 9, kind: output, shape index: {}]
  %s10 = sld [smem:[#allocation0]]
  $region69: #{cnn_1d_forward.1} parent=0
    _
  %s12 = ssub.s32 1, %s10
  %s13 = scalar_select 0, %s12, %s10
  loop: start=0, step=1, limit=4
  $region2: #{cnn_1d_forward.1} parent=0 // loop_pre_header
    _
  $region3: #{cnn_1d_forward.1} parent=0 // loop_header
    %s15 = sphi 0, %s19
    %p16 = scmp.ge.s32.totalorder %s15, 4
    %s25 = sphi 0, %s27
    %s28 = sphi 0, %s25
    %s29 = sphi 0, %s28
    %s45 = sphi 0, %s29
    %s49 = sphi 0, %s49
    %s51 = sphi 0, %s49
    %s52 = sphi 0, %s51
    %s66 = sphi 0, %s52
    %s70 = sphi 0, %s70
    %s72 = sphi 0, %s70
    %s73 = sphi 0, %s72
    %s87 = sphi 0, %s73
    %s91 = sphi 0, %s91
    %s93 = sphi 0, %s91
    %s94 = sphi 0, %s93
    %s108 = sphi 0, %s94
    %s112 = sphi 0, %s112
    %s114 = sphi 0, %s112
    %s115 = sphi 0, %s114
    %s129 = sphi 0, %s115
    %s133 = sphi 0, %s133
    %s135 = sphi 0, %s133
    %s136 = sphi 0, %s135
    %s150 = sphi 0, %s136
    %s154 = sphi 0, %s154
    %s156 = sphi 0, %s154
    %s157 = sphi 0, %s156
    %s171 = sphi 0, %s157
    %s175 = sphi 0, %s175
    %s177 = sphi 0, %s175
    %s178 = sphi 0, %s177
    %s192 = sphi 0, %s178
    %s196 = sphi 0, %s196
    %s198 = sphi 0, %s196
    %s199 = sphi 0, %s198
    %s213 = sphi 0, %s199
    %s219 = sphi 0, %s221
    %s222 = sphi 0, %s219
    %s223 = sphi 0, %s222
    %s239 = sphi 0, %s223
  $region4: #{cnn_1d_forward.1} parent=0 // loop_header_branch
    %18 = sbr.rel (%p16) target = $region8
  $region5: #{cnn_1d_forward.1} parent=0 // loop_body
    %s20 = ssub.s32 %s15, 1
    %s21 = ssub.s32 %s15, 2
    %s22 = sadd.s32 %s15, 1
    %s23 = ssub.s32 %s15, %s22
    %p24 = scmp.eq.s32.totalorder %s23, 0
    %s26 = sadd.s32 %s25, 1
    %s27 = scalar_select %p24, %s25, %s26
    %p30 = pneg %p24
    %p31 = scmp.eq.s32.totalorder %s15, 1
    %p32 = por %p30, %p31
    %p33 = scmp.ne.s32.totalorder %s25, %s28
    %p34 = scmp.eq.s32.totalorder %s15, 0
    %p35 = por %p33, %p34
    %p36 = scmp.ne.s32.totalorder %s25, %s28
    %p37 = scmp.eq.s32.totalorder %s20, 1
    %p38 = por %p36, %p37
    %p39 = scmp.ne.s32.totalorder %s28, %s29
    %p40 = scmp.eq.s32.totalorder %s20, 0
    %p41 = por %p39, %p40
    %p42 = scmp.ne.s32.totalorder %s28, %s29
    %p43 = scmp.eq.s32.totalorder %s21, 1
    %p44 = por %p42, %p43
    %p46 = scmp.ne.s32.totalorder %s29, %s45
    %p47 = scmp.eq.s32.totalorder %s21, 0
    %p48 = por %p46, %p47
    %s50 = sadd.s32 %s49, 1
    %p53 = scmp.eq.s32.totalorder %s15, 1
    %p54 = scmp.ne.s32.totalorder %s49, %s51
    %p55 = scmp.eq.s32.totalorder %s15, 0
    %p56 = por %p54, %p55
    %p57 = scmp.ne.s32.totalorder %s49, %s51
    %p58 = scmp.eq.s32.totalorder %s20, 1
    %p59 = por %p57, %p58
    %p60 = scmp.ne.s32.totalorder %s51, %s52
    %p61 = scmp.eq.s32.totalorder %s20, 0
    %p62 = por %p60, %p61
    %p63 = scmp.ne.s32.totalorder %s51, %s52
    %p64 = scmp.eq.s32.totalorder %s21, 1
    %p65 = por %p63, %p64
    %p67 = scmp.ne.s32.totalorder %s52, %s66
    %p68 = scmp.eq.s32.totalorder %s21, 0
    %p69 = por %p67, %p68
    %s71 = sadd.s32 %s70, 1
    %p74 = scmp.eq.s32.totalorder %s15, 1
    %p75 = scmp.ne.s32.totalorder %s70, %s72
    %p76 = scmp.eq.s32.totalorder %s15, 0
    %p77 = por %p75, %p76
    %p78 = scmp.ne.s32.totalorder %s70, %s72
    %p79 = scmp.eq.s32.totalorder %s20, 1
    %p80 = por %p78, %p79
    %p81 = scmp.ne.s32.totalorder %s72, %s73
    %p82 = scmp.eq.s32.totalorder %s20, 0
    %p83 = por %p81, %p82
    %p84 = scmp.ne.s32.totalorder %s72, %s73
    %p85 = scmp.eq.s32.totalorder %s21, 1
    %p86 = por %p84, %p85
    %p88 = scmp.ne.s32.totalorder %s73, %s87
    %p89 = scmp.eq.s32.totalorder %s21, 0
    %p90 = por %p88, %p89
    %s92 = sadd.s32 %s91, 1
    %p95 = scmp.eq.s32.totalorder %s15, 1
    %p96 = scmp.ne.s32.totalorder %s91, %s93
    %p97 = scmp.eq.s32.totalorder %s15, 0
    %p98 = por %p96, %p97
    %p99 = scmp.ne.s32.totalorder %s91, %s93
    %p100 = scmp.eq.s32.totalorder %s20, 1
    %p101 = por %p99, %p100
    %p102 = scmp.ne.s32.totalorder %s93, %s94
    %p103 = scmp.eq.s32.totalorder %s20, 0
    %p104 = por %p102, %p103
    %p105 = scmp.ne.s32.totalorder %s93, %s94
    %p106 = scmp.eq.s32.totalorder %s21, 1
    %p107 = por %p105, %p106
    %p109 = scmp.ne.s32.totalorder %s94, %s108
    %p110 = scmp.eq.s32.totalorder %s21, 0
    %p111 = por %p109, %p110
    %s113 = sadd.s32 %s112, 1
    %p116 = scmp.eq.s32.totalorder %s15, 1
    %p117 = scmp.ne.s32.totalorder %s112, %s114
    %p118 = scmp.eq.s32.totalorder %s15, 0
    %p119 = por %p117, %p118
    %p120 = scmp.ne.s32.totalorder %s112, %s114
    %p121 = scmp.eq.s32.totalorder %s20, 1
    %p122 = por %p120, %p121
    %p123 = scmp.ne.s32.totalorder %s114, %s115
    %p124 = scmp.eq.s32.totalorder %s20, 0
    %p125 = por %p123, %p124
    %p126 = scmp.ne.s32.totalorder %s114, %s115
    %p127 = scmp.eq.s32.totalorder %s21, 1
    %p128 = por %p126, %p127
    %p130 = scmp.ne.s32.totalorder %s115, %s129
    %p131 = scmp.eq.s32.totalorder %s21, 0
    %p132 = por %p130, %p131
    %s134 = sadd.s32 %s133, 1
    %p137 = scmp.eq.s32.totalorder %s15, 1
    %p138 = scmp.ne.s32.totalorder %s133, %s135
    %p139 = scmp.eq.s32.totalorder %s15, 0
    %p140 = por %p138, %p139
    %p141 = scmp.ne.s32.totalorder %s133, %s135
    %p142 = scmp.eq.s32.totalorder %s20, 1
    %p143 = por %p141, %p142
    %p144 = scmp.ne.s32.totalorder %s135, %s136
    %p145 = scmp.eq.s32.totalorder %s20, 0
    %p146 = por %p144, %p145
    %p147 = scmp.ne.s32.totalorder %s135, %s136
    %p148 = scmp.eq.s32.totalorder %s21, 1
    %p149 = por %p147, %p148
    %p151 = scmp.ne.s32.totalorder %s136, %s150
    %p152 = scmp.eq.s32.totalorder %s21, 0
    %p153 = por %p151, %p152
    %s155 = sadd.s32 %s154, 1
    %p158 = scmp.eq.s32.totalorder %s15, 1
    %p159 = scmp.ne.s32.totalorder %s154, %s156
    %p160 = scmp.eq.s32.totalorder %s15, 0
    %p161 = por %p159, %p160
    %p162 = scmp.ne.s32.totalorder %s154, %s156
    %p163 = scmp.eq.s32.totalorder %s20, 1
    %p164 = por %p162, %p163
    %p165 = scmp.ne.s32.totalorder %s156, %s157
    %p166 = scmp.eq.s32.totalorder %s20, 0
    %p167 = por %p165, %p166
    %p168 = scmp.ne.s32.totalorder %s156, %s157
    %p169 = scmp.eq.s32.totalorder %s21, 1
    %p170 = por %p168, %p169
    %p172 = scmp.ne.s32.totalorder %s157, %s171
    %p173 = scmp.eq.s32.totalorder %s21, 0
    %p174 = por %p172, %p173
    %s176 = sadd.s32 %s175, 1
    %p179 = scmp.eq.s32.totalorder %s15, 1
    %p180 = scmp.ne.s32.totalorder %s175, %s177
    %p181 = scmp.eq.s32.totalorder %s15, 0
    %p182 = por %p180, %p181
    %p183 = scmp.ne.s32.totalorder %s175, %s177
    %p184 = scmp.eq.s32.totalorder %s20, 1
    %p185 = por %p183, %p184
    %p186 = scmp.ne.s32.totalorder %s177, %s178
    %p187 = scmp.eq.s32.totalorder %s20, 0
    %p188 = por %p186, %p187
    %p189 = scmp.ne.s32.totalorder %s177, %s178
    %p190 = scmp.eq.s32.totalorder %s21, 1
    %p191 = por %p189, %p190
    %p193 = scmp.ne.s32.totalorder %s178, %s192
    %p194 = scmp.eq.s32.totalorder %s21, 0
    %p195 = por %p193, %p194
    %s197 = sadd.s32 %s196, 1
    %p200 = scmp.eq.s32.totalorder %s15, 1
    %p201 = scmp.ne.s32.totalorder %s196, %s198
    %p202 = scmp.eq.s32.totalorder %s15, 0
    %p203 = por %p201, %p202
    %p204 = scmp.ne.s32.totalorder %s196, %s198
    %p205 = scmp.eq.s32.totalorder %s20, 1
    %p206 = por %p204, %p205
    %p207 = scmp.ne.s32.totalorder %s198, %s199
    %p208 = scmp.eq.s32.totalorder %s20, 0
    %p209 = por %p207, %p208
    %p210 = scmp.ne.s32.totalorder %s198, %s199
    %p211 = scmp.eq.s32.totalorder %s21, 1
    %p212 = por %p210, %p211
    %p214 = scmp.ne.s32.totalorder %s199, %s213
    %p215 = scmp.eq.s32.totalorder %s21, 0
    %p216 = por %p214, %p215
    %s217 = ssub.s32 %s15, %s22
    %p218 = scmp.eq.s32.totalorder %s217, 0
    %s220 = sadd.s32 %s219, 1
    %s221 = scalar_select %p218, %s219, %s220
    %p224 = pneg %p218
    %p225 = scmp.eq.s32.totalorder %s15, 1
    %p226 = por %p224, %p225
    %p227 = scmp.ne.s32.totalorder %s219, %s222
    %p228 = scmp.eq.s32.totalorder %s15, 0
    %p229 = por %p227, %p228
    %p230 = scmp.ne.s32.totalorder %s219, %s222
    %p231 = scmp.eq.s32.totalorder %s20, 1
    %p232 = por %p230, %p231
    %p233 = scmp.ne.s32.totalorder %s222, %s223
    %p234 = scmp.eq.s32.totalorder %s20, 0
    %p235 = por %p233, %p234
    %p236 = scmp.ne.s32.totalorder %s222, %s223
    %p237 = scmp.eq.s32.totalorder %s21, 1
    %p238 = por %p236, %p237
    %p240 = scmp.ne.s32.totalorder %s223, %s239
    %p241 = scmp.eq.s32.totalorder %s21, 0
    %p242 = por %p240, %p241
    %p243 = scmp.le.s32.totalorder 1, %s15
    %p244 = scmp.lt.s32.totalorder %s15, 3
    %p245 = pnand %p243, %p244
    %p246 = pneg %p245
    // Predicated region
    $region9: #{cnn_1d_forward.1} parent=5 // pred_check
      _
    $region10: #{cnn_1d_forward.1} parent=5 // pred_check_branch
      %248 = sbr.rel (%p245) target = $region12
    $region11: #{cnn_1d_forward.1} parent=5 // pred_region
      %s249 = ssub.s32 %s15, 1
      // Predicated region
      $region13: #{cnn_1d_forward.1} parent=11 // pred_check
        %p250 = pneg %p62
      $region14: #{cnn_1d_forward.1} parent=11 // pred_check_branch
        %252 = sbr.rel (%p250) target = $region16
      $region15: #{cnn_1d_forward.1} parent=11 // pred_region
        _
      $region16: #{cnn_1d_forward.1} parent=11 // pred_fallthru
        _
      // Predicated region
      $region17: #{cnn_1d_forward.1} parent=11 // pred_check
        %p253 = pneg %p83
      $region18: #{cnn_1d_forward.1} parent=11 // pred_check_branch
        %255 = sbr.rel (%p253) target = $region20
      $region19: #{cnn_1d_forward.1} parent=11 // pred_region
        _
      $region20: #{cnn_1d_forward.1} parent=11 // pred_fallthru
        _
      // Predicated region
      $region21: #{cnn_1d_forward.1} parent=11 // pred_check
        %p256 = pneg %p104
      $region22: #{cnn_1d_forward.1} parent=11 // pred_check_branch
        %258 = sbr.rel (%p256) target = $region24
      $region23: #{cnn_1d_forward.1} parent=11 // pred_region
        _
      $region24: #{cnn_1d_forward.1} parent=11 // pred_fallthru
        _
      // Predicated region
      $region25: #{cnn_1d_forward.1} parent=11 // pred_check
        %p259 = pneg %p125
      $region26: #{cnn_1d_forward.1} parent=11 // pred_check_branch
        %261 = sbr.rel (%p259) target = $region28
      $region27: #{cnn_1d_forward.1} parent=11 // pred_region
        _
      $region28: #{cnn_1d_forward.1} parent=11 // pred_fallthru
        _
      // Predicated region
      $region29: #{cnn_1d_forward.1} parent=11 // pred_check
        %p262 = pneg %p146
      $region30: #{cnn_1d_forward.1} parent=11 // pred_check_branch
        %264 = sbr.rel (%p262) target = $region32
      $region31: #{cnn_1d_forward.1} parent=11 // pred_region
        _
      $region32: #{cnn_1d_forward.1} parent=11 // pred_fallthru
        _
      // Predicated region
      $region33: #{cnn_1d_forward.1} parent=11 // pred_check
        %p265 = pneg %p167
      $region34: #{cnn_1d_forward.1} parent=11 // pred_check_branch
        %267 = sbr.rel (%p265) target = $region36
      $region35: #{cnn_1d_forward.1} parent=11 // pred_region
        _
      $region36: #{cnn_1d_forward.1} parent=11 // pred_fallthru
        _
      // Predicated region
      $region37: #{cnn_1d_forward.1} parent=11 // pred_check
        %p268 = pneg %p188
      $region38: #{cnn_1d_forward.1} parent=11 // pred_check_branch
        %270 = sbr.rel (%p268) target = $region40
      $region39: #{cnn_1d_forward.1} parent=11 // pred_region
        _
      $region40: #{cnn_1d_forward.1} parent=11 // pred_fallthru
        _
      // Predicated region
      $region41: #{cnn_1d_forward.1} parent=11 // pred_check
        %p271 = pneg %p209
      $region42: #{cnn_1d_forward.1} parent=11 // pred_check_branch
        %273 = sbr.rel (%p271) target = $region44
      $region43: #{cnn_1d_forward.1} parent=11 // pred_region
        _
      $region44: #{cnn_1d_forward.1} parent=11 // pred_fallthru
        _
    $region12: #{cnn_1d_forward.1} parent=5 // pred_fallthru
      _
    %p274 = scmp.lt.s32.totalorder %s15, 2
    // Predicated region
    $region45: #{cnn_1d_forward.1} parent=5 // pred_check
      %p275 = pneg %p274
    $region46: #{cnn_1d_forward.1} parent=5 // pred_check_branch
      %277 = sbr.rel (%p275) target = $region48
    $region47: #{cnn_1d_forward.1} parent=5 // pred_region
      // Predicated region
      $region49: #{cnn_1d_forward.1} parent=47 // pred_check
        %p278 = pneg %p35
      $region50: #{cnn_1d_forward.1} parent=47 // pred_check_branch
        %280 = sbr.rel (%p278) target = $region52
      $region51: #{cnn_1d_forward.1} parent=47 // pred_region
        %p281 = scmp.lt.s32.totalorder %s15, 1
        %s282 = scalar_select %p281, %s15, 1
        %s283 = smul.addr %s282, 29
        %s284 = smul.addr %s283, 8
        %s285 = scalar_lea.vmem %s0, %s284
      $region52: #{cnn_1d_forward.1} parent=47 // pred_fallthru
        _
    $region48: #{cnn_1d_forward.1} parent=5 // pred_fallthru
      _
    %p286 = scmp.le.s32.totalorder 1, %s15
    %p287 = scmp.lt.s32.totalorder %s15, 3
    %p288 = pnand %p286, %p287
    %p289 = pneg %p288
    // Predicated region
    $region53: #{cnn_1d_forward.1} parent=5 // pred_check
      _
    $region54: #{cnn_1d_forward.1} parent=5 // pred_check_branch
      %291 = sbr.rel (%p288) target = $region56
    $region55: #{cnn_1d_forward.1} parent=5 // pred_region
      %s292 = ssub.s32 %s15, 1
      %p293 = scmp.lt.s32.totalorder %s20, 1
      %s294 = scalar_select %p293, %s20, 1
      %s295 = smul.addr %s294, 29
      %s296 = smul.addr %s295, 8
      %s297 = scalar_lea.vmem %s0, %s296
      %p298 = pneg %p41
      %p299 = pneg %p38
      %p300 = pneg %p62
      %p301 = pneg %p59
      %p302 = pneg %p83
      %p303 = pneg %p80
      %p304 = pneg %p104
      %p305 = pneg %p101
      %p306 = pneg %p125
      %p307 = pneg %p122
      %p308 = pneg %p146
      %p309 = pneg %p143
      %p310 = pneg %p167
      %p311 = pneg %p164
      %p312 = pneg %p188
      %p313 = pneg %p185
      %p314 = pneg %p209
      %p315 = pneg %p206
      %p316 = pneg %p235
      %p317 = pneg %p232
      %p318 = scmp.lt.s32.totalorder %s20, 1
      %s319 = scalar_select %p318, %s20, 1
      %s320 = smul.addr %s319, 2
      %s321 = smul.addr %s320, 4
      %s322 = scalar_lea.vmem %s9, %s321
      %p323 = scmp.lt.s32.totalorder %s20, 1
      %s324 = scalar_select %p323, %s20, 1
      %s325 = smul.addr %s324, 29
      %s326 = smul.addr %s325, 8
      %s327 = scalar_lea.vmem %s0, %s326
      %p328 = scmp.lt.s32.totalorder %s20, 1
      %s329 = scalar_select %p328, %s20, 1
      %s330 = smul.addr %s329, 2
      %s331 = smul.addr %s330, 4
      %s332 = scalar_lea.vmem %s9, %s331
      %v333 = vld [vmem:[%s327] sm:$0xff]
      %v334 = vld [vmem:[%s327 + $0x8] sm:$0xff]
      %v335 = vld [vmem:[%s327 + $0x10] sm:$0xff]
      %v336 = vld [vmem:[%s327 + $0x18] sm:$0xff]
      %v337 = vld [vmem:[%s327 + $0x20] sm:$0xff]
      %v338 = vld [vmem:[%s327 + $0x28] sm:$0xff]
      %v339 = vld [vmem:[%s327 + $0x30] sm:$0xff]
      %v340 = vld [vmem:[%s327 + $0x38] sm:$0xff]
      %v341 = vld [vmem:[%s327 + $0x40] sm:$0xff]
      %v342 = vld [vmem:[%s327 + $0x48] sm:$0xff]
      %v343 = vld [vmem:[%s327 + $0x50] sm:$0xff]
      %v344 = vld [vmem:[%s327 + $0x58] sm:$0xff]
      %v345 = vld [vmem:[%s327 + $0x60] sm:$0xff]
      %v346 = vld [vmem:[%s327 + $0x68] sm:$0xff]
      %v347 = vld [vmem:[%s327 + $0x70] sm:$0xff]
      %v348 = vld [vmem:[%s327 + $0x78] sm:$0xff]
      %v349 = vld [vmem:[%s327 + $0x80] sm:$0xff]
      %v350 = vld [vmem:[%s327 + $0x88] sm:$0xff]
      %v351 = vld [vmem:[%s327 + $0x90] sm:$0xff]
      %v352 = vld [vmem:[%s327 + $0x98] sm:$0xff]
      %v353 = vld [vmem:[%s327 + $0xa0] sm:$0xff]
      %v354 = vld [vmem:[%s327 + $0xa8] sm:$0xff]
      %v355 = vld [vmem:[%s327 + $0xb0] sm:$0xff]
      %v356 = vld [vmem:[%s327 + $0xb8] sm:$0xff]
      %v357 = vld [vmem:[%s327 + $0xc0] sm:$0xff]
      %v358 = vld [vmem:[%s327 + $0xc8] sm:$0xff]
      %v359 = vld [vmem:[%s327 + $0xd0] sm:$0xff]
      %v360 = vld [vmem:[%s327 + $0xd8] sm:$0xf]
      %v361 = vld [vmem:[%s327 + $0x1] sm:$0xff]
      %v362 = vld [vmem:[%s327 + $0x9] sm:$0xff]
      %v363 = vld [vmem:[%s327 + $0x11] sm:$0xff]
      %v364 = vld [vmem:[%s327 + $0x19] sm:$0xff]
      %v365 = vld [vmem:[%s327 + $0x21] sm:$0xff]
      %v366 = vld [vmem:[%s327 + $0x29] sm:$0xff]
      %v367 = vld [vmem:[%s327 + $0x31] sm:$0xff]
      %v368 = vld [vmem:[%s327 + $0x39] sm:$0xff]
      %v369 = vld [vmem:[%s327 + $0x41] sm:$0xff]
      %v370 = vld [vmem:[%s327 + $0x49] sm:$0xff]
      %v371 = vld [vmem:[%s327 + $0x51] sm:$0xff]
      %v372 = vld [vmem:[%s327 + $0x59] sm:$0xff]
      %v373 = vld [vmem:[%s327 + $0x61] sm:$0xff]
      %v374 = vld [vmem:[%s327 + $0x69] sm:$0xff]
      %v375 = vld [vmem:[%s327 + $0x71] sm:$0xff]
      %v376 = vld [vmem:[%s327 + $0x79] sm:$0xff]
      %v377 = vld [vmem:[%s327 + $0x81] sm:$0xff]
      %v378 = vld [vmem:[%s327 + $0x89] sm:$0xff]
      %v379 = vld [vmem:[%s327 + $0x91] sm:$0xff]
      %v380 = vld [vmem:[%s327 + $0x99] sm:$0xff]
      %v381 = vld [vmem:[%s327 + $0xa1] sm:$0xff]
      %v382 = vld [vmem:[%s327 + $0xa9] sm:$0xff]
      %v383 = vld [vmem:[%s327 + $0xb1] sm:$0xff]
      %v384 = vld [vmem:[%s327 + $0xb9] sm:$0xff]
      %v385 = vld [vmem:[%s327 + $0xc1] sm:$0xff]
      %v386 = vld [vmem:[%s327 + $0xc9] sm:$0xff]
      %v387 = vld [vmem:[%s327 + $0xd1] sm:$0xff]
      %v388 = vld [vmem:[%s327 + $0xd9] sm:$0xf]
      %v389 = vld [vmem:[%s327 + $0x2] sm:$0xff]
      %v390 = vld [vmem:[%s327 + $0xa] sm:$0xff]
      %v391 = vld [vmem:[%s327 + $0x12] sm:$0xff]
      %v392 = vld [vmem:[%s327 + $0x1a] sm:$0xff]
      %v393 = vld [vmem:[%s327 + $0x22] sm:$0xff]
      %v394 = vld [vmem:[%s327 + $0x2a] sm:$0xff]
      %v395 = vld [vmem:[%s327 + $0x32] sm:$0xff]
      %v396 = vld [vmem:[%s327 + $0x3a] sm:$0xff]
      %v397 = vld [vmem:[%s327 + $0x42] sm:$0xff]
      %v398 = vld [vmem:[%s327 + $0x4a] sm:$0xff]
      %v399 = vld [vmem:[%s327 + $0x52] sm:$0xff]
      %v400 = vld [vmem:[%s327 + $0x5a] sm:$0xff]
      %v401 = vld [vmem:[%s327 + $0x62] sm:$0xff]
      %v402 = vld [vmem:[%s327 + $0x6a] sm:$0xff]
      %v403 = vld [vmem:[%s327 + $0x72] sm:$0xff]
      %v404 = vld [vmem:[%s327 + $0x7a] sm:$0xff]
      %v405 = vld [vmem:[%s327 + $0x82] sm:$0xff]
      %v406 = vld [vmem:[%s327 + $0x8a] sm:$0xff]
      %v407 = vld [vmem:[%s327 + $0x92] sm:$0xff]
      %v408 = vld [vmem:[%s327 + $0x9a] sm:$0xff]
      %v409 = vld [vmem:[%s327 + $0xa2] sm:$0xff]
      %v410 = vld [vmem:[%s327 + $0xaa] sm:$0xff]
      %v411 = vld [vmem:[%s327 + $0xb2] sm:$0xff]
      %v412 = vld [vmem:[%s327 + $0xba] sm:$0xff]
      %v413 = vld [vmem:[%s327 + $0xc2] sm:$0xff]
      %v414 = vld [vmem:[%s327 + $0xca] sm:$0xff]
      %v415 = vld [vmem:[%s327 + $0xd2] sm:$0xff]
      %v416 = vld [vmem:[%s327 + $0xda] sm:$0xf]
      %v417 = vld [vmem:[%s327 + $0x3] sm:$0xff]
      %v418 = vld [vmem:[%s327 + $0xb] sm:$0xff]
      %v419 = vld [vmem:[%s327 + $0x13] sm:$0xff]
      %v420 = vld [vmem:[%s327 + $0x1b] sm:$0xff]
      %v421 = vld [vmem:[%s327 + $0x23] sm:$0xff]
      %v422 = vld [vmem:[%s327 + $0x2b] sm:$0xff]
      %v423 = vld [vmem:[%s327 + $0x33] sm:$0xff]
      %v424 = vld [vmem:[%s327 + $0x3b] sm:$0xff]
      %v425 = vld [vmem:[%s327 + $0x43] sm:$0xff]
      %v426 = vld [vmem:[%s327 + $0x4b] sm:$0xff]
      %v427 = vld [vmem:[%s327 + $0x53] sm:$0xff]
      %v428 = vld [vmem:[%s327 + $0x5b] sm:$0xff]
      %v429 = vld [vmem:[%s327 + $0x63] sm:$0xff]
      %v430 = vld [vmem:[%s327 + $0x6b] sm:$0xff]
      %v431 = vld [vmem:[%s327 + $0x73] sm:$0xff]
      %v432 = vld [vmem:[%s327 + $0x7b] sm:$0xff]
      %v433 = vld [vmem:[%s327 + $0x83] sm:$0xff]
      %v434 = vld [vmem:[%s327 + $0x8b] sm:$0xff]
      %v435 = vld [vmem:[%s327 + $0x93] sm:$0xff]
      %v436 = vld [vmem:[%s327 + $0x9b] sm:$0xff]
      %v437 = vld [vmem:[%s327 + $0xa3] sm:$0xff]
      %v438 = vld [vmem:[%s327 + $0xab] sm:$0xff]
      %v439 = vld [vmem:[%s327 + $0xb3] sm:$0xff]
      %v440 = vld [vmem:[%s327 + $0xbb] sm:$0xff]
      %v441 = vld [vmem:[%s327 + $0xc3] sm:$0xff]
      %v442 = vld [vmem:[%s327 + $0xcb] sm:$0xff]
      %v443 = vld [vmem:[%s327 + $0xd3] sm:$0xff]
      %v444 = vld [vmem:[%s327 + $0xdb] sm:$0xf]
      %v445 = vld [vmem:[%s327 + $0x4] sm:$0xff]
      %v446 = vld [vmem:[%s327 + $0xc] sm:$0xff]
      %v447 = vld [vmem:[%s327 + $0x14] sm:$0xff]
      %v448 = vld [vmem:[%s327 + $0x1c] sm:$0xff]
      %v449 = vld [vmem:[%s327 + $0x24] sm:$0xff]
      %v450 = vld [vmem:[%s327 + $0x2c] sm:$0xff]
      %v451 = vld [vmem:[%s327 + $0x34] sm:$0xff]
      %v452 = vld [vmem:[%s327 + $0x3c] sm:$0xff]
      %v453 = vld [vmem:[%s327 + $0x44] sm:$0xff]
      %v454 = vld [vmem:[%s327 + $0x4c] sm:$0xff]
      %v455 = vld [vmem:[%s327 + $0x54] sm:$0xff]
      %v456 = vld [vmem:[%s327 + $0x5c] sm:$0xff]
      %v457 = vld [vmem:[%s327 + $0x64] sm:$0xff]
      %v458 = vld [vmem:[%s327 + $0x6c] sm:$0xff]
      %v459 = vld [vmem:[%s327 + $0x74] sm:$0xff]
      %v460 = vld [vmem:[%s327 + $0x7c] sm:$0xff]
      %v461 = vld [vmem:[%s327 + $0x84] sm:$0xff]
      %v462 = vld [vmem:[%s327 + $0x8c] sm:$0xff]
      %v463 = vld [vmem:[%s327 + $0x94] sm:$0xff]
      %v464 = vld [vmem:[%s327 + $0x9c] sm:$0xff]
      %v465 = vld [vmem:[%s327 + $0xa4] sm:$0xff]
      %v466 = vld [vmem:[%s327 + $0xac] sm:$0xff]
      %v467 = vld [vmem:[%s327 + $0xb4] sm:$0xff]
      %v468 = vld [vmem:[%s327 + $0xbc] sm:$0xff]
      %v469 = vld [vmem:[%s327 + $0xc4] sm:$0xff]
      %v470 = vld [vmem:[%s327 + $0xcc] sm:$0xff]
      %v471 = vld [vmem:[%s327 + $0xd4] sm:$0xff]
      %v472 = vld [vmem:[%s327 + $0xdc] sm:$0xf]
      %v473 = vld [vmem:[%s327 + $0x5] sm:$0xff]
      %v474 = vld [vmem:[%s327 + $0xd] sm:$0xff]
      %v475 = vld [vmem:[%s327 + $0x15] sm:$0xff]
      %v476 = vld [vmem:[%s327 + $0x1d] sm:$0xff]
      %v477 = vld [vmem:[%s327 + $0x25] sm:$0xff]
      %v478 = vld [vmem:[%s327 + $0x2d] sm:$0xff]
      %v479 = vld [vmem:[%s327 + $0x35] sm:$0xff]
      %v480 = vld [vmem:[%s327 + $0x3d] sm:$0xff]
      %v481 = vld [vmem:[%s327 + $0x45] sm:$0xff]
      %v482 = vld [vmem:[%s327 + $0x4d] sm:$0xff]
      %v483 = vld [vmem:[%s327 + $0x55] sm:$0xff]
      %v484 = vld [vmem:[%s327 + $0x5d] sm:$0xff]
      %v485 = vld [vmem:[%s327 + $0x65] sm:$0xff]
      %v486 = vld [vmem:[%s327 + $0x6d] sm:$0xff]
      %v487 = vld [vmem:[%s327 + $0x75] sm:$0xff]
      %v488 = vld [vmem:[%s327 + $0x7d] sm:$0xff]
      %v489 = vld [vmem:[%s327 + $0x85] sm:$0xff]
      %v490 = vld [vmem:[%s327 + $0x8d] sm:$0xff]
      %v491 = vld [vmem:[%s327 + $0x95] sm:$0xff]
      %v492 = vld [vmem:[%s327 + $0x9d] sm:$0xff]
      %v493 = vld [vmem:[%s327 + $0xa5] sm:$0xff]
      %v494 = vld [vmem:[%s327 + $0xad] sm:$0xff]
      %v495 = vld [vmem:[%s327 + $0xb5] sm:$0xff]
      %v496 = vld [vmem:[%s327 + $0xbd] sm:$0xff]
      %v497 = vld [vmem:[%s327 + $0xc5] sm:$0xff]
      %v498 = vld [vmem:[%s327 + $0xcd] sm:$0xff]
      %v499 = vld [vmem:[%s327 + $0xd5] sm:$0xff]
      %v500 = vld [vmem:[%s327 + $0xdd] sm:$0xf]
      %v501 = vld [vmem:[%s327 + $0x6] sm:$0xff]
      %v502 = vld [vmem:[%s327 + $0xe] sm:$0xff]
      %v503 = vld [vmem:[%s327 + $0x16] sm:$0xff]
      %v504 = vld [vmem:[%s327 + $0x1e] sm:$0xff]
      %v505 = vld [vmem:[%s327 + $0x26] sm:$0xff]
      %v506 = vld [vmem:[%s327 + $0x2e] sm:$0xff]
      %v507 = vld [vmem:[%s327 + $0x36] sm:$0xff]
      %v508 = vld [vmem:[%s327 + $0x3e] sm:$0xff]
      %v509 = vld [vmem:[%s327 + $0x46] sm:$0xff]
      %v510 = vld [vmem:[%s327 + $0x4e] sm:$0xff]
      %v511 = vld [vmem:[%s327 + $0x56] sm:$0xff]
      %v512 = vld [vmem:[%s327 + $0x5e] sm:$0xff]
      %v513 = vld [vmem:[%s327 + $0x66] sm:$0xff]
      %v514 = vld [vmem:[%s327 + $0x6e] sm:$0xff]
      %v515 = vld [vmem:[%s327 + $0x76] sm:$0xff]
      %v516 = vld [vmem:[%s327 + $0x7e] sm:$0xff]
      %v517 = vld [vmem:[%s327 + $0x86] sm:$0xff]
      %v518 = vld [vmem:[%s327 + $0x8e] sm:$0xff]
      %v519 = vld [vmem:[%s327 + $0x96] sm:$0xff]
      %v520 = vld [vmem:[%s327 + $0x9e] sm:$0xff]
      %v521 = vld [vmem:[%s327 + $0xa6] sm:$0xff]
      %v522 = vld [vmem:[%s327 + $0xae] sm:$0xff]
      %v523 = vld [vmem:[%s327 + $0xb6] sm:$0xff]
      %v524 = vld [vmem:[%s327 + $0xbe] sm:$0xff]
      %v525 = vld [vmem:[%s327 + $0xc6] sm:$0xff]
      %v526 = vld [vmem:[%s327 + $0xce] sm:$0xff]
      %v527 = vld [vmem:[%s327 + $0xd6] sm:$0xff]
      %v528 = vld [vmem:[%s327 + $0xde] sm:$0xf]
      %v529 = vld [vmem:[%s327 + $0x7] sm:$0xff]
      %v530 = vld [vmem:[%s327 + $0xf] sm:$0xff]
      %v531 = vld [vmem:[%s327 + $0x17] sm:$0xff]
      %v532 = vld [vmem:[%s327 + $0x1f] sm:$0xff]
      %v533 = vld [vmem:[%s327 + $0x27] sm:$0xff]
      %v534 = vld [vmem:[%s327 + $0x2f] sm:$0xff]
      %v535 = vld [vmem:[%s327 + $0x37] sm:$0xff]
      %v536 = vld [vmem:[%s327 + $0x3f] sm:$0xff]
      %v537 = vld [vmem:[%s327 + $0x47] sm:$0xff]
      %v538 = vld [vmem:[%s327 + $0x4f] sm:$0xff]
      %v539 = vld [vmem:[%s327 + $0x57] sm:$0xff]
      %v540 = vld [vmem:[%s327 + $0x5f] sm:$0xff]
      %v541 = vld [vmem:[%s327 + $0x67] sm:$0xff]
      %v542 = vld [vmem:[%s327 + $0x6f] sm:$0xff]
      %v543 = vld [vmem:[%s327 + $0x77] sm:$0xff]
      %v544 = vld [vmem:[%s327 + $0x7f] sm:$0xff]
      %v545 = vld [vmem:[%s327 + $0x87] sm:$0xff]
      %v546 = vld [vmem:[%s327 + $0x8f] sm:$0xff]
      %v547 = vld [vmem:[%s327 + $0x97] sm:$0xff]
      %v548 = vld [vmem:[%s327 + $0x9f] sm:$0xff]
      %v549 = vld [vmem:[%s327 + $0xa7] sm:$0xff]
      %v550 = vld [vmem:[%s327 + $0xaf] sm:$0xff]
      %v551 = vld [vmem:[%s327 + $0xb7] sm:$0xff]
      %v552 = vld [vmem:[%s327 + $0xbf] sm:$0xff]
      %v553 = vld [vmem:[%s327 + $0xc7] sm:$0xff]
      %v554 = vld [vmem:[%s327 + $0xcf] sm:$0xff]
      %v555 = vld [vmem:[%s327 + $0xd7] sm:$0xff]
      %v556 = vld [vmem:[%s327 + $0xdf] sm:$0xf]
      %v557 = vld [vmem:[%s327 + $0xd8] sm:$0xff]
      %v558 = vld [vmem:[%s327 + $0xe0] sm:$0xf]
      %v559 = vld [vmem:[%s327 + $0xd9] sm:$0xff]
      %v560 = vld [vmem:[%s327 + $0xe1] sm:$0xf]
      %589 = vrot.lane.b32.xlu0 %v361, 5
      %v590 = vpop.permute.xlu0 %589
      %591 = vrot.lane.b32.xlu0 %v362, 5
      %v592 = vpop.permute.xlu0 %591
      %593 = vrot.lane.b32.xlu0 %v363, 5
      %v594 = vpop.permute.xlu0 %593
      %595 = vrot.lane.b32.xlu0 %v364, 5
      %v596 = vpop.permute.xlu0 %595
      %597 = vrot.lane.b32.xlu0 %v365, 5
      %v598 = vpop.permute.xlu0 %597
      %599 = vrot.lane.b32.xlu0 %v366, 5
      %v600 = vpop.permute.xlu0 %599
      %601 = vrot.lane.b32.xlu0 %v367, 5
      %v602 = vpop.permute.xlu0 %601
      %603 = vrot.lane.b32.xlu0 %v368, 5
      %v604 = vpop.permute.xlu0 %603
      %605 = vrot.lane.b32.xlu0 %v369, 5
      %v606 = vpop.permute.xlu0 %605
      %607 = vrot.lane.b32.xlu0 %v370, 5
      %v608 = vpop.permute.xlu0 %607
      %609 = vrot.lane.b32.xlu0 %v371, 5
      %v610 = vpop.permute.xlu0 %609
      %611 = vrot.lane.b32.xlu0 %v372, 5
      %v612 = vpop.permute.xlu0 %611
      %613 = vrot.lane.b32.xlu0 %v373, 5
      %v614 = vpop.permute.xlu0 %613
      %615 = vrot.lane.b32.xlu0 %v374, 5
      %v616 = vpop.permute.xlu0 %615
      %617 = vrot.lane.b32.xlu0 %v375, 5
      %v618 = vpop.permute.xlu0 %617
      %619 = vrot.lane.b32.xlu0 %v376, 5
      %v620 = vpop.permute.xlu0 %619
      %621 = vrot.lane.b32.xlu0 %v377, 5
      %v622 = vpop.permute.xlu0 %621
      %623 = vrot.lane.b32.xlu0 %v378, 5
      %v624 = vpop.permute.xlu0 %623
      %625 = vrot.lane.b32.xlu0 %v379, 5
      %v626 = vpop.permute.xlu0 %625
      %627 = vrot.lane.b32.xlu0 %v380, 5
      %v628 = vpop.permute.xlu0 %627
      %629 = vrot.lane.b32.xlu0 %v381, 5
      %v630 = vpop.permute.xlu0 %629
      %631 = vrot.lane.b32.xlu0 %v382, 5
      %v632 = vpop.permute.xlu0 %631
      %633 = vrot.lane.b32.xlu0 %v383, 5
      %v634 = vpop.permute.xlu0 %633
      %635 = vrot.lane.b32.xlu0 %v384, 5
      %v636 = vpop.permute.xlu0 %635
      %637 = vrot.lane.b32.xlu0 %v385, 5
      %v638 = vpop.permute.xlu0 %637
      %639 = vrot.lane.b32.xlu0 %v386, 5
      %v640 = vpop.permute.xlu0 %639
      %641 = vrot.lane.b32.xlu0 %v387, 5
      %v642 = vpop.permute.xlu0 %641
      %643 = vrot.lane.b32.xlu0 %v388, 5
      %v644 = vpop.permute.xlu0 %643
      %701 = vrot.lane.b32.xlu0 %v389, 10
      %v702 = vpop.permute.xlu0 %701
      %703 = vrot.lane.b32.xlu0 %v390, 10
      %v704 = vpop.permute.xlu0 %703
      %705 = vrot.lane.b32.xlu0 %v391, 10
      %v706 = vpop.permute.xlu0 %705
      %707 = vrot.lane.b32.xlu0 %v392, 10
      %v708 = vpop.permute.xlu0 %707
      %709 = vrot.lane.b32.xlu0 %v393, 10
      %v710 = vpop.permute.xlu0 %709
      %711 = vrot.lane.b32.xlu0 %v394, 10
      %v712 = vpop.permute.xlu0 %711
      %713 = vrot.lane.b32.xlu0 %v395, 10
      %v714 = vpop.permute.xlu0 %713
      %715 = vrot.lane.b32.xlu0 %v396, 10
      %v716 = vpop.permute.xlu0 %715
      %717 = vrot.lane.b32.xlu0 %v397, 10
      %v718 = vpop.permute.xlu0 %717
      %719 = vrot.lane.b32.xlu0 %v398, 10
      %v720 = vpop.permute.xlu0 %719
      %721 = vrot.lane.b32.xlu0 %v399, 10
      %v722 = vpop.permute.xlu0 %721
      %723 = vrot.lane.b32.xlu0 %v400, 10
      %v724 = vpop.permute.xlu0 %723
      %725 = vrot.lane.b32.xlu0 %v401, 10
      %v726 = vpop.permute.xlu0 %725
      %727 = vrot.lane.b32.xlu0 %v402, 10
      %v728 = vpop.permute.xlu0 %727
      %729 = vrot.lane.b32.xlu0 %v403, 10
      %v730 = vpop.permute.xlu0 %729
      %731 = vrot.lane.b32.xlu0 %v404, 10
      %v732 = vpop.permute.xlu0 %731
      %733 = vrot.lane.b32.xlu0 %v405, 10
      %v734 = vpop.permute.xlu0 %733
      %735 = vrot.lane.b32.xlu0 %v406, 10
      %v736 = vpop.permute.xlu0 %735
      %737 = vrot.lane.b32.xlu0 %v407, 10
      %v738 = vpop.permute.xlu0 %737
      %739 = vrot.lane.b32.xlu0 %v408, 10
      %v740 = vpop.permute.xlu0 %739
      %741 = vrot.lane.b32.xlu0 %v409, 10
      %v742 = vpop.permute.xlu0 %741
      %743 = vrot.lane.b32.xlu0 %v410, 10
      %v744 = vpop.permute.xlu0 %743
      %745 = vrot.lane.b32.xlu0 %v411, 10
      %v746 = vpop.permute.xlu0 %745
      %747 = vrot.lane.b32.xlu0 %v412, 10
      %v748 = vpop.permute.xlu0 %747
      %749 = vrot.lane.b32.xlu0 %v413, 10
      %v750 = vpop.permute.xlu0 %749
      %751 = vrot.lane.b32.xlu0 %v414, 10
      %v752 = vpop.permute.xlu0 %751
      %753 = vrot.lane.b32.xlu0 %v415, 10
      %v754 = vpop.permute.xlu0 %753
      %755 = vrot.lane.b32.xlu0 %v416, 10
      %v756 = vpop.permute.xlu0 %755
      %813 = vrot.lane.b32.xlu0 %v417, 15
      %v814 = vpop.permute.xlu0 %813
      %815 = vrot.lane.b32.xlu0 %v418, 15
      %v816 = vpop.permute.xlu0 %815
      %817 = vrot.lane.b32.xlu0 %v419, 15
      %v818 = vpop.permute.xlu0 %817
      %819 = vrot.lane.b32.xlu0 %v420, 15
      %v820 = vpop.permute.xlu0 %819
      %821 = vrot.lane.b32.xlu0 %v421, 15
      %v822 = vpop.permute.xlu0 %821
      %823 = vrot.lane.b32.xlu0 %v422, 15
      %v824 = vpop.permute.xlu0 %823
      %825 = vrot.lane.b32.xlu0 %v423, 15
      %v826 = vpop.permute.xlu0 %825
      %827 = vrot.lane.b32.xlu0 %v424, 15
      %v828 = vpop.permute.xlu0 %827
      %829 = vrot.lane.b32.xlu0 %v425, 15
      %v830 = vpop.permute.xlu0 %829
      %831 = vrot.lane.b32.xlu0 %v426, 15
      %v832 = vpop.permute.xlu0 %831
      %833 = vrot.lane.b32.xlu0 %v427, 15
      %v834 = vpop.permute.xlu0 %833
      %835 = vrot.lane.b32.xlu0 %v428, 15
      %v836 = vpop.permute.xlu0 %835
      %837 = vrot.lane.b32.xlu0 %v429, 15
      %v838 = vpop.permute.xlu0 %837
      %839 = vrot.lane.b32.xlu0 %v430, 15
      %v840 = vpop.permute.xlu0 %839
      %841 = vrot.lane.b32.xlu0 %v431, 15
      %v842 = vpop.permute.xlu0 %841
      %843 = vrot.lane.b32.xlu0 %v432, 15
      %v844 = vpop.permute.xlu0 %843
      %845 = vrot.lane.b32.xlu0 %v433, 15
      %v846 = vpop.permute.xlu0 %845
      %847 = vrot.lane.b32.xlu0 %v434, 15
      %v848 = vpop.permute.xlu0 %847
      %849 = vrot.lane.b32.xlu0 %v435, 15
      %v850 = vpop.permute.xlu0 %849
      %851 = vrot.lane.b32.xlu0 %v436, 15
      %v852 = vpop.permute.xlu0 %851
      %853 = vrot.lane.b32.xlu0 %v437, 15
      %v854 = vpop.permute.xlu0 %853
      %855 = vrot.lane.b32.xlu0 %v438, 15
      %v856 = vpop.permute.xlu0 %855
      %857 = vrot.lane.b32.xlu0 %v439, 15
      %v858 = vpop.permute.xlu0 %857
      %859 = vrot.lane.b32.xlu0 %v440, 15
      %v860 = vpop.permute.xlu0 %859
      %861 = vrot.lane.b32.xlu0 %v441, 15
      %v862 = vpop.permute.xlu0 %861
      %863 = vrot.lane.b32.xlu0 %v442, 15
      %v864 = vpop.permute.xlu0 %863
      %865 = vrot.lane.b32.xlu0 %v443, 15
      %v866 = vpop.permute.xlu0 %865
      %867 = vrot.lane.b32.xlu0 %v444, 15
      %v868 = vpop.permute.xlu0 %867
      %925 = vrot.lane.b32.xlu0 %v445, 20
      %v926 = vpop.permute.xlu0 %925
      %927 = vrot.lane.b32.xlu0 %v446, 20
      %v928 = vpop.permute.xlu0 %927
      %929 = vrot.lane.b32.xlu0 %v447, 20
      %v930 = vpop.permute.xlu0 %929
      %931 = vrot.lane.b32.xlu0 %v448, 20
      %v932 = vpop.permute.xlu0 %931
      %933 = vrot.lane.b32.xlu0 %v449, 20
      %v934 = vpop.permute.xlu0 %933
      %935 = vrot.lane.b32.xlu0 %v450, 20
      %v936 = vpop.permute.xlu0 %935
      %937 = vrot.lane.b32.xlu0 %v451, 20
      %v938 = vpop.permute.xlu0 %937
      %939 = vrot.lane.b32.xlu0 %v452, 20
      %v940 = vpop.permute.xlu0 %939
      %941 = vrot.lane.b32.xlu0 %v453, 20
      %v942 = vpop.permute.xlu0 %941
      %943 = vrot.lane.b32.xlu0 %v454, 20
      %v944 = vpop.permute.xlu0 %943
      %945 = vrot.lane.b32.xlu0 %v455, 20
      %v946 = vpop.permute.xlu0 %945
      %947 = vrot.lane.b32.xlu0 %v456, 20
      %v948 = vpop.permute.xlu0 %947
      %949 = vrot.lane.b32.xlu0 %v457, 20
      %v950 = vpop.permute.xlu0 %949
      %951 = vrot.lane.b32.xlu0 %v458, 20
      %v952 = vpop.permute.xlu0 %951
      %953 = vrot.lane.b32.xlu0 %v459, 20
      %v954 = vpop.permute.xlu0 %953
      %955 = vrot.lane.b32.xlu0 %v460, 20
      %v956 = vpop.permute.xlu0 %955
      %957 = vrot.lane.b32.xlu0 %v461, 20
      %v958 = vpop.permute.xlu0 %957
      %959 = vrot.lane.b32.xlu0 %v462, 20
      %v960 = vpop.permute.xlu0 %959
      %961 = vrot.lane.b32.xlu0 %v463, 20
      %v962 = vpop.permute.xlu0 %961
      %963 = vrot.lane.b32.xlu0 %v464, 20
      %v964 = vpop.permute.xlu0 %963
      %965 = vrot.lane.b32.xlu0 %v465, 20
      %v966 = vpop.permute.xlu0 %965
      %967 = vrot.lane.b32.xlu0 %v466, 20
      %v968 = vpop.permute.xlu0 %967
      %969 = vrot.lane.b32.xlu0 %v467, 20
      %v970 = vpop.permute.xlu0 %969
      %971 = vrot.lane.b32.xlu0 %v468, 20
      %v972 = vpop.permute.xlu0 %971
      %973 = vrot.lane.b32.xlu0 %v469, 20
      %v974 = vpop.permute.xlu0 %973
      %975 = vrot.lane.b32.xlu0 %v470, 20
      %v976 = vpop.permute.xlu0 %975
      %977 = vrot.lane.b32.xlu0 %v471, 20
      %v978 = vpop.permute.xlu0 %977
      %979 = vrot.lane.b32.xlu0 %v472, 20
      %v980 = vpop.permute.xlu0 %979
      %1037 = vrot.lane.b32.xlu0 %v473, 25
      %v1038 = vpop.permute.xlu0 %1037
      %1039 = vrot.lane.b32.xlu0 %v474, 25
      %v1040 = vpop.permute.xlu0 %1039
      %1041 = vrot.lane.b32.xlu0 %v475, 25
      %v1042 = vpop.permute.xlu0 %1041
      %1043 = vrot.lane.b32.xlu0 %v476, 25
      %v1044 = vpop.permute.xlu0 %1043
      %1045 = vrot.lane.b32.xlu0 %v477, 25
      %v1046 = vpop.permute.xlu0 %1045
      %1047 = vrot.lane.b32.xlu0 %v478, 25
      %v1048 = vpop.permute.xlu0 %1047
      %1049 = vrot.lane.b32.xlu0 %v479, 25
      %v1050 = vpop.permute.xlu0 %1049
      %1051 = vrot.lane.b32.xlu0 %v480, 25
      %v1052 = vpop.permute.xlu0 %1051
      %1053 = vrot.lane.b32.xlu0 %v481, 25
      %v1054 = vpop.permute.xlu0 %1053
      %1055 = vrot.lane.b32.xlu0 %v482, 25
      %v1056 = vpop.permute.xlu0 %1055
      %1057 = vrot.lane.b32.xlu0 %v483, 25
      %v1058 = vpop.permute.xlu0 %1057
      %1059 = vrot.lane.b32.xlu0 %v484, 25
      %v1060 = vpop.permute.xlu0 %1059
      %1061 = vrot.lane.b32.xlu0 %v485, 25
      %v1062 = vpop.permute.xlu0 %1061
      %1063 = vrot.lane.b32.xlu0 %v486, 25
      %v1064 = vpop.permute.xlu0 %1063
      %1065 = vrot.lane.b32.xlu0 %v487, 25
      %v1066 = vpop.permute.xlu0 %1065
      %1067 = vrot.lane.b32.xlu0 %v488, 25
      %v1068 = vpop.permute.xlu0 %1067
      %1069 = vrot.lane.b32.xlu0 %v489, 25
      %v1070 = vpop.permute.xlu0 %1069
      %1071 = vrot.lane.b32.xlu0 %v490, 25
      %v1072 = vpop.permute.xlu0 %1071
      %1073 = vrot.lane.b32.xlu0 %v491, 25
      %v1074 = vpop.permute.xlu0 %1073
      %1075 = vrot.lane.b32.xlu0 %v492, 25
      %v1076 = vpop.permute.xlu0 %1075
      %1077 = vrot.lane.b32.xlu0 %v493, 25
      %v1078 = vpop.permute.xlu0 %1077
      %1079 = vrot.lane.b32.xlu0 %v494, 25
      %v1080 = vpop.permute.xlu0 %1079
      %1081 = vrot.lane.b32.xlu0 %v495, 25
      %v1082 = vpop.permute.xlu0 %1081
      %1083 = vrot.lane.b32.xlu0 %v496, 25
      %v1084 = vpop.permute.xlu0 %1083
      %1085 = vrot.lane.b32.xlu0 %v497, 25
      %v1086 = vpop.permute.xlu0 %1085
      %1087 = vrot.lane.b32.xlu0 %v498, 25
      %v1088 = vpop.permute.xlu0 %1087
      %1089 = vrot.lane.b32.xlu0 %v499, 25
      %v1090 = vpop.permute.xlu0 %1089
      %1091 = vrot.lane.b32.xlu0 %v500, 25
      %v1092 = vpop.permute.xlu0 %1091
      %1149 = vrot.lane.b32.xlu0 %v501, 30
      %v1150 = vpop.permute.xlu0 %1149
      %1151 = vrot.lane.b32.xlu0 %v502, 30
      %v1152 = vpop.permute.xlu0 %1151
      %1153 = vrot.lane.b32.xlu0 %v503, 30
      %v1154 = vpop.permute.xlu0 %1153
      %1155 = vrot.lane.b32.xlu0 %v504, 30
      %v1156 = vpop.permute.xlu0 %1155
      %1157 = vrot.lane.b32.xlu0 %v505, 30
      %v1158 = vpop.permute.xlu0 %1157
      %1159 = vrot.lane.b32.xlu0 %v506, 30
      %v1160 = vpop.permute.xlu0 %1159
      %1161 = vrot.lane.b32.xlu0 %v507, 30
      %v1162 = vpop.permute.xlu0 %1161
      %1163 = vrot.lane.b32.xlu0 %v508, 30
      %v1164 = vpop.permute.xlu0 %1163
      %1165 = vrot.lane.b32.xlu0 %v509, 30
      %v1166 = vpop.permute.xlu0 %1165
      %1167 = vrot.lane.b32.xlu0 %v510, 30
      %v1168 = vpop.permute.xlu0 %1167
      %1169 = vrot.lane.b32.xlu0 %v511, 30
      %v1170 = vpop.permute.xlu0 %1169
      %1171 = vrot.lane.b32.xlu0 %v512, 30
      %v1172 = vpop.permute.xlu0 %1171
      %1173 = vrot.lane.b32.xlu0 %v513, 30
      %v1174 = vpop.permute.xlu0 %1173
      %1175 = vrot.lane.b32.xlu0 %v514, 30
      %v1176 = vpop.permute.xlu0 %1175
      %1177 = vrot.lane.b32.xlu0 %v515, 30
      %v1178 = vpop.permute.xlu0 %1177
      %1179 = vrot.lane.b32.xlu0 %v516, 30
      %v1180 = vpop.permute.xlu0 %1179
      %1181 = vrot.lane.b32.xlu0 %v517, 30
      %v1182 = vpop.permute.xlu0 %1181
      %1183 = vrot.lane.b32.xlu0 %v518, 30
      %v1184 = vpop.permute.xlu0 %1183
      %1185 = vrot.lane.b32.xlu0 %v519, 30
      %v1186 = vpop.permute.xlu0 %1185
      %1187 = vrot.lane.b32.xlu0 %v520, 30
      %v1188 = vpop.permute.xlu0 %1187
      %1189 = vrot.lane.b32.xlu0 %v521, 30
      %v1190 = vpop.permute.xlu0 %1189
      %1191 = vrot.lane.b32.xlu0 %v522, 30
      %v1192 = vpop.permute.xlu0 %1191
      %1193 = vrot.lane.b32.xlu0 %v523, 30
      %v1194 = vpop.permute.xlu0 %1193
      %1195 = vrot.lane.b32.xlu0 %v524, 30
      %v1196 = vpop.permute.xlu0 %1195
      %1197 = vrot.lane.b32.xlu0 %v525, 30
      %v1198 = vpop.permute.xlu0 %1197
      %1199 = vrot.lane.b32.xlu0 %v526, 30
      %v1200 = vpop.permute.xlu0 %1199
      %1201 = vrot.lane.b32.xlu0 %v527, 30
      %v1202 = vpop.permute.xlu0 %1201
      %1203 = vrot.lane.b32.xlu0 %v528, 30
      %v1204 = vpop.permute.xlu0 %1203
      %1261 = vrot.lane.b32.xlu0 %v529, 35
      %v1262 = vpop.permute.xlu0 %1261
      %1263 = vrot.lane.b32.xlu0 %v530, 35
      %v1264 = vpop.permute.xlu0 %1263
      %1265 = vrot.lane.b32.xlu0 %v531, 35
      %v1266 = vpop.permute.xlu0 %1265
      %1267 = vrot.lane.b32.xlu0 %v532, 35
      %v1268 = vpop.permute.xlu0 %1267
      %1269 = vrot.lane.b32.xlu0 %v533, 35
      %v1270 = vpop.permute.xlu0 %1269
      %1271 = vrot.lane.b32.xlu0 %v534, 35
      %v1272 = vpop.permute.xlu0 %1271
      %1273 = vrot.lane.b32.xlu0 %v535, 35
      %v1274 = vpop.permute.xlu0 %1273
      %1275 = vrot.lane.b32.xlu0 %v536, 35
      %v1276 = vpop.permute.xlu0 %1275
      %1277 = vrot.lane.b32.xlu0 %v537, 35
      %v1278 = vpop.permute.xlu0 %1277
      %1279 = vrot.lane.b32.xlu0 %v538, 35
      %v1280 = vpop.permute.xlu0 %1279
      %1281 = vrot.lane.b32.xlu0 %v539, 35
      %v1282 = vpop.permute.xlu0 %1281
      %1283 = vrot.lane.b32.xlu0 %v540, 35
      %v1284 = vpop.permute.xlu0 %1283
      %1285 = vrot.lane.b32.xlu0 %v541, 35
      %v1286 = vpop.permute.xlu0 %1285
      %1287 = vrot.lane.b32.xlu0 %v542, 35
      %v1288 = vpop.permute.xlu0 %1287
      %1289 = vrot.lane.b32.xlu0 %v543, 35
      %v1290 = vpop.permute.xlu0 %1289
      %1291 = vrot.lane.b32.xlu0 %v544, 35
      %v1292 = vpop.permute.xlu0 %1291
      %1293 = vrot.lane.b32.xlu0 %v545, 35
      %v1294 = vpop.permute.xlu0 %1293
      %1295 = vrot.lane.b32.xlu0 %v546, 35
      %v1296 = vpop.permute.xlu0 %1295
      %1297 = vrot.lane.b32.xlu0 %v547, 35
      %v1298 = vpop.permute.xlu0 %1297
      %1299 = vrot.lane.b32.xlu0 %v548, 35
      %v1300 = vpop.permute.xlu0 %1299
      %1301 = vrot.lane.b32.xlu0 %v549, 35
      %v1302 = vpop.permute.xlu0 %1301
      %1303 = vrot.lane.b32.xlu0 %v550, 35
      %v1304 = vpop.permute.xlu0 %1303
      %1305 = vrot.lane.b32.xlu0 %v551, 35
      %v1306 = vpop.permute.xlu0 %1305
      %1307 = vrot.lane.b32.xlu0 %v552, 35
      %v1308 = vpop.permute.xlu0 %1307
      %1309 = vrot.lane.b32.xlu0 %v553, 35
      %v1310 = vpop.permute.xlu0 %1309
      %1311 = vrot.lane.b32.xlu0 %v554, 35
      %v1312 = vpop.permute.xlu0 %1311
      %1313 = vrot.lane.b32.xlu0 %v555, 35
      %v1314 = vpop.permute.xlu0 %1313
      %1315 = vrot.lane.b32.xlu0 %v556, 35
      %v1316 = vpop.permute.xlu0 %1315
      %1373 = vrot.lane.b32.xlu0 %v334, 40
      %v1374 = vpop.permute.xlu0 %1373
      %1375 = vrot.lane.b32.xlu0 %v335, 40
      %v1376 = vpop.permute.xlu0 %1375
      %1377 = vrot.lane.b32.xlu0 %v336, 40
      %v1378 = vpop.permute.xlu0 %1377
      %1379 = vrot.lane.b32.xlu0 %v337, 40
      %v1380 = vpop.permute.xlu0 %1379
      %1381 = vrot.lane.b32.xlu0 %v338, 40
      %v1382 = vpop.permute.xlu0 %1381
      %1383 = vrot.lane.b32.xlu0 %v339, 40
      %v1384 = vpop.permute.xlu0 %1383
      %1385 = vrot.lane.b32.xlu0 %v340, 40
      %v1386 = vpop.permute.xlu0 %1385
      %1387 = vrot.lane.b32.xlu0 %v341, 40
      %v1388 = vpop.permute.xlu0 %1387
      %1389 = vrot.lane.b32.xlu0 %v342, 40
      %v1390 = vpop.permute.xlu0 %1389
      %1391 = vrot.lane.b32.xlu0 %v343, 40
      %v1392 = vpop.permute.xlu0 %1391
      %1393 = vrot.lane.b32.xlu0 %v344, 40
      %v1394 = vpop.permute.xlu0 %1393
      %1395 = vrot.lane.b32.xlu0 %v345, 40
      %v1396 = vpop.permute.xlu0 %1395
      %1397 = vrot.lane.b32.xlu0 %v346, 40
      %v1398 = vpop.permute.xlu0 %1397
      %1399 = vrot.lane.b32.xlu0 %v347, 40
      %v1400 = vpop.permute.xlu0 %1399
      %1401 = vrot.lane.b32.xlu0 %v348, 40
      %v1402 = vpop.permute.xlu0 %1401
      %1403 = vrot.lane.b32.xlu0 %v349, 40
      %v1404 = vpop.permute.xlu0 %1403
      %1405 = vrot.lane.b32.xlu0 %v350, 40
      %v1406 = vpop.permute.xlu0 %1405
      %1407 = vrot.lane.b32.xlu0 %v351, 40
      %v1408 = vpop.permute.xlu0 %1407
      %1409 = vrot.lane.b32.xlu0 %v352, 40
      %v1410 = vpop.permute.xlu0 %1409
      %1411 = vrot.lane.b32.xlu0 %v353, 40
      %v1412 = vpop.permute.xlu0 %1411
      %1413 = vrot.lane.b32.xlu0 %v354, 40
      %v1414 = vpop.permute.xlu0 %1413
      %1415 = vrot.lane.b32.xlu0 %v355, 40
      %v1416 = vpop.permute.xlu0 %1415
      %1417 = vrot.lane.b32.xlu0 %v356, 40
      %v1418 = vpop.permute.xlu0 %1417
      %1419 = vrot.lane.b32.xlu0 %v357, 40
      %v1420 = vpop.permute.xlu0 %1419
      %1421 = vrot.lane.b32.xlu0 %v358, 40
      %v1422 = vpop.permute.xlu0 %1421
      %1423 = vrot.lane.b32.xlu0 %v359, 40
      %v1424 = vpop.permute.xlu0 %1423
      %1425 = vrot.lane.b32.xlu0 %v557, 40
      %v1426 = vpop.permute.xlu0 %1425
      %1427 = vrot.lane.b32.xlu0 %v558, 40
      %v1428 = vpop.permute.xlu0 %1427
      %1459 = vrot.lane.b32.xlu0 %v362, 45
      %v1460 = vpop.permute.xlu0 %1459
      %1461 = vrot.lane.b32.xlu0 %v363, 45
      %v1462 = vpop.permute.xlu0 %1461
      %1463 = vrot.lane.b32.xlu0 %v364, 45
      %v1464 = vpop.permute.xlu0 %1463
      %1465 = vrot.lane.b32.xlu0 %v365, 45
      %v1466 = vpop.permute.xlu0 %1465
      %1467 = vrot.lane.b32.xlu0 %v366, 45
      %v1468 = vpop.permute.xlu0 %1467
      %1469 = vrot.lane.b32.xlu0 %v367, 45
      %v1470 = vpop.permute.xlu0 %1469
      %1471 = vrot.lane.b32.xlu0 %v368, 45
      %v1472 = vpop.permute.xlu0 %1471
      %1473 = vrot.lane.b32.xlu0 %v369, 45
      %v1474 = vpop.permute.xlu0 %1473
      %1475 = vrot.lane.b32.xlu0 %v370, 45
      %v1476 = vpop.permute.xlu0 %1475
      %1477 = vrot.lane.b32.xlu0 %v371, 45
      %v1478 = vpop.permute.xlu0 %1477
      %1479 = vrot.lane.b32.xlu0 %v372, 45
      %v1480 = vpop.permute.xlu0 %1479
      %1481 = vrot.lane.b32.xlu0 %v373, 45
      %v1482 = vpop.permute.xlu0 %1481
      %1483 = vrot.lane.b32.xlu0 %v374, 45
      %v1484 = vpop.permute.xlu0 %1483
      %1485 = vrot.lane.b32.xlu0 %v375, 45
      %v1486 = vpop.permute.xlu0 %1485
      %1487 = vrot.lane.b32.xlu0 %v376, 45
      %v1488 = vpop.permute.xlu0 %1487
      %1489 = vrot.lane.b32.xlu0 %v377, 45
      %v1490 = vpop.permute.xlu0 %1489
      %1491 = vrot.lane.b32.xlu0 %v378, 45
      %v1492 = vpop.permute.xlu0 %1491
      %1493 = vrot.lane.b32.xlu0 %v379, 45
      %v1494 = vpop.permute.xlu0 %1493
      %1495 = vrot.lane.b32.xlu0 %v380, 45
      %v1496 = vpop.permute.xlu0 %1495
      %1497 = vrot.lane.b32.xlu0 %v381, 45
      %v1498 = vpop.permute.xlu0 %1497
      %1499 = vrot.lane.b32.xlu0 %v382, 45
      %v1500 = vpop.permute.xlu0 %1499
      %1501 = vrot.lane.b32.xlu0 %v383, 45
      %v1502 = vpop.permute.xlu0 %1501
      %1503 = vrot.lane.b32.xlu0 %v384, 45
      %v1504 = vpop.permute.xlu0 %1503
      %1505 = vrot.lane.b32.xlu0 %v385, 45
      %v1506 = vpop.permute.xlu0 %1505
      %1507 = vrot.lane.b32.xlu0 %v386, 45
      %v1508 = vpop.permute.xlu0 %1507
      %1509 = vrot.lane.b32.xlu0 %v387, 45
      %v1510 = vpop.permute.xlu0 %1509
      %1511 = vrot.lane.b32.xlu0 %v559, 45
      %v1512 = vpop.permute.xlu0 %1511
      %1513 = vrot.lane.b32.xlu0 %v560, 45
      %v1514 = vpop.permute.xlu0 %1513
      %vm1543 = vcmask 39936
      %v1544 = vsel %vm1543, %v333, %v590
      %v1545 = vsel %vm1543, %v334, %v592
      %v1546 = vsel %vm1543, %v335, %v594
      %v1547 = vsel %vm1543, %v336, %v596
      %v1548 = vsel %vm1543, %v337, %v598
      %v1549 = vsel %vm1543, %v338, %v600
      %v1550 = vsel %vm1543, %v339, %v602
      %v1551 = vsel %vm1543, %v340, %v604
      %v1552 = vsel %vm1543, %v341, %v606
      %v1553 = vsel %vm1543, %v342, %v608
      %v1554 = vsel %vm1543, %v343, %v610
      %v1555 = vsel %vm1543, %v344, %v612
      %v1556 = vsel %vm1543, %v345, %v614
      %v1557 = vsel %vm1543, %v346, %v616
      %v1558 = vsel %vm1543, %v347, %v618
      %v1559 = vsel %vm1543, %v348, %v620
      %v1560 = vsel %vm1543, %v349, %v622
      %v1561 = vsel %vm1543, %v350, %v624
      %v1562 = vsel %vm1543, %v351, %v626
      %v1563 = vsel %vm1543, %v352, %v628
      %v1564 = vsel %vm1543, %v353, %v630
      %v1565 = vsel %vm1543, %v354, %v632
      %v1566 = vsel %vm1543, %v355, %v634
      %v1567 = vsel %vm1543, %v356, %v636
      %v1568 = vsel %vm1543, %v357, %v638
      %v1569 = vsel %vm1543, %v358, %v640
      %v1570 = vsel %vm1543, %v359, %v642
      %v1571 = vsel %vm1543, %v360, %v644
      %vm1572 = vcmask 80896
      %v1573 = vsel %vm1572, %v1544, %v702
      %v1574 = vsel %vm1572, %v1545, %v704
      %v1575 = vsel %vm1572, %v1546, %v706
      %v1576 = vsel %vm1572, %v1547, %v708
      %v1577 = vsel %vm1572, %v1548, %v710
      %v1578 = vsel %vm1572, %v1549, %v712
      %v1579 = vsel %vm1572, %v1550, %v714
      %v1580 = vsel %vm1572, %v1551, %v716
      %v1581 = vsel %vm1572, %v1552, %v718
      %v1582 = vsel %vm1572, %v1553, %v720
      %v1583 = vsel %vm1572, %v1554, %v722
      %v1584 = vsel %vm1572, %v1555, %v724
      %v1585 = vsel %vm1572, %v1556, %v726
      %v1586 = vsel %vm1572, %v1557, %v728
      %v1587 = vsel %vm1572, %v1558, %v730
      %v1588 = vsel %vm1572, %v1559, %v732
      %v1589 = vsel %vm1572, %v1560, %v734
      %v1590 = vsel %vm1572, %v1561, %v736
      %v1591 = vsel %vm1572, %v1562, %v738
      %v1592 = vsel %vm1572, %v1563, %v740
      %v1593 = vsel %vm1572, %v1564, %v742
      %v1594 = vsel %vm1572, %v1565, %v744
      %v1595 = vsel %vm1572, %v1566, %v746
      %v1596 = vsel %vm1572, %v1567, %v748
      %v1597 = vsel %vm1572, %v1568, %v750
      %v1598 = vsel %vm1572, %v1569, %v752
      %v1599 = vsel %vm1572, %v1570, %v754
      %v1600 = vsel %vm1572, %v1571, %v756
      %vm1601 = vcmask 121856
      %v1602 = vsel %vm1601, %v1573, %v814
      %v1603 = vsel %vm1601, %v1574, %v816
      %v1604 = vsel %vm1601, %v1575, %v818
      %v1605 = vsel %vm1601, %v1576, %v820
      %v1606 = vsel %vm1601, %v1577, %v822
      %v1607 = vsel %vm1601, %v1578, %v824
      %v1608 = vsel %vm1601, %v1579, %v826
      %v1609 = vsel %vm1601, %v1580, %v828
      %v1610 = vsel %vm1601, %v1581, %v830
      %v1611 = vsel %vm1601, %v1582, %v832
      %v1612 = vsel %vm1601, %v1583, %v834
      %v1613 = vsel %vm1601, %v1584, %v836
      %v1614 = vsel %vm1601, %v1585, %v838
      %v1615 = vsel %vm1601, %v1586, %v840
      %v1616 = vsel %vm1601, %v1587, %v842
      %v1617 = vsel %vm1601, %v1588, %v844
      %v1618 = vsel %vm1601, %v1589, %v846
      %v1619 = vsel %vm1601, %v1590, %v848
      %v1620 = vsel %vm1601, %v1591, %v850
      %v1621 = vsel %vm1601, %v1592, %v852
      %v1622 = vsel %vm1601, %v1593, %v854
      %v1623 = vsel %vm1601, %v1594, %v856
      %v1624 = vsel %vm1601, %v1595, %v858
      %v1625 = vsel %vm1601, %v1596, %v860
      %v1626 = vsel %vm1601, %v1597, %v862
      %v1627 = vsel %vm1601, %v1598, %v864
      %v1628 = vsel %vm1601, %v1599, %v866
      %v1629 = vsel %vm1601, %v1600, %v868
      %vm1630 = vcmask 162816
      %v1631 = vsel %vm1630, %v1602, %v926
      %v1632 = vsel %vm1630, %v1603, %v928
      %v1633 = vsel %vm1630, %v1604, %v930
      %v1634 = vsel %vm1630, %v1605, %v932
      %v1635 = vsel %vm1630, %v1606, %v934
      %v1636 = vsel %vm1630, %v1607, %v936
      %v1637 = vsel %vm1630, %v1608, %v938
      %v1638 = vsel %vm1630, %v1609, %v940
      %v1639 = vsel %vm1630, %v1610, %v942
      %v1640 = vsel %vm1630, %v1611, %v944
      %v1641 = vsel %vm1630, %v1612, %v946
      %v1642 = vsel %vm1630, %v1613, %v948
      %v1643 = vsel %vm1630, %v1614, %v950
      %v1644 = vsel %vm1630, %v1615, %v952
      %v1645 = vsel %vm1630, %v1616, %v954
      %v1646 = vsel %vm1630, %v1617, %v956
      %v1647 = vsel %vm1630, %v1618, %v958
      %v1648 = vsel %vm1630, %v1619, %v960
      %v1649 = vsel %vm1630, %v1620, %v962
      %v1650 = vsel %vm1630, %v1621, %v964
      %v1651 = vsel %vm1630, %v1622, %v966
      %v1652 = vsel %vm1630, %v1623, %v968
      %v1653 = vsel %vm1630, %v1624, %v970
      %v1654 = vsel %vm1630, %v1625, %v972
      %v1655 = vsel %vm1630, %v1626, %v974
      %v1656 = vsel %vm1630, %v1627, %v976
      %v1657 = vsel %vm1630, %v1628, %v978
      %v1658 = vsel %vm1630, %v1629, %v980
      %vm1659 = vcmask 203776
      %v1660 = vsel %vm1659, %v1631, %v1038
      %v1661 = vsel %vm1659, %v1632, %v1040
      %v1662 = vsel %vm1659, %v1633, %v1042
      %v1663 = vsel %vm1659, %v1634, %v1044
      %v1664 = vsel %vm1659, %v1635, %v1046
      %v1665 = vsel %vm1659, %v1636, %v1048
      %v1666 = vsel %vm1659, %v1637, %v1050
      %v1667 = vsel %vm1659, %v1638, %v1052
      %v1668 = vsel %vm1659, %v1639, %v1054
      %v1669 = vsel %vm1659, %v1640, %v1056
      %v1670 = vsel %vm1659, %v1641, %v1058
      %v1671 = vsel %vm1659, %v1642, %v1060
      %v1672 = vsel %vm1659, %v1643, %v1062
      %v1673 = vsel %vm1659, %v1644, %v1064
      %v1674 = vsel %vm1659, %v1645, %v1066
      %v1675 = vsel %vm1659, %v1646, %v1068
      %v1676 = vsel %vm1659, %v1647, %v1070
      %v1677 = vsel %vm1659, %v1648, %v1072
      %v1678 = vsel %vm1659, %v1649, %v1074
      %v1679 = vsel %vm1659, %v1650, %v1076
      %v1680 = vsel %vm1659, %v1651, %v1078
      %v1681 = vsel %vm1659, %v1652, %v1080
      %v1682 = vsel %vm1659, %v1653, %v1082
      %v1683 = vsel %vm1659, %v1654, %v1084
      %v1684 = vsel %vm1659, %v1655, %v1086
      %v1685 = vsel %vm1659, %v1656, %v1088
      %v1686 = vsel %vm1659, %v1657, %v1090
      %v1687 = vsel %vm1659, %v1658, %v1092
      %vm1688 = vcmask 244736
      %v1689 = vsel %vm1688, %v1660, %v1150
      %v1690 = vsel %vm1688, %v1661, %v1152
      %v1691 = vsel %vm1688, %v1662, %v1154
      %v1692 = vsel %vm1688, %v1663, %v1156
      %v1693 = vsel %vm1688, %v1664, %v1158
      %v1694 = vsel %vm1688, %v1665, %v1160
      %v1695 = vsel %vm1688, %v1666, %v1162
      %v1696 = vsel %vm1688, %v1667, %v1164
      %v1697 = vsel %vm1688, %v1668, %v1166
      %v1698 = vsel %vm1688, %v1669, %v1168
      %v1699 = vsel %vm1688, %v1670, %v1170
      %v1700 = vsel %vm1688, %v1671, %v1172
      %v1701 = vsel %vm1688, %v1672, %v1174
      %v1702 = vsel %vm1688, %v1673, %v1176
      %v1703 = vsel %vm1688, %v1674, %v1178
      %v1704 = vsel %vm1688, %v1675, %v1180
      %v1705 = vsel %vm1688, %v1676, %v1182
      %v1706 = vsel %vm1688, %v1677, %v1184
      %v1707 = vsel %vm1688, %v1678, %v1186
      %v1708 = vsel %vm1688, %v1679, %v1188
      %v1709 = vsel %vm1688, %v1680, %v1190
      %v1710 = vsel %vm1688, %v1681, %v1192
      %v1711 = vsel %vm1688, %v1682, %v1194
      %v1712 = vsel %vm1688, %v1683, %v1196
      %v1713 = vsel %vm1688, %v1684, %v1198
      %v1714 = vsel %vm1688, %v1685, %v1200
      %v1715 = vsel %vm1688, %v1686, %v1202
      %v1716 = vsel %vm1688, %v1687, %v1204
      %vm1717 = vcmask 285696
      %v1718 = vsel %vm1717, %v1689, %v1262
      %v1719 = vsel %vm1717, %v1690, %v1264
      %v1720 = vsel %vm1717, %v1691, %v1266
      %v1721 = vsel %vm1717, %v1692, %v1268
      %v1722 = vsel %vm1717, %v1693, %v1270
      %v1723 = vsel %vm1717, %v1694, %v1272
      %v1724 = vsel %vm1717, %v1695, %v1274
      %v1725 = vsel %vm1717, %v1696, %v1276
      %v1726 = vsel %vm1717, %v1697, %v1278
      %v1727 = vsel %vm1717, %v1698, %v1280
      %v1728 = vsel %vm1717, %v1699, %v1282
      %v1729 = vsel %vm1717, %v1700, %v1284
      %v1730 = vsel %vm1717, %v1701, %v1286
      %v1731 = vsel %vm1717, %v1702, %v1288
      %v1732 = vsel %vm1717, %v1703, %v1290
      %v1733 = vsel %vm1717, %v1704, %v1292
      %v1734 = vsel %vm1717, %v1705, %v1294
      %v1735 = vsel %vm1717, %v1706, %v1296
      %v1736 = vsel %vm1717, %v1707, %v1298
      %v1737 = vsel %vm1717, %v1708, %v1300
      %v1738 = vsel %vm1717, %v1709, %v1302
      %v1739 = vsel %vm1717, %v1710, %v1304
      %v1740 = vsel %vm1717, %v1711, %v1306
      %v1741 = vsel %vm1717, %v1712, %v1308
      %v1742 = vsel %vm1717, %v1713, %v1310
      %v1743 = vsel %vm1717, %v1714, %v1312
      %v1744 = vsel %vm1717, %v1715, %v1314
      %v1745 = vsel %vm1717, %v1716, %v1316
      %vm1746 = vcmask 326656
      %v1747 = vsel %vm1746, %v1718, %v1374
      %v1748 = vsel %vm1746, %v1719, %v1376
      %v1749 = vsel %vm1746, %v1720, %v1378
      %v1750 = vsel %vm1746, %v1721, %v1380
      %v1751 = vsel %vm1746, %v1722, %v1382
      %v1752 = vsel %vm1746, %v1723, %v1384
      %v1753 = vsel %vm1746, %v1724, %v1386
      %v1754 = vsel %vm1746, %v1725, %v1388
      %v1755 = vsel %vm1746, %v1726, %v1390
      %v1756 = vsel %vm1746, %v1727, %v1392
      %v1757 = vsel %vm1746, %v1728, %v1394
      %v1758 = vsel %vm1746, %v1729, %v1396
      %v1759 = vsel %vm1746, %v1730, %v1398
      %v1760 = vsel %vm1746, %v1731, %v1400
      %v1761 = vsel %vm1746, %v1732, %v1402
      %v1762 = vsel %vm1746, %v1733, %v1404
      %v1763 = vsel %vm1746, %v1734, %v1406
      %v1764 = vsel %vm1746, %v1735, %v1408
      %v1765 = vsel %vm1746, %v1736, %v1410
      %v1766 = vsel %vm1746, %v1737, %v1412
      %v1767 = vsel %vm1746, %v1738, %v1414
      %v1768 = vsel %vm1746, %v1739, %v1416
      %v1769 = vsel %vm1746, %v1740, %v1418
      %v1770 = vsel %vm1746, %v1741, %v1420
      %v1771 = vsel %vm1746, %v1742, %v1422
      %v1772 = vsel %vm1746, %v1743, %v1424
      %v1773 = vsel %vm1746, %v1744, %v1426
      %v1774 = vsel %vm1746, %v1745, %v1428
      %vm1775 = vcmask 367616
      %v1776 = vsel %vm1775, %v1747, %v1460
      %v1777 = vsel %vm1775, %v1748, %v1462
      %v1778 = vsel %vm1775, %v1749, %v1464
      %v1779 = vsel %vm1775, %v1750, %v1466
      %v1780 = vsel %vm1775, %v1751, %v1468
      %v1781 = vsel %vm1775, %v1752, %v1470
      %v1782 = vsel %vm1775, %v1753, %v1472
      %v1783 = vsel %vm1775, %v1754, %v1474
      %v1784 = vsel %vm1775, %v1755, %v1476
      %v1785 = vsel %vm1775, %v1756, %v1478
      %v1786 = vsel %vm1775, %v1757, %v1480
      %v1787 = vsel %vm1775, %v1758, %v1482
      %v1788 = vsel %vm1775, %v1759, %v1484
      %v1789 = vsel %vm1775, %v1760, %v1486
      %v1790 = vsel %vm1775, %v1761, %v1488
      %v1791 = vsel %vm1775, %v1762, %v1490
      %v1792 = vsel %vm1775, %v1763, %v1492
      %v1793 = vsel %vm1775, %v1764, %v1494
      %v1794 = vsel %vm1775, %v1765, %v1496
      %v1795 = vsel %vm1775, %v1766, %v1498
      %v1796 = vsel %vm1775, %v1767, %v1500
      %v1797 = vsel %vm1775, %v1768, %v1502
      %v1798 = vsel %vm1775, %v1769, %v1504
      %v1799 = vsel %vm1775, %v1770, %v1506
      %v1800 = vsel %vm1775, %v1771, %v1508
      %v1801 = vsel %vm1775, %v1772, %v1510
      %v1802 = vsel %vm1775, %v1773, %v1512
      %v1803 = vsel %vm1775, %v1774, %v1514
      %v1804 = vld [vmem:[%s1] sm:$0xff]
      %v1805 = vld [vmem:[%s1 + $0x8] sm:$0xff]
      %v1806 = vld [vmem:[%s1 + $0x10] sm:$0xff]
      %v1807 = vld [vmem:[%s1 + $0x18] sm:$0xff]
      %v1808 = vld [vmem:[%s1 + $0x20] sm:$0xff]
      %v1809 = vld [vmem:[%s1 + $0x28] sm:$0xff]
      %v1810 = vld [vmem:[%s1 + $0x30] sm:$0x3]
      %v1811 = vld [vmem:[%s2] sm:$0x1]
      %v1813 = vperm.slane %v1811, 0
      %vm1815 = vcmask 408576
      %v1817 = vsel %vm1815, %v1776, 0
      %v1820 = vsel %vm1815, %v1777, 0
      %v1823 = vsel %vm1815, %v1778, 0
      %v1826 = vsel %vm1815, %v1779, 0
      %v1829 = vsel %vm1815, %v1780, 0
      %v1832 = vsel %vm1815, %v1781, 0
      %v1835 = vsel %vm1815, %v1782, 0
      %v1838 = vsel %vm1815, %v1783, 0
      %v1841 = vsel %vm1815, %v1784, 0
      %v1844 = vsel %vm1815, %v1785, 0
      %v1847 = vsel %vm1815, %v1786, 0
      %v1850 = vsel %vm1815, %v1787, 0
      %v1853 = vsel %vm1815, %v1788, 0
      %v1856 = vsel %vm1815, %v1789, 0
      %v1859 = vsel %vm1815, %v1790, 0
      %v1862 = vsel %vm1815, %v1791, 0
      %v1865 = vsel %vm1815, %v1792, 0
      %v1868 = vsel %vm1815, %v1793, 0
      %v1871 = vsel %vm1815, %v1794, 0
      %v1874 = vsel %vm1815, %v1795, 0
      %v1877 = vsel %vm1815, %v1796, 0
      %v1880 = vsel %vm1815, %v1797, 0
      %v1883 = vsel %vm1815, %v1798, 0
      %v1886 = vsel %vm1815, %v1799, 0
      %v1889 = vsel %vm1815, %v1800, 0
      %v1892 = vsel %vm1815, %v1801, 0
      %v1895 = vsel %vm1815, %v1802, 0
      %v1898 = vsel %vm1815, %v1803, 0
      %vm1900 = vcmask 1041408
      %v1902 = vsel %vm1900, %v1810, 0
      %1904 = vmatpush.msra.mxu0 0.0
      %1905 = vmatpush.msra.mxu0 0.0
      %1906 = vmatpush.msra.mxu0 0.0
      %1907 = vmatpush.msra.mxu0 0.0
      %1908 = vmatpush.msra.mxu0 0.0
      %1909 = vmatpush.msra.mxu0 0.0
      %1910 = vmatpush.msra.mxu0 0.0
      %1911 = vmatpush.msra.mxu0 0.0
      %1912 = vmatpush.msra.mxu0 0.0
      %1913 = vmatpush.msra.mxu0 %v1902
      %1914 = vmatpush.msra.mxu0 %v1809
      %1915 = vmatpush.msra.mxu0 %v1808
      %1916 = vmatpush.msra.mxu0 %v1807
      %1917 = vmatpush.msra.mxu0 %v1806
      %1918 = vmatpush.msra.mxu0 %v1805
      %1919 = vmatpush.msra.mxu0 %v1804
      %1920 = vmatmul.f32.gmra.mxu0 %v1817
      %v1921 = vpop.f32.mrf.mxu0
      %v1922 = vadd.f32 %v1813, %v1921
      %1923 = vmatmul.f32.gmra.mxu0 %v1820
      %v1924 = vpop.f32.mrf.mxu0
      %v1925 = vadd.f32 %v1813, %v1924
      %1926 = vmatmul.f32.gmra.mxu0 %v1823
      %v1927 = vpop.f32.mrf.mxu0
      %v1928 = vadd.f32 %v1813, %v1927
      %1929 = vmatmul.f32.gmra.mxu0 %v1826
      %v1930 = vpop.f32.mrf.mxu0
      %v1931 = vadd.f32 %v1813, %v1930
      %1932 = vmatmul.f32.gmra.mxu0 %v1829
      %v1933 = vpop.f32.mrf.mxu0
      %v1934 = vadd.f32 %v1813, %v1933
      %1935 = vmatmul.f32.gmra.mxu0 %v1832
      %v1936 = vpop.f32.mrf.mxu0
      %v1937 = vadd.f32 %v1813, %v1936
      %1938 = vmatmul.f32.gmra.mxu0 %v1835
      %v1939 = vpop.f32.mrf.mxu0
      %v1940 = vadd.f32 %v1813, %v1939
      %1941 = vmatmul.f32.gmra.mxu0 %v1838
      %v1942 = vpop.f32.mrf.mxu0
      %v1943 = vadd.f32 %v1813, %v1942
      %1944 = vmatmul.f32.gmra.mxu0 %v1841
      %v1945 = vpop.f32.mrf.mxu0
      %v1946 = vadd.f32 %v1813, %v1945
      %1947 = vmatmul.f32.gmra.mxu0 %v1844
      %v1948 = vpop.f32.mrf.mxu0
      %v1949 = vadd.f32 %v1813, %v1948
      %1950 = vmatmul.f32.gmra.mxu0 %v1847
      %v1951 = vpop.f32.mrf.mxu0
      %v1952 = vadd.f32 %v1813, %v1951
      %1953 = vmatmul.f32.gmra.mxu0 %v1850
      %v1954 = vpop.f32.mrf.mxu0
      %v1955 = vadd.f32 %v1813, %v1954
      %1956 = vmatmul.f32.gmra.mxu0 %v1853
      %v1957 = vpop.f32.mrf.mxu0
      %v1958 = vadd.f32 %v1813, %v1957
      %1959 = vmatmul.f32.gmra.mxu0 %v1856
      %v1960 = vpop.f32.mrf.mxu0
      %v1961 = vadd.f32 %v1813, %v1960
      %1962 = vmatmul.f32.gmra.mxu0 %v1859
      %v1963 = vpop.f32.mrf.mxu0
      %v1964 = vadd.f32 %v1813, %v1963
      %1965 = vmatmul.f32.gmra.mxu0 %v1862
      %v1966 = vpop.f32.mrf.mxu0
      %v1967 = vadd.f32 %v1813, %v1966
      %1968 = vmatmul.f32.gmra.mxu0 %v1865
      %v1969 = vpop.f32.mrf.mxu0
      %v1970 = vadd.f32 %v1813, %v1969
      %1971 = vmatmul.f32.gmra.mxu0 %v1868
      %v1972 = vpop.f32.mrf.mxu0
      %v1973 = vadd.f32 %v1813, %v1972
      %1974 = vmatmul.f32.gmra.mxu0 %v1871
      %v1975 = vpop.f32.mrf.mxu0
      %v1976 = vadd.f32 %v1813, %v1975
      %1977 = vmatmul.f32.gmra.mxu0 %v1874
      %v1978 = vpop.f32.mrf.mxu0
      %v1979 = vadd.f32 %v1813, %v1978
      %1980 = vmatmul.f32.gmra.mxu0 %v1877
      %v1981 = vpop.f32.mrf.mxu0
      %v1982 = vadd.f32 %v1813, %v1981
      %1983 = vmatmul.f32.gmra.mxu0 %v1880
      %v1984 = vpop.f32.mrf.mxu0
      %v1985 = vadd.f32 %v1813, %v1984
      %1986 = vmatmul.f32.gmra.mxu0 %v1883
      %v1987 = vpop.f32.mrf.mxu0
      %v1988 = vadd.f32 %v1813, %v1987
      %1989 = vmatmul.f32.gmra.mxu0 %v1886
      %v1990 = vpop.f32.mrf.mxu0
      %v1991 = vadd.f32 %v1813, %v1990
      %1992 = vmatmul.f32.gmra.mxu0 %v1889
      %v1993 = vpop.f32.mrf.mxu0
      %v1994 = vadd.f32 %v1813, %v1993
      %1995 = vmatmul.f32.gmra.mxu0 %v1892
      %v1996 = vpop.f32.mrf.mxu0
      %v1997 = vadd.f32 %v1813, %v1996
      %1998 = vmatmul.f32.gmra.mxu0 %v1895
      %v1999 = vpop.f32.mrf.mxu0
      %v2000 = vadd.f32 %v1813, %v1999
      %2001 = vmatmul.f32.gmra.mxu0 %v1898
      %v2002 = vpop.f32.mrf.mxu0
      %v2003 = vadd.f32 %v1813, %v2002
      %2004 = vdwg.mxu0
      %v2005 = vmax.f32 %v1922, 0.0
      %v2006 = vmax.f32 %v1925, 0.0
      %v2007 = vmax.f32 %v1928, 0.0
      %v2008 = vmax.f32 %v1931, 0.0
      %v2009 = vmax.f32 %v1934, 0.0
      %v2010 = vmax.f32 %v1937, 0.0
      %v2011 = vmax.f32 %v1940, 0.0
      %v2012 = vmax.f32 %v1943, 0.0
      %v2013 = vmax.f32 %v1946, 0.0
      %v2014 = vmax.f32 %v1949, 0.0
      %v2015 = vmax.f32 %v1952, 0.0
      %v2016 = vmax.f32 %v1955, 0.0
      %v2017 = vmax.f32 %v1958, 0.0
      %v2018 = vmax.f32 %v1961, 0.0
      %v2019 = vmax.f32 %v1964, 0.0
      %v2020 = vmax.f32 %v1967, 0.0
      %v2021 = vmax.f32 %v1970, 0.0
      %v2022 = vmax.f32 %v1973, 0.0
      %v2023 = vmax.f32 %v1976, 0.0
      %v2024 = vmax.f32 %v1979, 0.0
      %v2025 = vmax.f32 %v1982, 0.0
      %v2026 = vmax.f32 %v1985, 0.0
      %v2027 = vmax.f32 %v1988, 0.0
      %v2028 = vmax.f32 %v1991, 0.0
      %v2029 = vmax.f32 %v1994, 0.0
      %v2030 = vmax.f32 %v1997, 0.0
      %v2031 = vmax.f32 %v2000, 0.0
      %v2032 = vmax.f32 %v2003, 0.0
      %vm2033 = vcmask 130048
      %2034 = vst.msk [vmem:[#allocation2] sm:$0xff] %vm2033, %v2005
      %2035 = vst.msk [vmem:[#allocation2 + $0x8] sm:$0xff] %vm2033, %v2006
      %2036 = vst.msk [vmem:[#allocation2 + $0x10] sm:$0xff] %vm2033, %v2007
      %2037 = vst.msk [vmem:[#allocation2 + $0x18] sm:$0xff] %vm2033, %v2008
      %2038 = vst.msk [vmem:[#allocation2 + $0x20] sm:$0xff] %vm2033, %v2009
      %2039 = vst.msk [vmem:[#allocation2 + $0x28] sm:$0xff] %vm2033, %v2010
      %2040 = vst.msk [vmem:[#allocation2 + $0x30] sm:$0xff] %vm2033, %v2011
      %2041 = vst.msk [vmem:[#allocation2 + $0x38] sm:$0xff] %vm2033, %v2012
      %2042 = vst.msk [vmem:[#allocation2 + $0x40] sm:$0xff] %vm2033, %v2013
      %2043 = vst.msk [vmem:[#allocation2 + $0x48] sm:$0xff] %vm2033, %v2014
      %2044 = vst.msk [vmem:[#allocation2 + $0x50] sm:$0xff] %vm2033, %v2015
      %2045 = vst.msk [vmem:[#allocation2 + $0x58] sm:$0xff] %vm2033, %v2016
      %2046 = vst.msk [vmem:[#allocation2 + $0x60] sm:$0xff] %vm2033, %v2017
      %2047 = vst.msk [vmem:[#allocation2 + $0x68] sm:$0xff] %vm2033, %v2018
      %2048 = vst.msk [vmem:[#allocation2 + $0x70] sm:$0xff] %vm2033, %v2019
      %2049 = vst.msk [vmem:[#allocation2 + $0x78] sm:$0xff] %vm2033, %v2020
      %2050 = vst.msk [vmem:[#allocation2 + $0x80] sm:$0xff] %vm2033, %v2021
      %2051 = vst.msk [vmem:[#allocation2 + $0x88] sm:$0xff] %vm2033, %v2022
      %2052 = vst.msk [vmem:[#allocation2 + $0x90] sm:$0xff] %vm2033, %v2023
      %2053 = vst.msk [vmem:[#allocation2 + $0x98] sm:$0xff] %vm2033, %v2024
      %2054 = vst.msk [vmem:[#allocation2 + $0xa0] sm:$0xff] %vm2033, %v2025
      %2055 = vst.msk [vmem:[#allocation2 + $0xa8] sm:$0xff] %vm2033, %v2026
      %2056 = vst.msk [vmem:[#allocation2 + $0xb0] sm:$0xff] %vm2033, %v2027
      %2057 = vst.msk [vmem:[#allocation2 + $0xb8] sm:$0xff] %vm2033, %v2028
      %2058 = vst.msk [vmem:[#allocation2 + $0xc0] sm:$0xff] %vm2033, %v2029
      %2059 = vst.msk [vmem:[#allocation2 + $0xc8] sm:$0xff] %vm2033, %v2030
      %2060 = vst.msk [vmem:[#allocation2 + $0xd0] sm:$0xff] %vm2033, %v2031
      %vm2061 = vcmask 125952
      %2062 = vst.msk [vmem:[#allocation2 + $0xd8] sm:$0xf] %vm2061, %v2032
      %v2063 = vld [vmem:[#allocation2] ss:$2 sm:$0xff]
      %s2064 = scalar_lea.vmem [#allocation2], 16
      %v2065 = vld [vmem:[%s2064] ss:$2 sm:$0xff]
      %s2066 = scalar_lea.vmem [#allocation2], 32
      %v2067 = vld [vmem:[%s2066] ss:$2 sm:$0xff]
      %s2068 = scalar_lea.vmem [#allocation2], 48
      %v2069 = vld [vmem:[%s2068] ss:$2 sm:$0xff]
      %s2070 = scalar_lea.vmem [#allocation2], 64
      %v2071 = vld [vmem:[%s2070] ss:$2 sm:$0xff]
      %s2072 = scalar_lea.vmem [#allocation2], 80
      %v2073 = vld [vmem:[%s2072] ss:$2 sm:$0xff]
      %s2074 = scalar_lea.vmem [#allocation2], 96
      %v2075 = vld [vmem:[%s2074] ss:$2 sm:$0xff]
      %s2076 = scalar_lea.vmem [#allocation2], 112
      %v2077 = vld [vmem:[%s2076] ss:$2 sm:$0xff]
      %s2078 = scalar_lea.vmem [#allocation2], 128
      %v2079 = vld [vmem:[%s2078] ss:$2 sm:$0xff]
      %s2080 = scalar_lea.vmem [#allocation2], 144
      %v2081 = vld [vmem:[%s2080] ss:$2 sm:$0xff]
      %s2082 = scalar_lea.vmem [#allocation2], 160
      %v2083 = vld [vmem:[%s2082] ss:$2 sm:$0xff]
      %s2084 = scalar_lea.vmem [#allocation2], 176
      %v2085 = vld [vmem:[%s2084] ss:$2 sm:$0xff]
      %s2086 = scalar_lea.vmem [#allocation2], 192
      %v2087 = vld [vmem:[%s2086] ss:$2 sm:$0xff]
      %s2088 = scalar_lea.vmem [#allocation2], 208
      %v2089 = vld [vmem:[%s2088] ss:$2 sm:$0x3f]
      %s2090 = scalar_lea.vmem [#allocation2], 1
      %v2091 = vld [vmem:[%s2090] ss:$2 sm:$0xff]
      %s2092 = scalar_lea.vmem [#allocation2], 17
      %v2093 = vld [vmem:[%s2092] ss:$2 sm:$0xff]
      %s2094 = scalar_lea.vmem [#allocation2], 33
      %v2095 = vld [vmem:[%s2094] ss:$2 sm:$0xff]
      %s2096 = scalar_lea.vmem [#allocation2], 49
      %v2097 = vld [vmem:[%s2096] ss:$2 sm:$0xff]
      %s2098 = scalar_lea.vmem [#allocation2], 65
      %v2099 = vld [vmem:[%s2098] ss:$2 sm:$0xff]
      %s2100 = scalar_lea.vmem [#allocation2], 81
      %v2101 = vld [vmem:[%s2100] ss:$2 sm:$0xff]
      %s2102 = scalar_lea.vmem [#allocation2], 97
      %v2103 = vld [vmem:[%s2102] ss:$2 sm:$0xff]
      %s2104 = scalar_lea.vmem [#allocation2], 113
      %v2105 = vld [vmem:[%s2104] ss:$2 sm:$0xff]
      %s2106 = scalar_lea.vmem [#allocation2], 129
      %v2107 = vld [vmem:[%s2106] ss:$2 sm:$0xff]
      %s2108 = scalar_lea.vmem [#allocation2], 145
      %v2109 = vld [vmem:[%s2108] ss:$2 sm:$0xff]
      %s2110 = scalar_lea.vmem [#allocation2], 161
      %v2111 = vld [vmem:[%s2110] ss:$2 sm:$0xff]
      %s2112 = scalar_lea.vmem [#allocation2], 177
      %v2113 = vld [vmem:[%s2112] ss:$2 sm:$0xff]
      %s2114 = scalar_lea.vmem [#allocation2], 193
      %v2115 = vld [vmem:[%s2114] ss:$2 sm:$0xff]
      %s2116 = scalar_lea.vmem [#allocation2], 209
      %v2117 = vld [vmem:[%s2116] ss:$2 sm:$0x3f]
      %v2118 = vmax.f32 %v2063, %v2091
      %v2119 = vmax.f32 %v2065, %v2093
      %v2120 = vmax.f32 %v2067, %v2095
      %v2121 = vmax.f32 %v2069, %v2097
      %v2122 = vmax.f32 %v2071, %v2099
      %v2123 = vmax.f32 %v2073, %v2101
      %v2124 = vmax.f32 %v2075, %v2103
      %v2125 = vmax.f32 %v2077, %v2105
      %v2126 = vmax.f32 %v2079, %v2107
      %v2127 = vmax.f32 %v2081, %v2109
      %v2128 = vmax.f32 %v2083, %v2111
      %v2129 = vmax.f32 %v2085, %v2113
      %v2130 = vmax.f32 %v2087, %v2115
      %v2131 = vmax.f32 %v2089, %v2117
      %2132 = vst.msk [vmem:[#allocation3] sm:$0xff] %vm2033, %v2118
      %2133 = vst.msk [vmem:[#allocation3 + $0x8] sm:$0xff] %vm2033, %v2119
      %2134 = vst.msk [vmem:[#allocation3 + $0x10] sm:$0xff] %vm2033, %v2120
      %2135 = vst.msk [vmem:[#allocation3 + $0x18] sm:$0xff] %vm2033, %v2121
      %2136 = vst.msk [vmem:[#allocation3 + $0x20] sm:$0xff] %vm2033, %v2122
      %2137 = vst.msk [vmem:[#allocation3 + $0x28] sm:$0xff] %vm2033, %v2123
      %2138 = vst.msk [vmem:[#allocation3 + $0x30] sm:$0xff] %vm2033, %v2124
      %2139 = vst.msk [vmem:[#allocation3 + $0x38] sm:$0xff] %vm2033, %v2125
      %2140 = vst.msk [vmem:[#allocation3 + $0x40] sm:$0xff] %vm2033, %v2126
      %2141 = vst.msk [vmem:[#allocation3 + $0x48] sm:$0xff] %vm2033, %v2127
      %2142 = vst.msk [vmem:[#allocation3 + $0x50] sm:$0xff] %vm2033, %v2128
      %2143 = vst.msk [vmem:[#allocation3 + $0x58] sm:$0xff] %vm2033, %v2129
      %2144 = vst.msk [vmem:[#allocation3 + $0x60] sm:$0xff] %vm2033, %v2130
      %vm2145 = vcmask 128000
      %2146 = vst.msk [vmem:[#allocation3 + $0x68] sm:$0x3f] %vm2145, %v2131
      %v2147 = vld [vmem:[#allocation3] ss:$5 sm:$0xff]
      %s2148 = scalar_lea.vmem [#allocation3], 40
      %v2149 = vld [vmem:[%s2148] ss:$5 sm:$0x3f]
      %s2150 = scalar_lea.vmem [#allocation3], 1
      %v2151 = vld [vmem:[%s2150] ss:$5 sm:$0xff]
      %s2152 = scalar_lea.vmem [#allocation3], 41
      %v2153 = vld [vmem:[%s2152] ss:$5 sm:$0x3f]
      %s2154 = scalar_lea.vmem [#allocation3], 2
      %v2155 = vld [vmem:[%s2154] ss:$5 sm:$0xff]
      %s2156 = scalar_lea.vmem [#allocation3], 42
      %v2157 = vld [vmem:[%s2156] ss:$5 sm:$0x3f]
      %s2158 = scalar_lea.vmem [#allocation3], 3
      %v2159 = vld [vmem:[%s2158] ss:$5 sm:$0xff]
      %s2160 = scalar_lea.vmem [#allocation3], 43
      %v2161 = vld [vmem:[%s2160] ss:$5 sm:$0x3f]
      %s2162 = scalar_lea.vmem [#allocation3], 4
      %v2163 = vld [vmem:[%s2162] ss:$5 sm:$0xff]
      %s2164 = scalar_lea.vmem [#allocation3], 44
      %v2165 = vld [vmem:[%s2164] ss:$5 sm:$0x3f]
      %s2166 = scalar_lea.vmem [#allocation3], 5
      %v2167 = vld [vmem:[%s2166] ss:$5 sm:$0xff]
      %s2168 = scalar_lea.vmem [#allocation3], 45
      %v2169 = vld [vmem:[%s2168] ss:$5 sm:$0x3f]
      %s2170 = scalar_lea.vmem [#allocation3], 6
      %v2171 = vld [vmem:[%s2170] ss:$5 sm:$0xff]
      %s2172 = scalar_lea.vmem [#allocation3], 46
      %v2173 = vld [vmem:[%s2172] ss:$5 sm:$0x3f]
      %s2174 = scalar_lea.vmem [#allocation3], 7
      %v2175 = vld [vmem:[%s2174] ss:$5 sm:$0xff]
      %s2176 = scalar_lea.vmem [#allocation3], 47
      %v2177 = vld [vmem:[%s2176] ss:$5 sm:$0x3f]
      %s2178 = scalar_lea.vmem [#allocation3], 8
      %v2179 = vld [vmem:[%s2178] ss:$5 sm:$0xff]
      %s2180 = scalar_lea.vmem [#allocation3], 48
      %v2181 = vld [vmem:[%s2180] ss:$5 sm:$0x3f]
      %s2182 = scalar_lea.vmem [#allocation3], 9
      %v2183 = vld [vmem:[%s2182] ss:$5 sm:$0xff]
      %s2184 = scalar_lea.vmem [#allocation3], 49
      %v2185 = vld [vmem:[%s2184] ss:$5 sm:$0x3f]
      %s2186 = scalar_lea.vmem [#allocation3], 10
      %v2187 = vld [vmem:[%s2186] ss:$5 sm:$0xff]
      %s2188 = scalar_lea.vmem [#allocation3], 50
      %v2189 = vld [vmem:[%s2188] ss:$5 sm:$0x3f]
      %s2190 = scalar_lea.vmem [#allocation3], 11
      %v2191 = vld [vmem:[%s2190] ss:$5 sm:$0xff]
      %s2192 = scalar_lea.vmem [#allocation3], 51
      %v2193 = vld [vmem:[%s2192] ss:$5 sm:$0x3f]
      %s2194 = scalar_lea.vmem [#allocation3], 12
      %v2195 = vld [vmem:[%s2194] ss:$5 sm:$0xff]
      %s2196 = scalar_lea.vmem [#allocation3], 52
      %v2197 = vld [vmem:[%s2196] ss:$5 sm:$0x3f]
      %s2198 = scalar_lea.vmem [#allocation3], 13
      %v2199 = vld [vmem:[%s2198] ss:$5 sm:$0xff]
      %s2200 = scalar_lea.vmem [#allocation3], 53
      %v2201 = vld [vmem:[%s2200] ss:$5 sm:$0x3f]
      %s2202 = scalar_lea.vmem [#allocation3], 14
      %v2203 = vld [vmem:[%s2202] ss:$5 sm:$0xff]
      %s2204 = scalar_lea.vmem [#allocation3], 54
      %v2205 = vld [vmem:[%s2204] ss:$5 sm:$0x3f]
      %s2206 = scalar_lea.vmem [#allocation3], 15
      %v2207 = vld [vmem:[%s2206] ss:$5 sm:$0xff]
      %s2208 = scalar_lea.vmem [#allocation3], 55
      %v2209 = vld [vmem:[%s2208] ss:$5 sm:$0x3f]
      %s2210 = scalar_lea.vmem [#allocation3], 16
      %v2211 = vld [vmem:[%s2210] ss:$5 sm:$0xff]
      %s2212 = scalar_lea.vmem [#allocation3], 56
      %v2213 = vld [vmem:[%s2212] ss:$5 sm:$0x3f]
      %s2214 = scalar_lea.vmem [#allocation3], 17
      %v2215 = vld [vmem:[%s2214] ss:$5 sm:$0xff]
      %s2216 = scalar_lea.vmem [#allocation3], 57
      %v2217 = vld [vmem:[%s2216] ss:$5 sm:$0x3f]
      %s2218 = scalar_lea.vmem [#allocation3], 18
      %v2219 = vld [vmem:[%s2218] ss:$5 sm:$0xff]
      %s2220 = scalar_lea.vmem [#allocation3], 58
      %v2221 = vld [vmem:[%s2220] ss:$5 sm:$0x3f]
      %s2222 = scalar_lea.vmem [#allocation3], 19
      %v2223 = vld [vmem:[%s2222] ss:$5 sm:$0xff]
      %s2224 = scalar_lea.vmem [#allocation3], 59
      %v2225 = vld [vmem:[%s2224] ss:$5 sm:$0x3f]
      %s2226 = scalar_lea.vmem [#allocation3], 20
      %v2227 = vld [vmem:[%s2226] ss:$5 sm:$0xff]
      %s2228 = scalar_lea.vmem [#allocation3], 60
      %v2229 = vld [vmem:[%s2228] ss:$5 sm:$0x3f]
      %s2230 = scalar_lea.vmem [#allocation3], 21
      %v2231 = vld [vmem:[%s2230] ss:$5 sm:$0xff]
      %s2232 = scalar_lea.vmem [#allocation3], 61
      %v2233 = vld [vmem:[%s2232] ss:$5 sm:$0x3f]
      %s2234 = scalar_lea.vmem [#allocation3], 22
      %v2235 = vld [vmem:[%s2234] ss:$5 sm:$0xff]
      %s2236 = scalar_lea.vmem [#allocation3], 62
      %v2237 = vld [vmem:[%s2236] ss:$5 sm:$0x3f]
      %s2238 = scalar_lea.vmem [#allocation3], 23
      %v2239 = vld [vmem:[%s2238] ss:$5 sm:$0xff]
      %s2240 = scalar_lea.vmem [#allocation3], 63
      %v2241 = vld [vmem:[%s2240] ss:$5 sm:$0x3f]
      %s2242 = scalar_lea.vmem [#allocation3], 24
      %v2243 = vld [vmem:[%s2242] ss:$5 sm:$0xff]
      %s2244 = scalar_lea.vmem [#allocation3], 64
      %v2245 = vld [vmem:[%s2244] ss:$5 sm:$0x3f]
      %s2246 = scalar_lea.vmem [#allocation3], 25
      %v2247 = vld [vmem:[%s2246] ss:$5 sm:$0xff]
      %s2248 = scalar_lea.vmem [#allocation3], 65
      %v2249 = vld [vmem:[%s2248] ss:$5 sm:$0x3f]
      %s2250 = scalar_lea.vmem [#allocation3], 26
      %v2251 = vld [vmem:[%s2250] ss:$5 sm:$0xff]
      %s2252 = scalar_lea.vmem [#allocation3], 66
      %v2253 = vld [vmem:[%s2252] ss:$5 sm:$0x3f]
      %s2254 = scalar_lea.vmem [#allocation3], 27
      %v2255 = vld [vmem:[%s2254] ss:$5 sm:$0xff]
      %s2256 = scalar_lea.vmem [#allocation3], 67
      %v2257 = vld [vmem:[%s2256] ss:$5 sm:$0x3f]
      %s2258 = scalar_lea.vmem [#allocation3], 28
      %v2259 = vld [vmem:[%s2258] ss:$5 sm:$0xff]
      %s2260 = scalar_lea.vmem [#allocation3], 68
      %v2261 = vld [vmem:[%s2260] ss:$5 sm:$0x3f]
      %s2262 = scalar_lea.vmem [#allocation3], 29
      %v2263 = vld [vmem:[%s2262] ss:$5 sm:$0xff]
      %s2264 = scalar_lea.vmem [#allocation3], 69
      %v2265 = vld [vmem:[%s2264] ss:$5 sm:$0x3f]
      %s2266 = scalar_lea.vmem [#allocation3], 30
      %v2267 = vld [vmem:[%s2266] ss:$5 sm:$0xff]
      %s2268 = scalar_lea.vmem [#allocation3], 70
      %v2269 = vld [vmem:[%s2268] ss:$5 sm:$0x3f]
      %s2270 = scalar_lea.vmem [#allocation3], 31
      %v2271 = vld [vmem:[%s2270] ss:$5 sm:$0xff]
      %s2272 = scalar_lea.vmem [#allocation3], 71
      %v2273 = vld [vmem:[%s2272] ss:$5 sm:$0x3f]
      %s2274 = scalar_lea.vmem [#allocation3], 32
      %v2275 = vld [vmem:[%s2274] ss:$5 sm:$0xff]
      %s2276 = scalar_lea.vmem [#allocation3], 72
      %v2277 = vld [vmem:[%s2276] ss:$5 sm:$0x3f]
      %s2278 = scalar_lea.vmem [#allocation3], 33
      %v2279 = vld [vmem:[%s2278] ss:$5 sm:$0xff]
      %s2280 = scalar_lea.vmem [#allocation3], 73
      %v2281 = vld [vmem:[%s2280] ss:$5 sm:$0x3f]
      %s2282 = scalar_lea.vmem [#allocation3], 34
      %v2283 = vld [vmem:[%s2282] ss:$5 sm:$0xff]
      %s2284 = scalar_lea.vmem [#allocation3], 74
      %v2285 = vld [vmem:[%s2284] ss:$5 sm:$0x3f]
      %s2286 = scalar_lea.vmem [#allocation3], 35
      %v2287 = vld [vmem:[%s2286] ss:$5 sm:$0xff]
      %s2288 = scalar_lea.vmem [#allocation3], 75
      %v2289 = vld [vmem:[%s2288] ss:$5 sm:$0x3f]
      %s2290 = scalar_lea.vmem [#allocation3], 36
      %v2291 = vld [vmem:[%s2290] ss:$5 sm:$0xff]
      %s2292 = scalar_lea.vmem [#allocation3], 76
      %v2293 = vld [vmem:[%s2292] ss:$5 sm:$0x3f]
      %s2294 = scalar_lea.vmem [#allocation3], 37
      %v2295 = vld [vmem:[%s2294] ss:$5 sm:$0xff]
      %s2296 = scalar_lea.vmem [#allocation3], 77
      %v2297 = vld [vmem:[%s2296] ss:$5 sm:$0x3f]
      %s2298 = scalar_lea.vmem [#allocation3], 38
      %v2299 = vld [vmem:[%s2298] ss:$5 sm:$0xff]
      %s2300 = scalar_lea.vmem [#allocation3], 78
      %v2301 = vld [vmem:[%s2300] ss:$5 sm:$0x3f]
      %s2302 = scalar_lea.vmem [#allocation3], 39
      %v2303 = vld [vmem:[%s2302] ss:$5 sm:$0xff]
      %s2304 = scalar_lea.vmem [#allocation3], 79
      %v2305 = vld [vmem:[%s2304] ss:$5 sm:$0x3f]
      %v2306 = vld [vmem:[%s2148] ss:$5 sm:$0xff]
      %s2307 = scalar_lea.vmem [#allocation3], 80
      %v2308 = vld [vmem:[%s2307] ss:$5 sm:$0x3f]
      %v2309 = vld [vmem:[%s2152] ss:$5 sm:$0xff]
      %s2310 = scalar_lea.vmem [#allocation3], 81
      %v2311 = vld [vmem:[%s2310] ss:$5 sm:$0x3f]
      %v2312 = vld [vmem:[%s2156] ss:$5 sm:$0xff]
      %s2313 = scalar_lea.vmem [#allocation3], 82
      %v2314 = vld [vmem:[%s2313] ss:$5 sm:$0x3f]
      %v2315 = vld [vmem:[%s2160] ss:$5 sm:$0xff]
      %s2316 = scalar_lea.vmem [#allocation3], 83
      %v2317 = vld [vmem:[%s2316] ss:$5 sm:$0x3f]
      %v2318 = vld [vmem:[%s2164] ss:$5 sm:$0xff]
      %s2319 = scalar_lea.vmem [#allocation3], 84
      %v2320 = vld [vmem:[%s2319] ss:$5 sm:$0x3f]
      %2323 = vrot.lane.b32.xlu0 %v2151, 16
      %v2324 = vpop.permute.xlu0 %2323
      %2325 = vrot.lane.b32.xlu0 %v2153, 16
      %v2326 = vpop.permute.xlu0 %2325
      %2331 = vrot.lane.b32.xlu0 %v2155, 32
      %v2332 = vpop.permute.xlu0 %2331
      %2333 = vrot.lane.b32.xlu0 %v2157, 32
      %v2334 = vpop.permute.xlu0 %2333
      %2339 = vrot.lane.b32.xlu0 %v2159, 48
      %v2340 = vpop.permute.xlu0 %2339
      %2341 = vrot.lane.b32.xlu0 %v2161, 48
      %v2342 = vpop.permute.xlu0 %2341
      %2347 = vrot.lane.b32.xlu0 %v2163, 64
      %v2348 = vpop.permute.xlu0 %2347
      %2349 = vrot.lane.b32.xlu0 %v2165, 64
      %v2350 = vpop.permute.xlu0 %2349
      %2355 = vrot.lane.b32.xlu0 %v2167, 80
      %v2356 = vpop.permute.xlu0 %2355
      %2357 = vrot.lane.b32.xlu0 %v2169, 80
      %v2358 = vpop.permute.xlu0 %2357
      %2363 = vrot.lane.b32.xlu0 %v2171, 96
      %v2364 = vpop.permute.xlu0 %2363
      %2365 = vrot.lane.b32.xlu0 %v2173, 96
      %v2366 = vpop.permute.xlu0 %2365
      %2371 = vrot.lane.b32.xlu0 %v2175, 112
      %v2372 = vpop.permute.xlu0 %2371
      %2373 = vrot.lane.b32.xlu0 %v2177, 112
      %v2374 = vpop.permute.xlu0 %2373
      %2379 = vrot.lane.b32.xlu0 %v2183, 16
      %v2380 = vpop.permute.xlu0 %2379
      %2381 = vrot.lane.b32.xlu0 %v2185, 16
      %v2382 = vpop.permute.xlu0 %2381
      %2387 = vrot.lane.b32.xlu0 %v2187, 32
      %v2388 = vpop.permute.xlu0 %2387
      %2389 = vrot.lane.b32.xlu0 %v2189, 32
      %v2390 = vpop.permute.xlu0 %2389
      %2395 = vrot.lane.b32.xlu0 %v2191, 48
      %v2396 = vpop.permute.xlu0 %2395
      %2397 = vrot.lane.b32.xlu0 %v2193, 48
      %v2398 = vpop.permute.xlu0 %2397
      %2403 = vrot.lane.b32.xlu0 %v2195, 64
      %v2404 = vpop.permute.xlu0 %2403
      %2405 = vrot.lane.b32.xlu0 %v2197, 64
      %v2406 = vpop.permute.xlu0 %2405
      %2411 = vrot.lane.b32.xlu0 %v2199, 80
      %v2412 = vpop.permute.xlu0 %2411
      %2413 = vrot.lane.b32.xlu0 %v2201, 80
      %v2414 = vpop.permute.xlu0 %2413
      %2419 = vrot.lane.b32.xlu0 %v2203, 96
      %v2420 = vpop.permute.xlu0 %2419
      %2421 = vrot.lane.b32.xlu0 %v2205, 96
      %v2422 = vpop.permute.xlu0 %2421
      %2427 = vrot.lane.b32.xlu0 %v2207, 112
      %v2428 = vpop.permute.xlu0 %2427
      %2429 = vrot.lane.b32.xlu0 %v2209, 112
      %v2430 = vpop.permute.xlu0 %2429
      %v2433 = vsel %vm2033, %v2147, %v2324
      %v2434 = vsel %vm2033, %v2149, %v2326
      %vm2435 = vcmask 261120
      %v2436 = vsel %vm2435, %v2433, %v2332
      %v2437 = vsel %vm2435, %v2434, %v2334
      %vm2438 = vcmask 392192
      %v2439 = vsel %vm2438, %v2436, %v2340
      %v2440 = vsel %vm2438, %v2437, %v2342
      %vm2441 = vcmask 523264
      %v2442 = vsel %vm2441, %v2439, %v2348
      %v2443 = vsel %vm2441, %v2440, %v2350
      %vm2444 = vcmask 654336
      %v2445 = vsel %vm2444, %v2442, %v2356
      %v2446 = vsel %vm2444, %v2443, %v2358
      %vm2447 = vcmask 785408
      %v2448 = vsel %vm2447, %v2445, %v2364
      %v2449 = vsel %vm2447, %v2446, %v2366
      %vm2450 = vcmask 916480
      %v2451 = vsel %vm2450, %v2448, %v2372
      %v2452 = vsel %vm2450, %v2449, %v2374
      %v2453 = vsel %vm2033, %v2179, %v2380
      %v2454 = vsel %vm2033, %v2181, %v2382
      %v2455 = vsel %vm2435, %v2453, %v2388
      %v2456 = vsel %vm2435, %v2454, %v2390
      %v2457 = vsel %vm2438, %v2455, %v2396
      %v2458 = vsel %vm2438, %v2456, %v2398
      %v2459 = vsel %vm2441, %v2457, %v2404
      %v2460 = vsel %vm2441, %v2458, %v2406
      %v2461 = vsel %vm2444, %v2459, %v2412
      %v2462 = vsel %vm2444, %v2460, %v2414
      %v2463 = vsel %vm2447, %v2461, %v2420
      %v2464 = vsel %vm2447, %v2462, %v2422
      %v2465 = vsel %vm2450, %v2463, %v2428
      %v2466 = vsel %vm2450, %v2464, %v2430
      %2469 = vrot.lane.b32.xlu0 %v2215, 16
      %v2470 = vpop.permute.xlu0 %2469
      %2471 = vrot.lane.b32.xlu0 %v2217, 16
      %v2472 = vpop.permute.xlu0 %2471
      %2477 = vrot.lane.b32.xlu0 %v2219, 32
      %v2478 = vpop.permute.xlu0 %2477
      %2479 = vrot.lane.b32.xlu0 %v2221, 32
      %v2480 = vpop.permute.xlu0 %2479
      %2485 = vrot.lane.b32.xlu0 %v2223, 48
      %v2486 = vpop.permute.xlu0 %2485
      %2487 = vrot.lane.b32.xlu0 %v2225, 48
      %v2488 = vpop.permute.xlu0 %2487
      %2493 = vrot.lane.b32.xlu0 %v2227, 64
      %v2494 = vpop.permute.xlu0 %2493
      %2495 = vrot.lane.b32.xlu0 %v2229, 64
      %v2496 = vpop.permute.xlu0 %2495
      %2501 = vrot.lane.b32.xlu0 %v2231, 80
      %v2502 = vpop.permute.xlu0 %2501
      %2503 = vrot.lane.b32.xlu0 %v2233, 80
      %v2504 = vpop.permute.xlu0 %2503
      %2509 = vrot.lane.b32.xlu0 %v2235, 96
      %v2510 = vpop.permute.xlu0 %2509
      %2511 = vrot.lane.b32.xlu0 %v2237, 96
      %v2512 = vpop.permute.xlu0 %2511
      %2517 = vrot.lane.b32.xlu0 %v2239, 112
      %v2518 = vpop.permute.xlu0 %2517
      %2519 = vrot.lane.b32.xlu0 %v2241, 112
      %v2520 = vpop.permute.xlu0 %2519
      %2525 = vrot.lane.b32.xlu0 %v2247, 16
      %v2526 = vpop.permute.xlu0 %2525
      %2527 = vrot.lane.b32.xlu0 %v2249, 16
      %v2528 = vpop.permute.xlu0 %2527
      %2533 = vrot.lane.b32.xlu0 %v2251, 32
      %v2534 = vpop.permute.xlu0 %2533
      %2535 = vrot.lane.b32.xlu0 %v2253, 32
      %v2536 = vpop.permute.xlu0 %2535
      %2541 = vrot.lane.b32.xlu0 %v2255, 48
      %v2542 = vpop.permute.xlu0 %2541
      %2543 = vrot.lane.b32.xlu0 %v2257, 48
      %v2544 = vpop.permute.xlu0 %2543
      %2549 = vrot.lane.b32.xlu0 %v2259, 64
      %v2550 = vpop.permute.xlu0 %2549
      %2551 = vrot.lane.b32.xlu0 %v2261, 64
      %v2552 = vpop.permute.xlu0 %2551
      %2557 = vrot.lane.b32.xlu0 %v2263, 80
      %v2558 = vpop.permute.xlu0 %2557
      %2559 = vrot.lane.b32.xlu0 %v2265, 80
      %v2560 = vpop.permute.xlu0 %2559
      %2565 = vrot.lane.b32.xlu0 %v2267, 96
      %v2566 = vpop.permute.xlu0 %2565
      %2567 = vrot.lane.b32.xlu0 %v2269, 96
      %v2568 = vpop.permute.xlu0 %2567
      %2573 = vrot.lane.b32.xlu0 %v2271, 112
      %v2574 = vpop.permute.xlu0 %2573
      %2575 = vrot.lane.b32.xlu0 %v2273, 112
      %v2576 = vpop.permute.xlu0 %2575
      %v2579 = vsel %vm2033, %v2211, %v2470
      %v2580 = vsel %vm2033, %v2213, %v2472
      %v2581 = vsel %vm2435, %v2579, %v2478
      %v2582 = vsel %vm2435, %v2580, %v2480
      %v2583 = vsel %vm2438, %v2581, %v2486
      %v2584 = vsel %vm2438, %v2582, %v2488
      %v2585 = vsel %vm2441, %v2583, %v2494
      %v2586 = vsel %vm2441, %v2584, %v2496
      %v2587 = vsel %vm2444, %v2585, %v2502
      %v2588 = vsel %vm2444, %v2586, %v2504
      %v2589 = vsel %vm2447, %v2587, %v2510
      %v2590 = vsel %vm2447, %v2588, %v2512
      %v2591 = vsel %vm2450, %v2589, %v2518
      %v2592 = vsel %vm2450, %v2590, %v2520
      %v2593 = vsel %vm2033, %v2243, %v2526
      %v2594 = vsel %vm2033, %v2245, %v2528
      %v2595 = vsel %vm2435, %v2593, %v2534
      %v2596 = vsel %vm2435, %v2594, %v2536
      %v2597 = vsel %vm2438, %v2595, %v2542
      %v2598 = vsel %vm2438, %v2596, %v2544
      %v2599 = vsel %vm2441, %v2597, %v2550
      %v2600 = vsel %vm2441, %v2598, %v2552
      %v2601 = vsel %vm2444, %v2599, %v2558
      %v2602 = vsel %vm2444, %v2600, %v2560
      %v2603 = vsel %vm2447, %v2601, %v2566
      %v2604 = vsel %vm2447, %v2602, %v2568
      %v2605 = vsel %vm2450, %v2603, %v2574
      %v2606 = vsel %vm2450, %v2604, %v2576
      %2609 = vrot.lane.b32.xlu0 %v2279, 16
      %v2610 = vpop.permute.xlu0 %2609
      %2611 = vrot.lane.b32.xlu0 %v2281, 16
      %v2612 = vpop.permute.xlu0 %2611
      %2617 = vrot.lane.b32.xlu0 %v2283, 32
      %v2618 = vpop.permute.xlu0 %2617
      %2619 = vrot.lane.b32.xlu0 %v2285, 32
      %v2620 = vpop.permute.xlu0 %2619
      %2625 = vrot.lane.b32.xlu0 %v2287, 48
      %v2626 = vpop.permute.xlu0 %2625
      %2627 = vrot.lane.b32.xlu0 %v2289, 48
      %v2628 = vpop.permute.xlu0 %2627
      %2633 = vrot.lane.b32.xlu0 %v2291, 64
      %v2634 = vpop.permute.xlu0 %2633
      %2635 = vrot.lane.b32.xlu0 %v2293, 64
      %v2636 = vpop.permute.xlu0 %2635
      %2641 = vrot.lane.b32.xlu0 %v2295, 80
      %v2642 = vpop.permute.xlu0 %2641
      %2643 = vrot.lane.b32.xlu0 %v2297, 80
      %v2644 = vpop.permute.xlu0 %2643
      %2649 = vrot.lane.b32.xlu0 %v2299, 96
      %v2650 = vpop.permute.xlu0 %2649
      %2651 = vrot.lane.b32.xlu0 %v2301, 96
      %v2652 = vpop.permute.xlu0 %2651
      %2657 = vrot.lane.b32.xlu0 %v2303, 112
      %v2658 = vpop.permute.xlu0 %2657
      %2659 = vrot.lane.b32.xlu0 %v2305, 112
      %v2660 = vpop.permute.xlu0 %2659
      %2665 = vrot.lane.b32.xlu0 %v2309, 16
      %v2666 = vpop.permute.xlu0 %2665
      %2667 = vrot.lane.b32.xlu0 %v2311, 16
      %v2668 = vpop.permute.xlu0 %2667
      %2673 = vrot.lane.b32.xlu0 %v2312, 32
      %v2674 = vpop.permute.xlu0 %2673
      %2675 = vrot.lane.b32.xlu0 %v2314, 32
      %v2676 = vpop.permute.xlu0 %2675
      %2681 = vrot.lane.b32.xlu0 %v2315, 48
      %v2682 = vpop.permute.xlu0 %2681
      %2683 = vrot.lane.b32.xlu0 %v2317, 48
      %v2684 = vpop.permute.xlu0 %2683
      %2689 = vrot.lane.b32.xlu0 %v2318, 64
      %v2690 = vpop.permute.xlu0 %2689
      %2691 = vrot.lane.b32.xlu0 %v2320, 64
      %v2692 = vpop.permute.xlu0 %2691
      %v2695 = vsel %vm2033, %v2275, %v2610
      %v2696 = vsel %vm2033, %v2277, %v2612
      %v2697 = vsel %vm2435, %v2695, %v2618
      %v2698 = vsel %vm2435, %v2696, %v2620
      %v2699 = vsel %vm2438, %v2697, %v2626
      %v2700 = vsel %vm2438, %v2698, %v2628
      %v2701 = vsel %vm2441, %v2699, %v2634
      %v2702 = vsel %vm2441, %v2700, %v2636
      %v2703 = vsel %vm2444, %v2701, %v2642
      %v2704 = vsel %vm2444, %v2702, %v2644
      %v2705 = vsel %vm2447, %v2703, %v2650
      %v2706 = vsel %vm2447, %v2704, %v2652
      %v2707 = vsel %vm2450, %v2705, %v2658
      %v2708 = vsel %vm2450, %v2706, %v2660
      %v2709 = vsel %vm2033, %v2306, %v2666
      %v2710 = vsel %vm2033, %v2308, %v2668
      %v2711 = vsel %vm2435, %v2709, %v2674
      %v2712 = vsel %vm2435, %v2710, %v2676
      %v2713 = vsel %vm2438, %v2711, %v2682
      %v2714 = vsel %vm2438, %v2712, %v2684
      %v2715 = vsel %vm2441, %v2713, %v2690
      %v2716 = vsel %vm2441, %v2714, %v2692
      %v2717 = vld [vmem:[%s3] sm:$0xff]
      %v2718 = vld [vmem:[%s3 + $0x8] sm:$0xff]
      %v2719 = vld [vmem:[%s3 + $0x10] sm:$0xff]
      %v2720 = vld [vmem:[%s3 + $0x18] sm:$0xff]
      %v2721 = vld [vmem:[%s3 + $0x20] sm:$0xff]
      %v2722 = vld [vmem:[%s3 + $0x28] sm:$0xff]
      %v2723 = vld [vmem:[%s3 + $0x30] sm:$0xff]
      %v2724 = vld [vmem:[%s3 + $0x38] sm:$0xff]
      %v2725 = vld [vmem:[%s3 + $0x40] sm:$0xff]
      %v2726 = vld [vmem:[%s3 + $0x48] sm:$0xff]
      %v2727 = vld [vmem:[%s3 + $0x50] sm:$0xff]
      %v2728 = vld [vmem:[%s3 + $0x58] sm:$0xff]
      %v2729 = vld [vmem:[%s3 + $0x60] sm:$0xff]
      %v2730 = vld [vmem:[%s3 + $0x68] sm:$0xff]
      %v2731 = vld [vmem:[%s3 + $0x70] sm:$0xff]
      %v2732 = vld [vmem:[%s3 + $0x78] sm:$0xff]
      %v2733 = vld [vmem:[%s3 + $0x80] sm:$0xff]
      %v2734 = vld [vmem:[%s3 + $0x88] sm:$0xff]
      %v2735 = vld [vmem:[%s3 + $0x90] sm:$0xff]
      %v2736 = vld [vmem:[%s3 + $0x98] sm:$0xff]
      %v2737 = vld [vmem:[%s3 + $0xa0] sm:$0xff]
      %v2738 = vld [vmem:[%s3 + $0xa8] sm:$0xff]
      %v2739 = vld [vmem:[%s3 + $0xb0] sm:$0xff]
      %v2740 = vld [vmem:[%s3 + $0xb8] sm:$0xff]
      %v2741 = vld [vmem:[%s3 + $0xc0] sm:$0xff]
      %v2742 = vld [vmem:[%s3 + $0xc8] sm:$0xff]
      %v2743 = vld [vmem:[%s3 + $0xd0] sm:$0xff]
      %v2744 = vld [vmem:[%s3 + $0xd8] sm:$0xff]
      %v2745 = vld [vmem:[%s3 + $0xe0] sm:$0xff]
      %v2746 = vld [vmem:[%s3 + $0xe8] sm:$0xff]
      %v2747 = vld [vmem:[%s3 + $0xf0] sm:$0xff]
      %v2748 = vld [vmem:[%s3 + $0xf8] sm:$0xff]
      %v2749 = vld [vmem:[%s3 + $0x100] sm:$0xff]
      %v2750 = vld [vmem:[%s3 + $0x108] sm:$0xff]
      %v2751 = vld [vmem:[%s3 + $0x110] sm:$0xff]
      %v2752 = vld [vmem:[%s3 + $0x118] sm:$0xff]
      %v2753 = vld [vmem:[%s3 + $0x120] sm:$0xff]
      %v2754 = vld [vmem:[%s3 + $0x128] sm:$0xff]
      %v2755 = vld [vmem:[%s3 + $0x130] sm:$0xff]
      %v2756 = vld [vmem:[%s3 + $0x138] sm:$0xff]
      %v2757 = vld [vmem:[%s3 + $0x140] sm:$0xff]
      %v2758 = vld [vmem:[%s3 + $0x148] sm:$0xff]
      %v2759 = vld [vmem:[%s3 + $0x150] sm:$0xff]
      %v2760 = vld [vmem:[%s3 + $0x158] sm:$0xff]
      %v2761 = vld [vmem:[%s3 + $0x160] sm:$0xff]
      %v2762 = vld [vmem:[%s3 + $0x168] sm:$0xff]
      %v2763 = vld [vmem:[%s3 + $0x170] sm:$0xff]
      %v2764 = vld [vmem:[%s3 + $0x178] sm:$0xff]
      %v2765 = vld [vmem:[%s3 + $0x180] sm:$0xff]
      %v2766 = vld [vmem:[%s3 + $0x188] sm:$0xff]
      %v2767 = vld [vmem:[%s3 + $0x190] sm:$0xff]
      %v2768 = vld [vmem:[%s3 + $0x198] sm:$0xff]
      %v2769 = vld [vmem:[%s3 + $0x1a0] sm:$0xff]
      %v2770 = vld [vmem:[%s3 + $0x1a8] sm:$0xff]
      %v2771 = vld [vmem:[%s3 + $0x1b0] sm:$0xff]
      %v2772 = vld [vmem:[%s3 + $0x1b8] sm:$0xff]
      %v2773 = vld [vmem:[%s3 + $0x1c0] sm:$0xff]
      %v2774 = vld [vmem:[%s3 + $0x1c8] sm:$0xff]
      %v2775 = vld [vmem:[%s3 + $0x1d0] sm:$0xff]
      %v2776 = vld [vmem:[%s3 + $0x1d8] sm:$0xff]
      %v2777 = vld [vmem:[%s3 + $0x1e0] sm:$0xff]
      %v2778 = vld [vmem:[%s3 + $0x1e8] sm:$0xff]
      %v2779 = vld [vmem:[%s3 + $0x1f0] sm:$0xff]
      %v2780 = vld [vmem:[%s3 + $0x1f8] sm:$0xff]
      %v2781 = vld [vmem:[%s3 + $0x200] sm:$0xff]
      %v2782 = vld [vmem:[%s3 + $0x208] sm:$0xff]
      %v2783 = vld [vmem:[%s3 + $0x210] sm:$0xff]
      %v2784 = vld [vmem:[%s3 + $0x218] sm:$0xff]
      %v2785 = vld [vmem:[%s3 + $0x220] sm:$0xff]
      %v2786 = vld [vmem:[%s3 + $0x228] sm:$0xff]
      %v2787 = vld [vmem:[%s3 + $0x230] sm:$0xff]
      %v2788 = vld [vmem:[%s3 + $0x238] sm:$0xff]
      %v2789 = vld [vmem:[%s3 + $0x240] sm:$0xff]
      %v2790 = vld [vmem:[%s3 + $0x248] sm:$0xff]
      %v2791 = vld [vmem:[%s3 + $0x250] sm:$0xff]
      %v2792 = vld [vmem:[%s3 + $0x258] sm:$0xff]
      %v2793 = vld [vmem:[%s3 + $0x260] sm:$0xff]
      %v2794 = vld [vmem:[%s3 + $0x268] sm:$0xff]
      %v2795 = vld [vmem:[%s3 + $0x270] sm:$0xff]
      %v2796 = vld [vmem:[%s3 + $0x278] sm:$0xff]
      %v2797 = vld [vmem:[%s3 + $0x280] sm:$0xff]
      %v2798 = vld [vmem:[%s3 + $0x288] sm:$0xff]
      %v2799 = vld [vmem:[%s3 + $0x290] sm:$0xff]
      %v2800 = vld [vmem:[%s3 + $0x298] sm:$0xff]
      %v2801 = vld [vmem:[%s3 + $0x2a0] sm:$0xff]
      %v2802 = vld [vmem:[%s3 + $0x2a8] sm:$0xff]
      %v2803 = vld [vmem:[%s3 + $0x2b0] sm:$0xff]
      %v2804 = vld [vmem:[%s3 + $0x2b8] sm:$0xff]
      %v2805 = vld [vmem:[%s3 + $0x2c0] sm:$0xff]
      %v2806 = vld [vmem:[%s3 + $0x2c8] sm:$0xff]
      %v2807 = vld [vmem:[%s4] sm:$0x1]
      %v2809 = vperm.slane %v2807, 0
      %v2812 = vsel %vm2444, %v2715, 0
      %v2815 = vsel %vm2444, %v2716, 0
      %2817 = vmatpush.msra.mxu0 %v2732
      %2818 = vmatpush.msra.mxu0 %v2731
      %2819 = vmatpush.msra.mxu0 %v2730
      %2820 = vmatpush.msra.mxu0 %v2729
      %2821 = vmatpush.msra.mxu0 %v2728
      %2822 = vmatpush.msra.mxu0 %v2727
      %2823 = vmatpush.msra.mxu0 %v2726
      %2824 = vmatpush.msra.mxu0 %v2725
      %2825 = vmatpush.msra.mxu0 %v2724
      %2826 = vmatpush.msra.mxu0 %v2723
      %2827 = vmatpush.msra.mxu0 %v2722
      %2828 = vmatpush.msra.mxu0 %v2721
      %2829 = vmatpush.msra.mxu0 %v2720
      %2830 = vmatpush.msra.mxu0 %v2719
      %2831 = vmatpush.msra.mxu0 %v2718
      %2832 = vmatpush.msra.mxu0 %v2717
      %2833 = vmatmul.f32.gmra.mxu0 %v2451
      %v2834 = vpop.f32.mrf.mxu0
      %v2835 = vadd.f32 %v2809, %v2834
      %2836 = vmatmul.f32.gmra.mxu0 %v2452
      %v2837 = vpop.f32.mrf.mxu0
      %v2838 = vadd.f32 %v2809, %v2837
      %2839 = vdwg.mxu0
      %2840 = vmatpush.msra.mxu0 %v2748
      %2841 = vmatpush.msra.mxu0 %v2747
      %2842 = vmatpush.msra.mxu0 %v2746
      %2843 = vmatpush.msra.mxu0 %v2745
      %2844 = vmatpush.msra.mxu0 %v2744
      %2845 = vmatpush.msra.mxu0 %v2743
      %2846 = vmatpush.msra.mxu0 %v2742
      %2847 = vmatpush.msra.mxu0 %v2741
      %2848 = vmatpush.msra.mxu0 %v2740
      %2849 = vmatpush.msra.mxu0 %v2739
      %2850 = vmatpush.msra.mxu0 %v2738
      %2851 = vmatpush.msra.mxu0 %v2737
      %2852 = vmatpush.msra.mxu0 %v2736
      %2853 = vmatpush.msra.mxu0 %v2735
      %2854 = vmatpush.msra.mxu0 %v2734
      %2855 = vmatpush.msra.mxu0 %v2733
      %2856 = vmatmul.f32.gmra.mxu0 %v2465
      %v2857 = vpop.f32.mrf.mxu0
      %v2858 = vadd.f32 %v2835, %v2857
      %2859 = vmatmul.f32.gmra.mxu0 %v2466
      %v2860 = vpop.f32.mrf.mxu0
      %v2861 = vadd.f32 %v2838, %v2860
      %2862 = vdwg.mxu0
      %2863 = vmatpush.msra.mxu0 %v2764
      %2864 = vmatpush.msra.mxu0 %v2763
      %2865 = vmatpush.msra.mxu0 %v2762
      %2866 = vmatpush.msra.mxu0 %v2761
      %2867 = vmatpush.msra.mxu0 %v2760
      %2868 = vmatpush.msra.mxu0 %v2759
      %2869 = vmatpush.msra.mxu0 %v2758
      %2870 = vmatpush.msra.mxu0 %v2757
      %2871 = vmatpush.msra.mxu0 %v2756
      %2872 = vmatpush.msra.mxu0 %v2755
      %2873 = vmatpush.msra.mxu0 %v2754
      %2874 = vmatpush.msra.mxu0 %v2753
      %2875 = vmatpush.msra.mxu0 %v2752
      %2876 = vmatpush.msra.mxu0 %v2751
      %2877 = vmatpush.msra.mxu0 %v2750
      %2878 = vmatpush.msra.mxu0 %v2749
      %2879 = vmatmul.f32.gmra.mxu0 %v2591
      %v2880 = vpop.f32.mrf.mxu0
      %v2881 = vadd.f32 %v2858, %v2880
      %2882 = vmatmul.f32.gmra.mxu0 %v2592
      %v2883 = vpop.f32.mrf.mxu0
      %v2884 = vadd.f32 %v2861, %v2883
      %2885 = vdwg.mxu0
      %2886 = vmatpush.msra.mxu0 %v2780
      %2887 = vmatpush.msra.mxu0 %v2779
      %2888 = vmatpush.msra.mxu0 %v2778
      %2889 = vmatpush.msra.mxu0 %v2777
      %2890 = vmatpush.msra.mxu0 %v2776
      %2891 = vmatpush.msra.mxu0 %v2775
      %2892 = vmatpush.msra.mxu0 %v2774
      %2893 = vmatpush.msra.mxu0 %v2773
      %2894 = vmatpush.msra.mxu0 %v2772
      %2895 = vmatpush.msra.mxu0 %v2771
      %2896 = vmatpush.msra.mxu0 %v2770
      %2897 = vmatpush.msra.mxu0 %v2769
      %2898 = vmatpush.msra.mxu0 %v2768
      %2899 = vmatpush.msra.mxu0 %v2767
      %2900 = vmatpush.msra.mxu0 %v2766
      %2901 = vmatpush.msra.mxu0 %v2765
      %2902 = vmatmul.f32.gmra.mxu0 %v2605
      %v2903 = vpop.f32.mrf.mxu0
      %v2904 = vadd.f32 %v2881, %v2903
      %2905 = vmatmul.f32.gmra.mxu0 %v2606
      %v2906 = vpop.f32.mrf.mxu0
      %v2907 = vadd.f32 %v2884, %v2906
      %2908 = vdwg.mxu0
      %2909 = vmatpush.msra.mxu0 %v2796
      %2910 = vmatpush.msra.mxu0 %v2795
      %2911 = vmatpush.msra.mxu0 %v2794
      %2912 = vmatpush.msra.mxu0 %v2793
      %2913 = vmatpush.msra.mxu0 %v2792
      %2914 = vmatpush.msra.mxu0 %v2791
      %2915 = vmatpush.msra.mxu0 %v2790
      %2916 = vmatpush.msra.mxu0 %v2789
      %2917 = vmatpush.msra.mxu0 %v2788
      %2918 = vmatpush.msra.mxu0 %v2787
      %2919 = vmatpush.msra.mxu0 %v2786
      %2920 = vmatpush.msra.mxu0 %v2785
      %2921 = vmatpush.msra.mxu0 %v2784
      %2922 = vmatpush.msra.mxu0 %v2783
      %2923 = vmatpush.msra.mxu0 %v2782
      %2924 = vmatpush.msra.mxu0 %v2781
      %2925 = vmatmul.f32.gmra.mxu0 %v2707
      %v2926 = vpop.f32.mrf.mxu0
      %v2927 = vadd.f32 %v2904, %v2926
      %2928 = vmatmul.f32.gmra.mxu0 %v2708
      %v2929 = vpop.f32.mrf.mxu0
      %v2930 = vadd.f32 %v2907, %v2929
      %2931 = vdwg.mxu0
      %2932 = vmatpush.msra.mxu0 0.0
      %2933 = vmatpush.msra.mxu0 0.0
      %2934 = vmatpush.msra.mxu0 0.0
      %2935 = vmatpush.msra.mxu0 0.0
      %2936 = vmatpush.msra.mxu0 0.0
      %2937 = vmatpush.msra.mxu0 0.0
      %2938 = vmatpush.msra.mxu0 %v2806
      %2939 = vmatpush.msra.mxu0 %v2805
      %2940 = vmatpush.msra.mxu0 %v2804
      %2941 = vmatpush.msra.mxu0 %v2803
      %2942 = vmatpush.msra.mxu0 %v2802
      %2943 = vmatpush.msra.mxu0 %v2801
      %2944 = vmatpush.msra.mxu0 %v2800
      %2945 = vmatpush.msra.mxu0 %v2799
      %2946 = vmatpush.msra.mxu0 %v2798
      %2947 = vmatpush.msra.mxu0 %v2797
      %2948 = vmatmul.f32.gmra.mxu0 %v2812
      %v2949 = vpop.f32.mrf.mxu0
      %v2950 = vadd.f32 %v2927, %v2949
      %2951 = vmatmul.f32.gmra.mxu0 %v2815
      %v2952 = vpop.f32.mrf.mxu0
      %v2953 = vadd.f32 %v2930, %v2952
      %2954 = vdwg.mxu0
      %v2955 = vmax.f32 %v2950, 0.0
      %v2956 = vmax.f32 %v2953, 0.0
      %2957 = vst.msk [vmem:[#allocation4] sm:$0xff] %vm2441, %v2955
      %vm2958 = vcmask 521216
      %2959 = vst.msk [vmem:[#allocation4 + $0x8] sm:$0x3f] %vm2958, %v2956
      %v2960 = vld [vmem:[#allocation4] ss:$2 sm:$0x7f]
      %s2961 = scalar_lea.vmem [#allocation4], 1
      %v2962 = vld [vmem:[%s2961] ss:$2 sm:$0x7f]
      %v2963 = vmax.f32 %v2960, %v2962
      %vm2964 = vcmask 522240
      %2965 = vst.msk [vmem:[#allocation5] sm:$0x7f] %vm2964, %v2963
      %v2966 = vld [vmem:[#allocation5] sm:$0x1f]
      %v2967 = vld [vmem:[#allocation5 + $0x1] sm:$0x1f]
      %v2968 = vld [vmem:[#allocation5 + $0x2] sm:$0x1f]
      %2970 = vrot.lane.b32.xlu0 %v2967, 64
      %v2971 = vpop.permute.xlu0 %2970
      %v2973 = vsel %vm2441, %v2966, %v2971
      %v2974 = vld [vmem:[%s5] sm:$0xff]
      %v2975 = vld [vmem:[%s5 + $0x8] sm:$0xff]
      %v2976 = vld [vmem:[%s5 + $0x10] sm:$0xff]
      %v2977 = vld [vmem:[%s5 + $0x18] sm:$0xff]
      %v2978 = vld [vmem:[%s5 + $0x20] sm:$0xff]
      %v2979 = vld [vmem:[%s5 + $0x28] sm:$0xff]
      %v2980 = vld [vmem:[%s5 + $0x30] sm:$0xff]
      %v2981 = vld [vmem:[%s5 + $0x38] sm:$0xff]
      %v2982 = vld [vmem:[%s5 + $0x40] sm:$0xff]
      %v2983 = vld [vmem:[%s5 + $0x48] sm:$0xff]
      %v2984 = vld [vmem:[%s5 + $0x50] sm:$0xff]
      %v2985 = vld [vmem:[%s5 + $0x58] sm:$0xff]
      %v2986 = vld [vmem:[%s5 + $0x60] sm:$0xff]
      %v2987 = vld [vmem:[%s5 + $0x68] sm:$0xff]
      %v2988 = vld [vmem:[%s5 + $0x70] sm:$0xff]
      %v2989 = vld [vmem:[%s5 + $0x78] sm:$0xff]
      %v2990 = vld [vmem:[%s5 + $0x80] sm:$0xff]
      %v2991 = vld [vmem:[%s5 + $0x88] sm:$0xff]
      %v2992 = vld [vmem:[%s5 + $0x90] sm:$0xff]
      %v2993 = vld [vmem:[%s5 + $0x98] sm:$0xff]
      %v2994 = vld [vmem:[%s5 + $0xa0] sm:$0xff]
      %v2995 = vld [vmem:[%s5 + $0xa8] sm:$0xff]
      %v2996 = vld [vmem:[%s5 + $0xb0] sm:$0xff]
      %v2997 = vld [vmem:[%s5 + $0xb8] sm:$0xff]
      %v2998 = vld [vmem:[%s6] sm:$0x1]
      %v3000 = vperm.slane %v2998, 0
      %v3003 = vsel %vm2441, %v2968, 0
      %3005 = vmatpush.msra.mxu0 %v2989
      %3006 = vmatpush.msra.mxu0 %v2988
      %3007 = vmatpush.msra.mxu0 %v2987
      %3008 = vmatpush.msra.mxu0 %v2986
      %3009 = vmatpush.msra.mxu0 %v2985
      %3010 = vmatpush.msra.mxu0 %v2984
      %3011 = vmatpush.msra.mxu0 %v2983
      %3012 = vmatpush.msra.mxu0 %v2982
      %3013 = vmatpush.msra.mxu0 %v2981
      %3014 = vmatpush.msra.mxu0 %v2980
      %3015 = vmatpush.msra.mxu0 %v2979
      %3016 = vmatpush.msra.mxu0 %v2978
      %3017 = vmatpush.msra.mxu0 %v2977
      %3018 = vmatpush.msra.mxu0 %v2976
      %3019 = vmatpush.msra.mxu0 %v2975
      %3020 = vmatpush.msra.mxu0 %v2974
      %3021 = vmatmul.f32.gmra.mxu0 %v2973
      %v3022 = vpop.f32.mrf.mxu0
      %v3023 = vadd.f32 %v3000, %v3022
      %3024 = vdwg.mxu0
      %3025 = vmatpush.msra.mxu0 0.0
      %3026 = vmatpush.msra.mxu0 0.0
      %3027 = vmatpush.msra.mxu0 0.0
      %3028 = vmatpush.msra.mxu0 0.0
      %3029 = vmatpush.msra.mxu0 0.0
      %3030 = vmatpush.msra.mxu0 0.0
      %3031 = vmatpush.msra.mxu0 0.0
      %3032 = vmatpush.msra.mxu0 0.0
      %3033 = vmatpush.msra.mxu0 %v2997
      %3034 = vmatpush.msra.mxu0 %v2996
      %3035 = vmatpush.msra.mxu0 %v2995
      %3036 = vmatpush.msra.mxu0 %v2994
      %3037 = vmatpush.msra.mxu0 %v2993
      %3038 = vmatpush.msra.mxu0 %v2992
      %3039 = vmatpush.msra.mxu0 %v2991
      %3040 = vmatpush.msra.mxu0 %v2990
      %3041 = vmatmul.f32.gmra.mxu0 %v3003
      %v3042 = vpop.f32.mrf.mxu0
      %v3043 = vadd.f32 %v3023, %v3042
      %3044 = vdwg.mxu0
      %v3045 = vmax.f32 %v3043, 0.0
      %3046 = vst [vmem:[#allocation6] sm:$0x1f] %v3045
      %v3047 = vld [vmem:[#allocation6] sm:$0x7]
      %v3048 = vld [vmem:[#allocation6 + $0x1] sm:$0x7]
      %v3049 = vld [vmem:[#allocation6 + $0x2] sm:$0x7]
      %v3050 = vld [vmem:[%s7] sm:$0xff]
      %v3051 = vld [vmem:[%s7 + $0x8] sm:$0xff]
      %v3052 = vld [vmem:[%s7 + $0x10] sm:$0xff]
      %v3053 = vld [vmem:[%s7 + $0x18] sm:$0xff]
      %v3054 = vld [vmem:[%s7 + $0x20] sm:$0xff]
      %v3055 = vld [vmem:[%s7 + $0x28] sm:$0xff]
      %v3056 = vld [vmem:[%s7 + $0x30] sm:$0xff]
      %v3057 = vld [vmem:[%s7 + $0x38] sm:$0xff]
      %v3058 = vld [vmem:[%s7 + $0x40] sm:$0xff]
      %v3059 = vld [vmem:[%s7 + $0x48] sm:$0xff]
      %v3060 = vld [vmem:[%s7 + $0x50] sm:$0xff]
      %v3061 = vld [vmem:[%s7 + $0x58] sm:$0xff]
      %v3062 = vld [vmem:[%s7 + $0x60] sm:$0xff]
      %v3063 = vld [vmem:[%s7 + $0x68] sm:$0xff]
      %v3064 = vld [vmem:[%s7 + $0x70] sm:$0xff]
      %v3065 = vld [vmem:[%s7 + $0x78] sm:$0xff]
      %v3066 = vld [vmem:[%s7 + $0x80] sm:$0xff]
      %v3067 = vld [vmem:[%s7 + $0x88] sm:$0xff]
      %v3068 = vld [vmem:[%s7 + $0x90] sm:$0xff]
      %v3069 = vld [vmem:[%s7 + $0x98] sm:$0xff]
      %v3070 = vld [vmem:[%s7 + $0xa0] sm:$0xff]
      %v3071 = vld [vmem:[%s7 + $0xa8] sm:$0xff]
      %v3072 = vld [vmem:[%s7 + $0xb0] sm:$0xff]
      %v3073 = vld [vmem:[%s7 + $0xb8] sm:$0xff]
      %v3074 = vld [vmem:[%s7 + $0xc0] sm:$0xff]
      %v3075 = vld [vmem:[%s7 + $0xc8] sm:$0xff]
      %v3076 = vld [vmem:[%s7 + $0xd0] sm:$0xff]
      %v3077 = vld [vmem:[%s7 + $0xd8] sm:$0xff]
      %v3078 = vld [vmem:[%s7 + $0xe0] sm:$0xff]
      %v3079 = vld [vmem:[%s7 + $0xe8] sm:$0xff]
      %v3080 = vld [vmem:[%s7 + $0xf0] sm:$0xff]
      %v3081 = vld [vmem:[%s7 + $0xf8] sm:$0xff]
      %v3082 = vld [vmem:[%s7 + $0x100] sm:$0xff]
      %v3083 = vld [vmem:[%s7 + $0x108] sm:$0xff]
      %v3084 = vld [vmem:[%s7 + $0x110] sm:$0xff]
      %v3085 = vld [vmem:[%s7 + $0x118] sm:$0xff]
      %v3086 = vld [vmem:[%s7 + $0x120] sm:$0xff]
      %v3087 = vld [vmem:[%s7 + $0x128] sm:$0xff]
      %v3088 = vld [vmem:[%s7 + $0x130] sm:$0xff]
      %v3089 = vld [vmem:[%s7 + $0x138] sm:$0xff]
      %v3090 = vld [vmem:[%s7 + $0x140] sm:$0xff]
      %v3091 = vld [vmem:[%s7 + $0x148] sm:$0xff]
      %v3092 = vld [vmem:[%s7 + $0x150] sm:$0xff]
      %v3093 = vld [vmem:[%s7 + $0x158] sm:$0xff]
      %v3094 = vld [vmem:[%s7 + $0x160] sm:$0xff]
      %v3095 = vld [vmem:[%s7 + $0x168] sm:$0xff]
      %v3096 = vld [vmem:[%s7 + $0x170] sm:$0xff]
      %v3097 = vld [vmem:[%s7 + $0x178] sm:$0xff]
      %v3098 = vld [vmem:[%s7 + $0x180] sm:$0xff]
      %v3099 = vld [vmem:[%s7 + $0x188] sm:$0xff]
      %v3100 = vld [vmem:[%s7 + $0x190] sm:$0xff]
      %v3101 = vld [vmem:[%s7 + $0x198] sm:$0xff]
      %v3102 = vld [vmem:[%s7 + $0x1a0] sm:$0xff]
      %v3103 = vld [vmem:[%s7 + $0x1a8] sm:$0xff]
      %v3104 = vld [vmem:[%s7 + $0x1b0] sm:$0xff]
      %v3105 = vld [vmem:[%s7 + $0x1b8] sm:$0xff]
      %v3106 = vld [vmem:[%s7 + $0x1c0] sm:$0xff]
      %v3107 = vld [vmem:[%s7 + $0x1c8] sm:$0xff]
      %v3108 = vld [vmem:[%s7 + $0x1d0] sm:$0xff]
      %v3109 = vld [vmem:[%s7 + $0x1d8] sm:$0xff]
      %v3110 = vld [vmem:[%s7 + $0x1e0] sm:$0xff]
      %v3111 = vld [vmem:[%s7 + $0x1e8] sm:$0xff]
      %v3112 = vld [vmem:[%s7 + $0x1f0] sm:$0xff]
      %v3113 = vld [vmem:[%s7 + $0x1f8] sm:$0xff]
      %v3114 = vld [vmem:[%s7 + $0x200] sm:$0xff]
      %v3115 = vld [vmem:[%s7 + $0x208] sm:$0xff]
      %v3116 = vld [vmem:[%s7 + $0x210] sm:$0xff]
      %v3117 = vld [vmem:[%s7 + $0x218] sm:$0xff]
      %v3118 = vld [vmem:[%s7 + $0x220] sm:$0xff]
      %v3119 = vld [vmem:[%s7 + $0x228] sm:$0xff]
      %v3120 = vld [vmem:[%s7 + $0x230] sm:$0xff]
      %v3121 = vld [vmem:[%s7 + $0x238] sm:$0xff]
      %v3122 = vld [vmem:[%s7 + $0x240] sm:$0xff]
      %v3123 = vld [vmem:[%s7 + $0x248] sm:$0xff]
      %v3124 = vld [vmem:[%s7 + $0x250] sm:$0xff]
      %v3125 = vld [vmem:[%s7 + $0x258] sm:$0xff]
      %v3126 = vld [vmem:[%s7 + $0x260] sm:$0xff]
      %v3127 = vld [vmem:[%s7 + $0x268] sm:$0xff]
      %v3128 = vld [vmem:[%s7 + $0x270] sm:$0xff]
      %v3129 = vld [vmem:[%s7 + $0x278] sm:$0xff]
      %v3130 = vld [vmem:[%s7 + $0x280] sm:$0xff]
      %v3131 = vld [vmem:[%s7 + $0x288] sm:$0xff]
      %v3132 = vld [vmem:[%s7 + $0x290] sm:$0xff]
      %v3133 = vld [vmem:[%s7 + $0x298] sm:$0xff]
      %v3134 = vld [vmem:[%s7 + $0x2a0] sm:$0xff]
      %v3135 = vld [vmem:[%s7 + $0x2a8] sm:$0xff]
      %v3136 = vld [vmem:[%s7 + $0x2b0] sm:$0xff]
      %v3137 = vld [vmem:[%s7 + $0x2b8] sm:$0xff]
      %v3138 = vld [vmem:[%s7 + $0x2c0] sm:$0xff]
      %v3139 = vld [vmem:[%s7 + $0x2c8] sm:$0xff]
      %v3140 = vld [vmem:[%s7 + $0x2d0] sm:$0xff]
      %v3141 = vld [vmem:[%s7 + $0x2d8] sm:$0xff]
      %v3142 = vld [vmem:[%s7 + $0x2e0] sm:$0xff]
      %v3143 = vld [vmem:[%s7 + $0x2e8] sm:$0xff]
      %v3144 = vld [vmem:[%s7 + $0x2f0] sm:$0xff]
      %v3145 = vld [vmem:[%s7 + $0x2f8] sm:$0xff]
      %v3146 = vld [vmem:[%s8] sm:$0x3]
      %v3148 = vperm.slane %v3146, 0
      %v3149 = vperm.slane %v3146, 1
      %3152 = vmatpush.msra.mxu0 %v3080
      %3153 = vmatpush.msra.mxu0 %v3078
      %3154 = vmatpush.msra.mxu0 %v3076
      %3155 = vmatpush.msra.mxu0 %v3074
      %3156 = vmatpush.msra.mxu0 %v3072
      %3157 = vmatpush.msra.mxu0 %v3070
      %3158 = vmatpush.msra.mxu0 %v3068
      %3159 = vmatpush.msra.mxu0 %v3066
      %3160 = vmatpush.msra.mxu0 %v3064
      %3161 = vmatpush.msra.mxu0 %v3062
      %3162 = vmatpush.msra.mxu0 %v3060
      %3163 = vmatpush.msra.mxu0 %v3058
      %3164 = vmatpush.msra.mxu0 %v3056
      %3165 = vmatpush.msra.mxu0 %v3054
      %3166 = vmatpush.msra.mxu0 %v3052
      %3167 = vmatpush.msra.mxu0 %v3050
      %3168 = vmatmul.f32.gmra.mxu0 %v3047
      %v3169 = vpop.f32.mrf.mxu0
      %v3170 = vadd.f32 %v3148, %v3169
      %3171 = vdwg.mxu0
      %3172 = vmatpush.msra.mxu0 %v3112
      %3173 = vmatpush.msra.mxu0 %v3110
      %3174 = vmatpush.msra.mxu0 %v3108
      %3175 = vmatpush.msra.mxu0 %v3106
      %3176 = vmatpush.msra.mxu0 %v3104
      %3177 = vmatpush.msra.mxu0 %v3102
      %3178 = vmatpush.msra.mxu0 %v3100
      %3179 = vmatpush.msra.mxu0 %v3098
      %3180 = vmatpush.msra.mxu0 %v3096
      %3181 = vmatpush.msra.mxu0 %v3094
      %3182 = vmatpush.msra.mxu0 %v3092
      %3183 = vmatpush.msra.mxu0 %v3090
      %3184 = vmatpush.msra.mxu0 %v3088
      %3185 = vmatpush.msra.mxu0 %v3086
      %3186 = vmatpush.msra.mxu0 %v3084
      %3187 = vmatpush.msra.mxu0 %v3082
      %3188 = vmatmul.f32.gmra.mxu0 %v3048
      %v3189 = vpop.f32.mrf.mxu0
      %v3190 = vadd.f32 %v3170, %v3189
      %3191 = vdwg.mxu0
      %3192 = vmatpush.msra.mxu0 %v3144
      %3193 = vmatpush.msra.mxu0 %v3142
      %3194 = vmatpush.msra.mxu0 %v3140
      %3195 = vmatpush.msra.mxu0 %v3138
      %3196 = vmatpush.msra.mxu0 %v3136
      %3197 = vmatpush.msra.mxu0 %v3134
      %3198 = vmatpush.msra.mxu0 %v3132
      %3199 = vmatpush.msra.mxu0 %v3130
      %3200 = vmatpush.msra.mxu0 %v3128
      %3201 = vmatpush.msra.mxu0 %v3126
      %3202 = vmatpush.msra.mxu0 %v3124
      %3203 = vmatpush.msra.mxu0 %v3122
      %3204 = vmatpush.msra.mxu0 %v3120
      %3205 = vmatpush.msra.mxu0 %v3118
      %3206 = vmatpush.msra.mxu0 %v3116
      %3207 = vmatpush.msra.mxu0 %v3114
      %3208 = vmatmul.f32.gmra.mxu0 %v3049
      %v3209 = vpop.f32.mrf.mxu0
      %v3210 = vadd.f32 %v3190, %v3209
      %3211 = vdwg.mxu0
      %3212 = vmatpush.msra.mxu0 %v3081
      %3213 = vmatpush.msra.mxu0 %v3079
      %3214 = vmatpush.msra.mxu0 %v3077
      %3215 = vmatpush.msra.mxu0 %v3075
      %3216 = vmatpush.msra.mxu0 %v3073
      %3217 = vmatpush.msra.mxu0 %v3071
      %3218 = vmatpush.msra.mxu0 %v3069
      %3219 = vmatpush.msra.mxu0 %v3067
      %3220 = vmatpush.msra.mxu0 %v3065
      %3221 = vmatpush.msra.mxu0 %v3063
      %3222 = vmatpush.msra.mxu0 %v3061
      %3223 = vmatpush.msra.mxu0 %v3059
      %3224 = vmatpush.msra.mxu0 %v3057
      %3225 = vmatpush.msra.mxu0 %v3055
      %3226 = vmatpush.msra.mxu0 %v3053
      %3227 = vmatpush.msra.mxu0 %v3051
      %3228 = vmatmul.f32.gmra.mxu0 %v3047
      %v3229 = vpop.f32.mrf.mxu0
      %v3230 = vadd.f32 %v3149, %v3229
      %3231 = vdwg.mxu0
      %3232 = vmatpush.msra.mxu0 %v3113
      %3233 = vmatpush.msra.mxu0 %v3111
      %3234 = vmatpush.msra.mxu0 %v3109
      %3235 = vmatpush.msra.mxu0 %v3107
      %3236 = vmatpush.msra.mxu0 %v3105
      %3237 = vmatpush.msra.mxu0 %v3103
      %3238 = vmatpush.msra.mxu0 %v3101
      %3239 = vmatpush.msra.mxu0 %v3099
      %3240 = vmatpush.msra.mxu0 %v3097
      %3241 = vmatpush.msra.mxu0 %v3095
      %3242 = vmatpush.msra.mxu0 %v3093
      %3243 = vmatpush.msra.mxu0 %v3091
      %3244 = vmatpush.msra.mxu0 %v3089
      %3245 = vmatpush.msra.mxu0 %v3087
      %3246 = vmatpush.msra.mxu0 %v3085
      %3247 = vmatpush.msra.mxu0 %v3083
      %3248 = vmatmul.f32.gmra.mxu0 %v3048
      %v3249 = vpop.f32.mrf.mxu0
      %v3250 = vadd.f32 %v3230, %v3249
      %3251 = vdwg.mxu0
      %3252 = vmatpush.msra.mxu0 %v3145
      %3253 = vmatpush.msra.mxu0 %v3143
      %3254 = vmatpush.msra.mxu0 %v3141
      %3255 = vmatpush.msra.mxu0 %v3139
      %3256 = vmatpush.msra.mxu0 %v3137
      %3257 = vmatpush.msra.mxu0 %v3135
      %3258 = vmatpush.msra.mxu0 %v3133
      %3259 = vmatpush.msra.mxu0 %v3131
      %3260 = vmatpush.msra.mxu0 %v3129
      %3261 = vmatpush.msra.mxu0 %v3127
      %3262 = vmatpush.msra.mxu0 %v3125
      %3263 = vmatpush.msra.mxu0 %v3123
      %3264 = vmatpush.msra.mxu0 %v3121
      %3265 = vmatpush.msra.mxu0 %v3119
      %3266 = vmatpush.msra.mxu0 %v3117
      %3267 = vmatpush.msra.mxu0 %v3115
      %3268 = vmatmul.f32.gmra.mxu0 %v3049
      %v3269 = vpop.f32.mrf.mxu0
      %v3270 = vadd.f32 %v3250, %v3269
      %3271 = vdwg.mxu0
      %v3272 = vmax.f32 %v3210, 0.0
      %v3273 = vmax.f32 %v3270, 0.0
      %v3276 = vrot.slane %v3273, 4
      %vm3277 = vcmask 1043456
      %v3278 = vsel %vm3277, %v3272, %v3276
      %3280 = vst [vmem:[%s332] sm:$0x77] %v3278
      %p3281 = scmp.lt.s32.totalorder %s20, 1
      %s3282 = scalar_select %p3281, %s20, 1
      %s3283 = smul.addr %s3282, 2
      %s3284 = smul.addr %s3283, 4
      %s3285 = scalar_lea.vmem %s9, %s3284
      // Predicated region
      $region57: #{cnn_1d_forward.1} parent=55 // pred_check
        %p3286 = pneg %p232
      $region58: #{cnn_1d_forward.1} parent=55 // pred_check_branch
        %3288 = sbr.rel (%p3286) target = $region60
      $region59: #{cnn_1d_forward.1} parent=55 // pred_region
        _
      $region60: #{cnn_1d_forward.1} parent=55 // pred_fallthru
        _
    $region56: #{cnn_1d_forward.1} parent=5 // pred_fallthru
      _
    %p3289 = scmp.le.s32.totalorder 2, %s15
    // Predicated region
    $region61: #{cnn_1d_forward.1} parent=5 // pred_check
      %p3290 = pneg %p3289
    $region62: #{cnn_1d_forward.1} parent=5 // pred_check_branch
      %3292 = sbr.rel (%p3290) target = $region64
    $region63: #{cnn_1d_forward.1} parent=5 // pred_region
      %s3293 = ssub.s32 %s15, 2
      // Predicated region
      $region65: #{cnn_1d_forward.1} parent=63 // pred_check
        %p3294 = pneg %p238
      $region66: #{cnn_1d_forward.1} parent=63 // pred_check_branch
        %3296 = sbr.rel (%p3294) target = $region68
      $region67: #{cnn_1d_forward.1} parent=63 // pred_region
        %p3297 = scmp.lt.s32.totalorder %s21, 1
        %s3298 = scalar_select %p3297, %s21, 1
        %s3299 = smul.addr %s3298, 2
        %s3300 = smul.addr %s3299, 4
        %s3301 = scalar_lea.vmem %s9, %s3300
      $region68: #{cnn_1d_forward.1} parent=63 // pred_fallthru
        _
    $region64: #{cnn_1d_forward.1} parent=5 // pred_fallthru
      _
  $region6: #{cnn_1d_forward.1} parent=0 // loop_footer
    %s19 = sadd.s32 1, %s15
  $region7: #{cnn_1d_forward.1} parent=0 // loop_footer_branch
    %14 = sbr.rel target = $region3
  $region8: #{cnn_1d_forward.1} parent=0 // loop_exit
    _

</llo_original>
